<compile_context>
chip_gen: v6e
topology: v6e:2x2x1
jax: 0.10.0
libtpu: 0.0.40
codegen_flags: <defaults>
</compile_context>

<pallas_src>
import math

import jax
import jax.numpy as jnp
from jax.experimental import pallas as pl
from jax.experimental.pallas import tpu as pltpu

# Small, module-consistent sizes.
S = 8           # seq_len
B = 2           # batch
D_MODEL = 32    # d_model
NHEAD = 4       # nhead
HEAD_DIM = D_MODEL // NHEAD
D_HID = 64      # d_hid (FFN)
NLAYERS = 2     # nlayers
NTOKEN = 10     # ntoken
LN_EPS = 1e-5
LANE = 128      # lane width of the packed parameter slabs / padded output

# --------------------- bf16 weight slab (lane-dense) ------------------------
# Per encoder layer, 64 rows, all 128 lanes used:
#   rows [0,32):  lanes [0,96)   = W_qkv^T (D, 3D)  (attention scale folded into Q cols)
#                 lanes [96,128) = W_out^T (D, D)
#   rows [32,64): lanes [0,64)   = W1^T   (D, D_HID)
#                 lanes [64,96)  = W2^T[0:32]  (first half of (D_HID, D))
#                 lanes [96,128) = W2^T[32:64] (second half)
LAYER_W_ROWS = 2 * D_MODEL                       # 64
W_DEC_ROW = NLAYERS * LAYER_W_ROWS               # decoder W^T (D, NTOKEN), zero-padded lanes
W_ROWS = W_DEC_ROW + D_MODEL                     # 160 (multiple of 16 for bf16 tiling)

# --------------------- f32 parameter slab (biases / LN / PE) ----------------
LAYER_P_ROWS = 8
ROW_BQKV, ROW_BOUT, ROW_B1, ROW_B2 = 0, 1, 2, 3
ROW_LN1G, ROW_LN1B, ROW_LN2G, ROW_LN2B = 4, 5, 6, 7
PE_ROW = NLAYERS * LAYER_P_ROWS                  # S rows of positional encoding
ROW_DECB = PE_ROW + S                            # decoder bias row
P_ROWS = 32                                      # padded to multiple of 8

VMEM = pl.BlockSpec(memory_space=pltpu.MemorySpace.VMEM)


# ----------------------------- kernel helpers ------------------------------
def _softmax_last(x):
    m = jnp.max(x, axis=-1, keepdims=True)
    e = jnp.exp(x - m)
    denom = jnp.sum(e, axis=-1, keepdims=True)
    return e * pl.reciprocal(denom, approx=True)   # divide -> EUP slot


def _layer_norm(x, gamma, beta):
    # x: (N, D); gamma/beta: (1, D); biased variance like torch.nn.LayerNorm
    mu = jnp.mean(x, axis=-1, keepdims=True)
    var = jnp.mean((x - mu) ** 2, axis=-1, keepdims=True)
    return (x - mu) * jax.lax.rsqrt(var + LN_EPS) * gamma + beta


# ---------------------------- fused forward kernel --------------------------
def fused_transformer_kernel(src_ref, w_ref, p_ref, out_ref):
    # src: (B, S, D) f32; w: (W_ROWS, 128) bf16; p: (P_ROWS, 128) f32; out: (S, 128) f32
    pe = p_ref[PE_ROW:PE_ROW + S, 0:D_MODEL]                 # (S, D)
    x = src_ref[...] + pe                                    # broadcast over B; dropout=identity
    x2 = x.reshape(B * S, D_MODEL)                           # (16, 32), rows b-major

    for li in range(NLAYERS):                                # static unroll
        wbase = li * LAYER_W_ROWS
        pbase = li * LAYER_P_ROWS

        # ---- weights (bf16 slab -> f32 in-register) ----
        w_qkv = w_ref[wbase:wbase + D_MODEL, 0:3 * D_MODEL].astype(jnp.float32)
        w_out = w_ref[wbase:wbase + D_MODEL, 3 * D_MODEL:4 * D_MODEL].astype(jnp.float32)
        w1 = w_ref[wbase + D_MODEL:wbase + 2 * D_MODEL, 0:D_HID].astype(jnp.float32)
        w2 = jnp.concatenate(
            [w_ref[wbase + D_MODEL:wbase + 2 * D_MODEL, D_HID:D_HID + D_MODEL],
             w_ref[wbase + D_MODEL:wbase + 2 * D_MODEL, D_HID + D_MODEL:D_HID + 2 * D_MODEL]],
            axis=0).astype(jnp.float32)                       # (D_HID, D)

        # ---- biases / LN params (f32 slab) ----
        b_qkv = p_ref[pbase + ROW_BQKV:pbase + ROW_BQKV + 1, 0:3 * D_MODEL]
        b_out = p_ref[pbase + ROW_BOUT:pbase + ROW_BOUT + 1, 0:D_MODEL]
        b1 = p_ref[pbase + ROW_B1:pbase + ROW_B1 + 1, 0:D_HID]
        b2 = p_ref[pbase + ROW_B2:pbase + ROW_B2 + 1, 0:D_MODEL]
        ln1_g = p_ref[pbase + ROW_LN1G:pbase + ROW_LN1G + 1, 0:D_MODEL]
        ln1_b = p_ref[pbase + ROW_LN1B:pbase + ROW_LN1B + 1, 0:D_MODEL]
        ln2_g = p_ref[pbase + ROW_LN2G:pbase + ROW_LN2G + 1, 0:D_MODEL]
        ln2_b = p_ref[pbase + ROW_LN2B:pbase + ROW_LN2B + 1, 0:D_MODEL]

        # ---- self-attention: single fused QKV matmul (q-scale pre-folded) ----
        qkv = jnp.dot(x2, w_qkv, preferred_element_type=jnp.float32) + b_qkv   # (16, 96)

        # Per-head attention: static loop, single-batch-dim einsums; all reshapes
        # are leading-dim splits/merges (layout-free). Head outputs re-assembled
        # in registers with one lane-axis concat (no VMEM scratch round trip).
        head_ctx = []
        for h in range(NHEAD):
            qh = qkv[:, h * HEAD_DIM:(h + 1) * HEAD_DIM].reshape(B, S, HEAD_DIM)
            kh = qkv[:, D_MODEL + h * HEAD_DIM:
                     D_MODEL + (h + 1) * HEAD_DIM].reshape(B, S, HEAD_DIM)
            vh = qkv[:, 2 * D_MODEL + h * HEAD_DIM:
                     2 * D_MODEL + (h + 1) * HEAD_DIM].reshape(B, S, HEAD_DIM)
            sc = jnp.einsum('bqd,bkd->bqk', qh, kh,
                            preferred_element_type=jnp.float32)      # (B, S, S)
            pr = _softmax_last(sc)
            ch = jnp.einsum('bqk,bkd->bqd', pr, vh,
                            preferred_element_type=jnp.float32)      # (B, S, Hd)
            head_ctx.append(ch.reshape(B * S, HEAD_DIM))
        attn = jnp.concatenate(head_ctx, axis=-1)                    # (16, 32)

        attn = jnp.dot(attn, w_out, preferred_element_type=jnp.float32) + b_out

        # post-LN residual 1 (dropout = identity)
        x2 = _layer_norm(x2 + attn, ln1_g, ln1_b)

        # ---- FFN: linear2(relu(linear1(x))) ----
        h1 = jnp.maximum(jnp.dot(x2, w1, preferred_element_type=jnp.float32) + b1, 0.0)
        ff = jnp.dot(h1, w2, preferred_element_type=jnp.float32) + b2

        # post-LN residual 2
        x2 = _layer_norm(x2 + ff, ln2_g, ln2_b)

    # ---- head: mean over BATCH (PyTorch: output.mean(1) on [S,B,D]) + decoder ----
    pooled = x2[0:S, :]
    for b in range(1, B):
        pooled = pooled + x2[b * S:(b + 1) * S, :]
    pooled = pooled * (1.0 / B)                                      # (S, D)

    dec_w = w_ref[W_DEC_ROW:W_DEC_ROW + D_MODEL, :].astype(jnp.float32)  # (D, 128) zero-padded
    dec_b = p_ref[ROW_DECB:ROW_DECB + 1, :]                              # (1, 128)
    # torch.squeeze is a no-op at these shapes. Lane-dense (S, 128) store.
    out_ref[...] = jnp.dot(pooled, dec_w, preferred_element_type=jnp.float32) + dec_b


# ------------------------------ JAX-side glue -------------------------------
def make_positional_encoding(max_len, d_model):
    position = jnp.arange(max_len, dtype=jnp.float32)[:, None]
    div_term = jnp.exp(jnp.arange(0, d_model, 2, dtype=jnp.float32)
                       * (-math.log(10000.0) / d_model))
    pe = jnp.zeros((max_len, d_model), jnp.float32)
    pe = pe.at[:, 0::2].set(jnp.sin(position * div_term))
    pe = pe.at[:, 1::2].set(jnp.cos(position * div_term))
    return pe                                            # (max_len, d_model)


@jax.jit
def transformer_classifier(src, w_slab, p_slab):
    # src: (S, B, D) -- PyTorch seq-first layout; transpose is layout plumbing.
    x = jnp.transpose(src, (1, 0, 2))                    # (B, S, D)
    logits_padded = pl.pallas_call(
        fused_transformer_kernel,
        out_shape=jax.ShapeDtypeStruct((S, LANE), jnp.float32),
        in_specs=[VMEM, VMEM, VMEM],
        out_specs=VMEM,
    )(x, w_slab, p_slab)
    return logits_padded[:, :NTOKEN]                     # (S, NTOKEN)


# --------------------- deterministic params + packing -----------------------
def _uniform(key, shape, bound):
    return jax.random.uniform(key, shape, jnp.float32, -bound, bound)


def init_layer_params(key):
    ks = jax.random.split(key, 6)
    b_attn = 1.0 / math.sqrt(D_MODEL)
    b_ff1 = 1.0 / math.sqrt(D_MODEL)
    b_ff2 = 1.0 / math.sqrt(D_HID)
    return dict(
        in_w=_uniform(ks[0], (3 * D_MODEL, D_MODEL), b_attn),   # [Wq;Wk;Wv], torch (out,in)
        in_b=_uniform(ks[1], (1, 3 * D_MODEL), b_attn),
        out_w=_uniform(ks[2], (D_MODEL, D_MODEL), b_attn),
        out_b=jnp.zeros((1, D_MODEL), jnp.float32),
        ln1_g=jnp.ones((1, D_MODEL), jnp.float32),
        ln1_b=jnp.zeros((1, D_MODEL), jnp.float32),
        w1=_uniform(ks[3], (D_HID, D_MODEL), b_ff1),
        b1=_uniform(ks[4], (1, D_HID), b_ff1),
        w2=_uniform(ks[5], (D_MODEL, D_HID), b_ff2),
        b2=jnp.zeros((1, D_MODEL), jnp.float32),
        ln2_g=jnp.ones((1, D_MODEL), jnp.float32),
        ln2_b=jnp.zeros((1, D_MODEL), jnp.float32),
    )


def _q_scale_vec():
    scale = 1.0 / math.sqrt(HEAD_DIM)
    return jnp.concatenate([jnp.full((D_MODEL,), scale, jnp.float32),
                            jnp.ones((2 * D_MODEL,), jnp.float32)])


def pack_weight_slab(layer_params, dec_w):
    """Lane-dense bf16 slab of all matmul weights, pre-transposed to (D_in, D_out)."""
    qmul = _q_scale_vec()
    w = jnp.zeros((W_ROWS, LANE), jnp.float32)
    for li, p in enumerate(layer_params):
        base = li * LAYER_W_ROWS
        w_qkv_t = (p['in_w'] * qmul[:, None]).T                      # (D, 3D), q-chunk pre-scaled
        w = w.at[base:base + D_MODEL, 0:3 * D_MODEL].set(w_qkv_t)
        w = w.at[base:base + D_MODEL, 3 * D_MODEL:4 * D_MODEL].set(p['out_w'].T)
        w1_t = p['w1'].T                                             # (D, D_HID)
        w2_t = p['w2'].T                                             # (D_HID, D)
        w = w.at[base + D_MODEL:base + 2 * D_MODEL, 0:D_HID].set(w1_t)
        w = w.at[base + D_MODEL:base + 2 * D_MODEL,
                 D_HID:D_HID + D_MODEL].set(w2_t[0:D_MODEL])
        w = w.at[base + D_MODEL:base + 2 * D_MODEL,
                 D_HID + D_MODEL:D_HID + 2 * D_MODEL].set(w2_t[D_MODEL:D_HID])
    w = w.at[W_DEC_ROW:W_DEC_ROW + D_MODEL, 0:NTOKEN].set(dec_w.T)   # (D, NTOKEN), zero-padded
    assert w.shape == (W_ROWS, LANE)
    return w.astype(jnp.bfloat16)


def pack_param_slab(layer_params, dec_b, pe):
    """f32 slab: biases, LayerNorm params, positional encoding, decoder bias."""
    qmul = _q_scale_vec()
    s = jnp.zeros((P_ROWS, LANE), jnp.float32)
    for li, p in enumerate(layer_params):
        base = li * LAYER_P_ROWS
        s = s.at[base + ROW_BQKV, 0:3 * D_MODEL].set(p['in_b'].reshape(-1) * qmul)
        s = s.at[base + ROW_BOUT, 0:D_MODEL].set(p['out_b'].reshape(-1))
        s = s.at[base + ROW_B1, 0:D_HID].set(p['b1'].reshape(-1))
        s = s.at[base + ROW_B2, 0:D_MODEL].set(p['b2'].reshape(-1))
        s = s.at[base + ROW_LN1G, 0:D_MODEL].set(p['ln1_g'].reshape(-1))
        s = s.at[base + ROW_LN1B, 0:D_MODEL].set(p['ln1_b'].reshape(-1))
        s = s.at[base + ROW_LN2G, 0:D_MODEL].set(p['ln2_g'].reshape(-1))
        s = s.at[base + ROW_LN2B, 0:D_MODEL].set(p['ln2_b'].reshape(-1))
    s = s.at[PE_ROW:PE_ROW + S, 0:D_MODEL].set(pe)
    s = s.at[ROW_DECB, 0:NTOKEN].set(dec_b.reshape(-1))
    assert s.shape == (P_ROWS, LANE)
    return s


if __name__ == "__main__":
    key = jax.random.PRNGKey(0)
    keys = jax.random.split(key, 2 + NLAYERS)
    k_src, k_dec, k_layers = keys[0], keys[1], keys[2:]

    # Module docstring says [seq_len, batch] but PositionalEncoding requires a
    # trailing d_model dim, so the real input is [S, B, d_model].
    src = jax.random.normal(k_src, (S, B, D_MODEL), jnp.float32)

    layer_params = [init_layer_params(k) for k in k_layers]
    # decoder init per init_weights(): bias = 0, weight ~ U(-0.1, 0.1)
    dec_w = jax.random.uniform(k_dec, (NTOKEN, D_MODEL), jnp.float32, -0.1, 0.1)
    dec_b = jnp.zeros((1, NTOKEN), jnp.float32)

    pe = make_positional_encoding(S, D_MODEL)
    w_slab = pack_weight_slab(layer_params, dec_w)
    p_slab = pack_param_slab(layer_params, dec_b, pe)

    out = transformer_classifier(src, w_slab, p_slab)
    out = jax.block_until_ready(out)
    assert out.shape == (S, NTOKEN) and out.dtype == jnp.float32
    assert bool(jnp.all(jnp.isfinite(out)))
    print("KERNEL_OK")
</pallas_src>

<mosaic_0001>
module attributes {stable_mosaic.version = 11 : i64} {
  func.func @fused_transformer_kernel(%arg0: memref<2x8x32xf32, #tpu.memory_space<vmem>>, %arg1: memref<160x128xbf16, #tpu.memory_space<vmem>>, %arg2: memref<32x128xf32, #tpu.memory_space<vmem>>, %arg3: memref<8x128xf32, #tpu.memory_space<vmem>>) attributes {dimension_semantics = [], scalar_prefetch = 0 : i64, scratch_operands = 0 : i64, tpu.core_type = #tpu.core_type<tc>} {
    %c16 = arith.constant 16 : index
    %c0 = arith.constant 0 : index
    %0 = vector.load %arg2[%c16, %c0] : memref<32x128xf32, #tpu.memory_space<vmem>>, vector<8x32xf32>
    %c0_0 = arith.constant 0 : index
    %c0_1 = arith.constant 0 : index
    %c0_2 = arith.constant 0 : index
    %1 = vector.load %arg0[%c0_0, %c0_1, %c0_2] : memref<2x8x32xf32, #tpu.memory_space<vmem>>, vector<2x8x32xf32>
    %2 = vector.shape_cast %0 : vector<8x32xf32> to vector<1x8x32xf32>
    %3 = vector.broadcast %2 : vector<1x8x32xf32> to vector<2x8x32xf32>
    %4 = arith.addf %1, %3 : vector<2x8x32xf32>
    %5 = vector.shape_cast %4 : vector<2x8x32xf32> to vector<16x32xf32>
    %c0_3 = arith.constant 0 : index
    %c0_4 = arith.constant 0 : index
    %6 = vector.load %arg1[%c0_3, %c0_4] : memref<160x128xbf16, #tpu.memory_space<vmem>>, vector<32x96xbf16>
    %7 = arith.extf %6 : vector<32x96xbf16> to vector<32x96xf32>
    %c0_5 = arith.constant 0 : index
    %c96 = arith.constant 96 : index
    %8 = vector.load %arg1[%c0_5, %c96] : memref<160x128xbf16, #tpu.memory_space<vmem>>, vector<32x32xbf16>
    %9 = arith.extf %8 : vector<32x32xbf16> to vector<32x32xf32>
    %c32 = arith.constant 32 : index
    %c0_6 = arith.constant 0 : index
    %10 = vector.load %arg1[%c32, %c0_6] : memref<160x128xbf16, #tpu.memory_space<vmem>>, vector<32x64xbf16>
    %11 = arith.extf %10 : vector<32x64xbf16> to vector<32x64xf32>
    %c32_7 = arith.constant 32 : index
    %c64 = arith.constant 64 : index
    %12 = vector.load %arg1[%c32_7, %c64] : memref<160x128xbf16, #tpu.memory_space<vmem>>, vector<32x32xbf16>
    %c32_8 = arith.constant 32 : index
    %c96_9 = arith.constant 96 : index
    %13 = vector.load %arg1[%c32_8, %c96_9] : memref<160x128xbf16, #tpu.memory_space<vmem>>, vector<32x32xbf16>
    %14 = tpu.concatenate %12, %13 in 0 : vector<32x32xbf16>, vector<32x32xbf16> -> vector<64x32xbf16>
    %15 = arith.extf %14 : vector<64x32xbf16> to vector<64x32xf32>
    %c0_10 = arith.constant 0 : index
    %c0_11 = arith.constant 0 : index
    %16 = vector.load %arg2[%c0_10, %c0_11] : memref<32x128xf32, #tpu.memory_space<vmem>>, vector<1x96xf32>
    %c1 = arith.constant 1 : index
    %c0_12 = arith.constant 0 : index
    %17 = vector.load %arg2[%c1, %c0_12] : memref<32x128xf32, #tpu.memory_space<vmem>>, vector<1x32xf32>
    %c2 = arith.constant 2 : index
    %c0_13 = arith.constant 0 : index
    %18 = vector.load %arg2[%c2, %c0_13] : memref<32x128xf32, #tpu.memory_space<vmem>>, vector<1x64xf32>
    %c3 = arith.constant 3 : index
    %c0_14 = arith.constant 0 : index
    %19 = vector.load %arg2[%c3, %c0_14] : memref<32x128xf32, #tpu.memory_space<vmem>>, vector<1x32xf32>
    %c4 = arith.constant 4 : index
    %c0_15 = arith.constant 0 : index
    %20 = vector.load %arg2[%c4, %c0_15] : memref<32x128xf32, #tpu.memory_space<vmem>>, vector<1x32xf32>
    %c5 = arith.constant 5 : index
    %c0_16 = arith.constant 0 : index
    %21 = vector.load %arg2[%c5, %c0_16] : memref<32x128xf32, #tpu.memory_space<vmem>>, vector<1x32xf32>
    %c6 = arith.constant 6 : index
    %c0_17 = arith.constant 0 : index
    %22 = vector.load %arg2[%c6, %c0_17] : memref<32x128xf32, #tpu.memory_space<vmem>>, vector<1x32xf32>
    %c7 = arith.constant 7 : index
    %c0_18 = arith.constant 0 : index
    %23 = vector.load %arg2[%c7, %c0_18] : memref<32x128xf32, #tpu.memory_space<vmem>>, vector<1x32xf32>
    %cst = arith.constant dense<0.000000e+00> : vector<16x96xf32>
    %24 = tpu.matmul %5, %7, %cst {dimension_numbers = #tpu.dot_dimension_numbers<[1], [0], [0], [1], [0, 0, 1, 1], [], []>} : vector<16x32xf32>, vector<32x96xf32>, vector<16x96xf32> -> vector<16x96xf32>
    %25 = vector.broadcast %16 : vector<1x96xf32> to vector<16x96xf32>
    %26 = arith.addf %24, %25 : vector<16x96xf32>
    %27 = vector.extract_strided_slice %26 {offsets = [0, 0], sizes = [16, 8], strides = [1, 1]} : vector<16x96xf32> to vector<16x8xf32>
    %28 = vector.shape_cast %27 : vector<16x8xf32> to vector<2x8x8xf32>
    %29 = vector.extract_strided_slice %26 {offsets = [0, 32], sizes = [16, 8], strides = [1, 1]} : vector<16x96xf32> to vector<16x8xf32>
    %30 = vector.shape_cast %29 : vector<16x8xf32> to vector<2x8x8xf32>
    %31 = vector.extract_strided_slice %26 {offsets = [0, 64], sizes = [16, 8], strides = [1, 1]} : vector<16x96xf32> to vector<16x8xf32>
    %32 = vector.shape_cast %31 : vector<16x8xf32> to vector<2x8x8xf32>
    "tpu.trace_start"() <{level = 10 : i32, message = "bqd,bkd->bqk"}> : () -> ()
    %cst_19 = arith.constant dense<0.000000e+00> : vector<2x8x8xf32>
    %33 = tpu.matmul %28, %30, %cst_19 {dimension_numbers = #tpu.dot_dimension_numbers<[2], [2], [1], [1], [0, 0, 0, 1, 1, 1], [0], [0]>} : vector<2x8x8xf32>, vector<2x8x8xf32>, vector<2x8x8xf32> -> vector<2x8x8xf32>
    "tpu.trace_stop"() : () -> ()
    %cst_20 = arith.constant dense<0xFF800000> : vector<2x8xf32>
    %34 = vector.multi_reduction <maximumf>, %33, %cst_20 [2] : vector<2x8x8xf32> to vector<2x8xf32>
    %35 = vector.shape_cast %34 : vector<2x8xf32> to vector<2x8x1xf32>
    %36 = vector.broadcast %35 : vector<2x8x1xf32> to vector<2x8x8xf32>
    %37 = arith.subf %33, %36 : vector<2x8x8xf32>
    %38 = math.exp %37 : vector<2x8x8xf32>
    %cst_21 = arith.constant dense<0.000000e+00> : vector<2x8xf32>
    %39 = vector.multi_reduction <add>, %38, %cst_21 [2] : vector<2x8x8xf32> to vector<2x8xf32>
    %40 = vector.shape_cast %39 : vector<2x8xf32> to vector<2x8x1xf32>
    %41 = tpu.reciprocal %40 {approx = true} : vector<2x8x1xf32> -> vector<2x8x1xf32>
    %42 = vector.broadcast %41 : vector<2x8x1xf32> to vector<2x8x8xf32>
    %43 = arith.mulf %38, %42 : vector<2x8x8xf32>
    "tpu.trace_start"() <{level = 10 : i32, message = "bqk,bkd->bqd"}> : () -> ()
    %cst_22 = arith.constant dense<0.000000e+00> : vector<2x8x8xf32>
    %44 = tpu.matmul %43, %32, %cst_22 {dimension_numbers = #tpu.dot_dimension_numbers<[2], [1], [1], [2], [0, 0, 0, 1, 1, 2], [0], [0]>} : vector<2x8x8xf32>, vector<2x8x8xf32>, vector<2x8x8xf32> -> vector<2x8x8xf32>
    "tpu.trace_stop"() : () -> ()
    %45 = vector.shape_cast %44 : vector<2x8x8xf32> to vector<16x8xf32>
    %46 = vector.extract_strided_slice %26 {offsets = [0, 8], sizes = [16, 8], strides = [1, 1]} : vector<16x96xf32> to vector<16x8xf32>
    %47 = vector.shape_cast %46 : vector<16x8xf32> to vector<2x8x8xf32>
    %48 = vector.extract_strided_slice %26 {offsets = [0, 40], sizes = [16, 8], strides = [1, 1]} : vector<16x96xf32> to vector<16x8xf32>
    %49 = vector.shape_cast %48 : vector<16x8xf32> to vector<2x8x8xf32>
    %50 = vector.extract_strided_slice %26 {offsets = [0, 72], sizes = [16, 8], strides = [1, 1]} : vector<16x96xf32> to vector<16x8xf32>
    %51 = vector.shape_cast %50 : vector<16x8xf32> to vector<2x8x8xf32>
    "tpu.trace_start"() <{level = 10 : i32, message = "bqd,bkd->bqk"}> : () -> ()
    %cst_23 = arith.constant dense<0.000000e+00> : vector<2x8x8xf32>
    %52 = tpu.matmul %47, %49, %cst_23 {dimension_numbers = #tpu.dot_dimension_numbers<[2], [2], [1], [1], [0, 0, 0, 1, 1, 1], [0], [0]>} : vector<2x8x8xf32>, vector<2x8x8xf32>, vector<2x8x8xf32> -> vector<2x8x8xf32>
    "tpu.trace_stop"() : () -> ()
    %cst_24 = arith.constant dense<0xFF800000> : vector<2x8xf32>
    %53 = vector.multi_reduction <maximumf>, %52, %cst_24 [2] : vector<2x8x8xf32> to vector<2x8xf32>
    %54 = vector.shape_cast %53 : vector<2x8xf32> to vector<2x8x1xf32>
    %55 = vector.broadcast %54 : vector<2x8x1xf32> to vector<2x8x8xf32>
    %56 = arith.subf %52, %55 : vector<2x8x8xf32>
    %57 = math.exp %56 : vector<2x8x8xf32>
    %cst_25 = arith.constant dense<0.000000e+00> : vector<2x8xf32>
    %58 = vector.multi_reduction <add>, %57, %cst_25 [2] : vector<2x8x8xf32> to vector<2x8xf32>
    %59 = vector.shape_cast %58 : vector<2x8xf32> to vector<2x8x1xf32>
    %60 = tpu.reciprocal %59 {approx = true} : vector<2x8x1xf32> -> vector<2x8x1xf32>
    %61 = vector.broadcast %60 : vector<2x8x1xf32> to vector<2x8x8xf32>
    %62 = arith.mulf %57, %61 : vector<2x8x8xf32>
    "tpu.trace_start"() <{level = 10 : i32, message = "bqk,bkd->bqd"}> : () -> ()
    %cst_26 = arith.constant dense<0.000000e+00> : vector<2x8x8xf32>
    %63 = tpu.matmul %62, %51, %cst_26 {dimension_numbers = #tpu.dot_dimension_numbers<[2], [1], [1], [2], [0, 0, 0, 1, 1, 2], [0], [0]>} : vector<2x8x8xf32>, vector<2x8x8xf32>, vector<2x8x8xf32> -> vector<2x8x8xf32>
    "tpu.trace_stop"() : () -> ()
    %64 = vector.shape_cast %63 : vector<2x8x8xf32> to vector<16x8xf32>
    %65 = vector.extract_strided_slice %26 {offsets = [0, 16], sizes = [16, 8], strides = [1, 1]} : vector<16x96xf32> to vector<16x8xf32>
    %66 = vector.shape_cast %65 : vector<16x8xf32> to vector<2x8x8xf32>
    %67 = vector.extract_strided_slice %26 {offsets = [0, 48], sizes = [16, 8], strides = [1, 1]} : vector<16x96xf32> to vector<16x8xf32>
    %68 = vector.shape_cast %67 : vector<16x8xf32> to vector<2x8x8xf32>
    %69 = vector.extract_strided_slice %26 {offsets = [0, 80], sizes = [16, 8], strides = [1, 1]} : vector<16x96xf32> to vector<16x8xf32>
    %70 = vector.shape_cast %69 : vector<16x8xf32> to vector<2x8x8xf32>
    "tpu.trace_start"() <{level = 10 : i32, message = "bqd,bkd->bqk"}> : () -> ()
    %cst_27 = arith.constant dense<0.000000e+00> : vector<2x8x8xf32>
    %71 = tpu.matmul %66, %68, %cst_27 {dimension_numbers = #tpu.dot_dimension_numbers<[2], [2], [1], [1], [0, 0, 0, 1, 1, 1], [0], [0]>} : vector<2x8x8xf32>, vector<2x8x8xf32>, vector<2x8x8xf32> -> vector<2x8x8xf32>
    "tpu.trace_stop"() : () -> ()
    %cst_28 = arith.constant dense<0xFF800000> : vector<2x8xf32>
    %72 = vector.multi_reduction <maximumf>, %71, %cst_28 [2] : vector<2x8x8xf32> to vector<2x8xf32>
    %73 = vector.shape_cast %72 : vector<2x8xf32> to vector<2x8x1xf32>
    %74 = vector.broadcast %73 : vector<2x8x1xf32> to vector<2x8x8xf32>
    %75 = arith.subf %71, %74 : vector<2x8x8xf32>
    %76 = math.exp %75 : vector<2x8x8xf32>
    %cst_29 = arith.constant dense<0.000000e+00> : vector<2x8xf32>
    %77 = vector.multi_reduction <add>, %76, %cst_29 [2] : vector<2x8x8xf32> to vector<2x8xf32>
    %78 = vector.shape_cast %77 : vector<2x8xf32> to vector<2x8x1xf32>
    %79 = tpu.reciprocal %78 {approx = true} : vector<2x8x1xf32> -> vector<2x8x1xf32>
    %80 = vector.broadcast %79 : vector<2x8x1xf32> to vector<2x8x8xf32>
    %81 = arith.mulf %76, %80 : vector<2x8x8xf32>
    "tpu.trace_start"() <{level = 10 : i32, message = "bqk,bkd->bqd"}> : () -> ()
    %cst_30 = arith.constant dense<0.000000e+00> : vector<2x8x8xf32>
    %82 = tpu.matmul %81, %70, %cst_30 {dimension_numbers = #tpu.dot_dimension_numbers<[2], [1], [1], [2], [0, 0, 0, 1, 1, 2], [0], [0]>} : vector<2x8x8xf32>, vector<2x8x8xf32>, vector<2x8x8xf32> -> vector<2x8x8xf32>
    "tpu.trace_stop"() : () -> ()
    %83 = vector.shape_cast %82 : vector<2x8x8xf32> to vector<16x8xf32>
    %84 = vector.extract_strided_slice %26 {offsets = [0, 24], sizes = [16, 8], strides = [1, 1]} : vector<16x96xf32> to vector<16x8xf32>
    %85 = vector.shape_cast %84 : vector<16x8xf32> to vector<2x8x8xf32>
    %86 = vector.extract_strided_slice %26 {offsets = [0, 56], sizes = [16, 8], strides = [1, 1]} : vector<16x96xf32> to vector<16x8xf32>
    %87 = vector.shape_cast %86 : vector<16x8xf32> to vector<2x8x8xf32>
    %88 = vector.extract_strided_slice %26 {offsets = [0, 88], sizes = [16, 8], strides = [1, 1]} : vector<16x96xf32> to vector<16x8xf32>
    %89 = vector.shape_cast %88 : vector<16x8xf32> to vector<2x8x8xf32>
    "tpu.trace_start"() <{level = 10 : i32, message = "bqd,bkd->bqk"}> : () -> ()
    %cst_31 = arith.constant dense<0.000000e+00> : vector<2x8x8xf32>
    %90 = tpu.matmul %85, %87, %cst_31 {dimension_numbers = #tpu.dot_dimension_numbers<[2], [2], [1], [1], [0, 0, 0, 1, 1, 1], [0], [0]>} : vector<2x8x8xf32>, vector<2x8x8xf32>, vector<2x8x8xf32> -> vector<2x8x8xf32>
    "tpu.trace_stop"() : () -> ()
    %cst_32 = arith.constant dense<0xFF800000> : vector<2x8xf32>
    %91 = vector.multi_reduction <maximumf>, %90, %cst_32 [2] : vector<2x8x8xf32> to vector<2x8xf32>
    %92 = vector.shape_cast %91 : vector<2x8xf32> to vector<2x8x1xf32>
    %93 = vector.broadcast %92 : vector<2x8x1xf32> to vector<2x8x8xf32>
    %94 = arith.subf %90, %93 : vector<2x8x8xf32>
    %95 = math.exp %94 : vector<2x8x8xf32>
    %cst_33 = arith.constant dense<0.000000e+00> : vector<2x8xf32>
    %96 = vector.multi_reduction <add>, %95, %cst_33 [2] : vector<2x8x8xf32> to vector<2x8xf32>
    %97 = vector.shape_cast %96 : vector<2x8xf32> to vector<2x8x1xf32>
    %98 = tpu.reciprocal %97 {approx = true} : vector<2x8x1xf32> -> vector<2x8x1xf32>
    %99 = vector.broadcast %98 : vector<2x8x1xf32> to vector<2x8x8xf32>
    %100 = arith.mulf %95, %99 : vector<2x8x8xf32>
    "tpu.trace_start"() <{level = 10 : i32, message = "bqk,bkd->bqd"}> : () -> ()
    %cst_34 = arith.constant dense<0.000000e+00> : vector<2x8x8xf32>
    %101 = tpu.matmul %100, %89, %cst_34 {dimension_numbers = #tpu.dot_dimension_numbers<[2], [1], [1], [2], [0, 0, 0, 1, 1, 2], [0], [0]>} : vector<2x8x8xf32>, vector<2x8x8xf32>, vector<2x8x8xf32> -> vector<2x8x8xf32>
    "tpu.trace_stop"() : () -> ()
    %102 = vector.shape_cast %101 : vector<2x8x8xf32> to vector<16x8xf32>
    %103 = tpu.concatenate %45, %64, %83, %102 in 1 : vector<16x8xf32>, vector<16x8xf32>, vector<16x8xf32>, vector<16x8xf32> -> vector<16x32xf32>
    %cst_35 = arith.constant dense<0.000000e+00> : vector<16x32xf32>
    %104 = tpu.matmul %103, %9, %cst_35 {dimension_numbers = #tpu.dot_dimension_numbers<[1], [0], [0], [1], [0, 0, 1, 1], [], []>} : vector<16x32xf32>, vector<32x32xf32>, vector<16x32xf32> -> vector<16x32xf32>
    %105 = vector.broadcast %17 : vector<1x32xf32> to vector<16x32xf32>
    %106 = arith.addf %104, %105 : vector<16x32xf32>
    %107 = arith.addf %5, %106 : vector<16x32xf32>
    %cst_36 = arith.constant dense<0.000000e+00> : vector<16xf32>
    %108 = vector.multi_reduction <add>, %107, %cst_36 [1] : vector<16x32xf32> to vector<16xf32>
    %109 = vector.shape_cast %108 : vector<16xf32> to vector<16x1xf32>
    %cst_37 = arith.constant 3.200000e+01 : f32
    %110 = vector.broadcast %cst_37 : f32 to vector<16x1xf32>
    %111 = arith.divf %109, %110 : vector<16x1xf32>
    %112 = vector.broadcast %111 : vector<16x1xf32> to vector<16x32xf32>
    %113 = arith.subf %107, %112 : vector<16x32xf32>
    %114 = arith.mulf %113, %113 : vector<16x32xf32>
    %cst_38 = arith.constant dense<0.000000e+00> : vector<16xf32>
    %115 = vector.multi_reduction <add>, %114, %cst_38 [1] : vector<16x32xf32> to vector<16xf32>
    %116 = vector.shape_cast %115 : vector<16xf32> to vector<16x1xf32>
    %cst_39 = arith.constant 3.200000e+01 : f32
    %117 = vector.broadcast %cst_39 : f32 to vector<16x1xf32>
    %118 = arith.divf %116, %117 : vector<16x1xf32>
    %119 = vector.broadcast %111 : vector<16x1xf32> to vector<16x32xf32>
    %120 = arith.subf %107, %119 : vector<16x32xf32>
    %cst_40 = arith.constant 9.99999974E-6 : f32
    %121 = vector.broadcast %cst_40 : f32 to vector<16x1xf32>
    %122 = arith.addf %118, %121 : vector<16x1xf32>
    %123 = math.rsqrt %122 : vector<16x1xf32>
    %124 = vector.broadcast %123 : vector<16x1xf32> to vector<16x32xf32>
    %125 = arith.mulf %120, %124 : vector<16x32xf32>
    %126 = vector.broadcast %20 : vector<1x32xf32> to vector<16x32xf32>
    %127 = arith.mulf %125, %126 : vector<16x32xf32>
    %128 = vector.broadcast %21 : vector<1x32xf32> to vector<16x32xf32>
    %129 = arith.addf %127, %128 : vector<16x32xf32>
    %cst_41 = arith.constant dense<0.000000e+00> : vector<16x64xf32>
    %130 = tpu.matmul %129, %11, %cst_41 {dimension_numbers = #tpu.dot_dimension_numbers<[1], [0], [0], [1], [0, 0, 1, 1], [], []>} : vector<16x32xf32>, vector<32x64xf32>, vector<16x64xf32> -> vector<16x64xf32>
    %131 = vector.broadcast %18 : vector<1x64xf32> to vector<16x64xf32>
    %132 = arith.addf %130, %131 : vector<16x64xf32>
    %cst_42 = arith.constant 0.000000e+00 : f32
    %133 = vector.broadcast %cst_42 : f32 to vector<16x64xf32>
    %134 = arith.maximumf %132, %133 : vector<16x64xf32>
    %cst_43 = arith.constant dense<0.000000e+00> : vector<16x32xf32>
    %135 = tpu.matmul %134, %15, %cst_43 {dimension_numbers = #tpu.dot_dimension_numbers<[1], [0], [0], [1], [0, 0, 1, 1], [], []>} : vector<16x64xf32>, vector<64x32xf32>, vector<16x32xf32> -> vector<16x32xf32>
    %136 = vector.broadcast %19 : vector<1x32xf32> to vector<16x32xf32>
    %137 = arith.addf %135, %136 : vector<16x32xf32>
    %138 = arith.addf %129, %137 : vector<16x32xf32>
    %cst_44 = arith.constant dense<0.000000e+00> : vector<16xf32>
    %139 = vector.multi_reduction <add>, %138, %cst_44 [1] : vector<16x32xf32> to vector<16xf32>
    %140 = vector.shape_cast %139 : vector<16xf32> to vector<16x1xf32>
    %cst_45 = arith.constant 3.200000e+01 : f32
    %141 = vector.broadcast %cst_45 : f32 to vector<16x1xf32>
    %142 = arith.divf %140, %141 : vector<16x1xf32>
    %143 = vector.broadcast %142 : vector<16x1xf32> to vector<16x32xf32>
    %144 = arith.subf %138, %143 : vector<16x32xf32>
    %145 = arith.mulf %144, %144 : vector<16x32xf32>
    %cst_46 = arith.constant dense<0.000000e+00> : vector<16xf32>
    %146 = vector.multi_reduction <add>, %145, %cst_46 [1] : vector<16x32xf32> to vector<16xf32>
    %147 = vector.shape_cast %146 : vector<16xf32> to vector<16x1xf32>
    %cst_47 = arith.constant 3.200000e+01 : f32
    %148 = vector.broadcast %cst_47 : f32 to vector<16x1xf32>
    %149 = arith.divf %147, %148 : vector<16x1xf32>
    %150 = vector.broadcast %142 : vector<16x1xf32> to vector<16x32xf32>
    %151 = arith.subf %138, %150 : vector<16x32xf32>
    %cst_48 = arith.constant 9.99999974E-6 : f32
    %152 = vector.broadcast %cst_48 : f32 to vector<16x1xf32>
    %153 = arith.addf %149, %152 : vector<16x1xf32>
    %154 = math.rsqrt %153 : vector<16x1xf32>
    %155 = vector.broadcast %154 : vector<16x1xf32> to vector<16x32xf32>
    %156 = arith.mulf %151, %155 : vector<16x32xf32>
    %157 = vector.broadcast %22 : vector<1x32xf32> to vector<16x32xf32>
    %158 = arith.mulf %156, %157 : vector<16x32xf32>
    %159 = vector.broadcast %23 : vector<1x32xf32> to vector<16x32xf32>
    %160 = arith.addf %158, %159 : vector<16x32xf32>
    %c64_49 = arith.constant 64 : index
    %c0_50 = arith.constant 0 : index
    %161 = vector.load %arg1[%c64_49, %c0_50] : memref<160x128xbf16, #tpu.memory_space<vmem>>, vector<32x96xbf16>
    %162 = arith.extf %161 : vector<32x96xbf16> to vector<32x96xf32>
    %c64_51 = arith.constant 64 : index
    %c96_52 = arith.constant 96 : index
    %163 = vector.load %arg1[%c64_51, %c96_52] : memref<160x128xbf16, #tpu.memory_space<vmem>>, vector<32x32xbf16>
    %164 = arith.extf %163 : vector<32x32xbf16> to vector<32x32xf32>
    %c96_53 = arith.constant 96 : index
    %c0_54 = arith.constant 0 : index
    %165 = vector.load %arg1[%c96_53, %c0_54] : memref<160x128xbf16, #tpu.memory_space<vmem>>, vector<32x64xbf16>
    %166 = arith.extf %165 : vector<32x64xbf16> to vector<32x64xf32>
    %c96_55 = arith.constant 96 : index
    %c64_56 = arith.constant 64 : index
    %167 = vector.load %arg1[%c96_55, %c64_56] : memref<160x128xbf16, #tpu.memory_space<vmem>>, vector<32x32xbf16>
    %c96_57 = arith.constant 96 : index
    %c96_58 = arith.constant 96 : index
    %168 = vector.load %arg1[%c96_57, %c96_58] : memref<160x128xbf16, #tpu.memory_space<vmem>>, vector<32x32xbf16>
    %169 = tpu.concatenate %167, %168 in 0 : vector<32x32xbf16>, vector<32x32xbf16> -> vector<64x32xbf16>
    %170 = arith.extf %169 : vector<64x32xbf16> to vector<64x32xf32>
    %c8 = arith.constant 8 : index
    %c0_59 = arith.constant 0 : index
    %171 = vector.load %arg2[%c8, %c0_59] : memref<32x128xf32, #tpu.memory_space<vmem>>, vector<1x96xf32>
    %c9 = arith.constant 9 : index
    %c0_60 = arith.constant 0 : index
    %172 = vector.load %arg2[%c9, %c0_60] : memref<32x128xf32, #tpu.memory_space<vmem>>, vector<1x32xf32>
    %c10 = arith.constant 10 : index
    %c0_61 = arith.constant 0 : index
    %173 = vector.load %arg2[%c10, %c0_61] : memref<32x128xf32, #tpu.memory_space<vmem>>, vector<1x64xf32>
    %c11 = arith.constant 11 : index
    %c0_62 = arith.constant 0 : index
    %174 = vector.load %arg2[%c11, %c0_62] : memref<32x128xf32, #tpu.memory_space<vmem>>, vector<1x32xf32>
    %c12 = arith.constant 12 : index
    %c0_63 = arith.constant 0 : index
    %175 = vector.load %arg2[%c12, %c0_63] : memref<32x128xf32, #tpu.memory_space<vmem>>, vector<1x32xf32>
    %c13 = arith.constant 13 : index
    %c0_64 = arith.constant 0 : index
    %176 = vector.load %arg2[%c13, %c0_64] : memref<32x128xf32, #tpu.memory_space<vmem>>, vector<1x32xf32>
    %c14 = arith.constant 14 : index
    %c0_65 = arith.constant 0 : index
    %177 = vector.load %arg2[%c14, %c0_65] : memref<32x128xf32, #tpu.memory_space<vmem>>, vector<1x32xf32>
    %c15 = arith.constant 15 : index
    %c0_66 = arith.constant 0 : index
    %178 = vector.load %arg2[%c15, %c0_66] : memref<32x128xf32, #tpu.memory_space<vmem>>, vector<1x32xf32>
    %cst_67 = arith.constant dense<0.000000e+00> : vector<16x96xf32>
    %179 = tpu.matmul %160, %162, %cst_67 {dimension_numbers = #tpu.dot_dimension_numbers<[1], [0], [0], [1], [0, 0, 1, 1], [], []>} : vector<16x32xf32>, vector<32x96xf32>, vector<16x96xf32> -> vector<16x96xf32>
    %180 = vector.broadcast %171 : vector<1x96xf32> to vector<16x96xf32>
    %181 = arith.addf %179, %180 : vector<16x96xf32>
    %182 = vector.extract_strided_slice %181 {offsets = [0, 0], sizes = [16, 8], strides = [1, 1]} : vector<16x96xf32> to vector<16x8xf32>
    %183 = vector.shape_cast %182 : vector<16x8xf32> to vector<2x8x8xf32>
    %184 = vector.extract_strided_slice %181 {offsets = [0, 32], sizes = [16, 8], strides = [1, 1]} : vector<16x96xf32> to vector<16x8xf32>
    %185 = vector.shape_cast %184 : vector<16x8xf32> to vector<2x8x8xf32>
    %186 = vector.extract_strided_slice %181 {offsets = [0, 64], sizes = [16, 8], strides = [1, 1]} : vector<16x96xf32> to vector<16x8xf32>
    %187 = vector.shape_cast %186 : vector<16x8xf32> to vector<2x8x8xf32>
    "tpu.trace_start"() <{level = 10 : i32, message = "bqd,bkd->bqk"}> : () -> ()
    %cst_68 = arith.constant dense<0.000000e+00> : vector<2x8x8xf32>
    %188 = tpu.matmul %183, %185, %cst_68 {dimension_numbers = #tpu.dot_dimension_numbers<[2], [2], [1], [1], [0, 0, 0, 1, 1, 1], [0], [0]>} : vector<2x8x8xf32>, vector<2x8x8xf32>, vector<2x8x8xf32> -> vector<2x8x8xf32>
    "tpu.trace_stop"() : () -> ()
    %cst_69 = arith.constant dense<0xFF800000> : vector<2x8xf32>
    %189 = vector.multi_reduction <maximumf>, %188, %cst_69 [2] : vector<2x8x8xf32> to vector<2x8xf32>
    %190 = vector.shape_cast %189 : vector<2x8xf32> to vector<2x8x1xf32>
    %191 = vector.broadcast %190 : vector<2x8x1xf32> to vector<2x8x8xf32>
    %192 = arith.subf %188, %191 : vector<2x8x8xf32>
    %193 = math.exp %192 : vector<2x8x8xf32>
    %cst_70 = arith.constant dense<0.000000e+00> : vector<2x8xf32>
    %194 = vector.multi_reduction <add>, %193, %cst_70 [2] : vector<2x8x8xf32> to vector<2x8xf32>
    %195 = vector.shape_cast %194 : vector<2x8xf32> to vector<2x8x1xf32>
    %196 = tpu.reciprocal %195 {approx = true} : vector<2x8x1xf32> -> vector<2x8x1xf32>
    %197 = vector.broadcast %196 : vector<2x8x1xf32> to vector<2x8x8xf32>
    %198 = arith.mulf %193, %197 : vector<2x8x8xf32>
    "tpu.trace_start"() <{level = 10 : i32, message = "bqk,bkd->bqd"}> : () -> ()
    %cst_71 = arith.constant dense<0.000000e+00> : vector<2x8x8xf32>
    %199 = tpu.matmul %198, %187, %cst_71 {dimension_numbers = #tpu.dot_dimension_numbers<[2], [1], [1], [2], [0, 0, 0, 1, 1, 2], [0], [0]>} : vector<2x8x8xf32>, vector<2x8x8xf32>, vector<2x8x8xf32> -> vector<2x8x8xf32>
    "tpu.trace_stop"() : () -> ()
    %200 = vector.shape_cast %199 : vector<2x8x8xf32> to vector<16x8xf32>
    %201 = vector.extract_strided_slice %181 {offsets = [0, 8], sizes = [16, 8], strides = [1, 1]} : vector<16x96xf32> to vector<16x8xf32>
    %202 = vector.shape_cast %201 : vector<16x8xf32> to vector<2x8x8xf32>
    %203 = vector.extract_strided_slice %181 {offsets = [0, 40], sizes = [16, 8], strides = [1, 1]} : vector<16x96xf32> to vector<16x8xf32>
    %204 = vector.shape_cast %203 : vector<16x8xf32> to vector<2x8x8xf32>
    %205 = vector.extract_strided_slice %181 {offsets = [0, 72], sizes = [16, 8], strides = [1, 1]} : vector<16x96xf32> to vector<16x8xf32>
    %206 = vector.shape_cast %205 : vector<16x8xf32> to vector<2x8x8xf32>
    "tpu.trace_start"() <{level = 10 : i32, message = "bqd,bkd->bqk"}> : () -> ()
    %cst_72 = arith.constant dense<0.000000e+00> : vector<2x8x8xf32>
    %207 = tpu.matmul %202, %204, %cst_72 {dimension_numbers = #tpu.dot_dimension_numbers<[2], [2], [1], [1], [0, 0, 0, 1, 1, 1], [0], [0]>} : vector<2x8x8xf32>, vector<2x8x8xf32>, vector<2x8x8xf32> -> vector<2x8x8xf32>
    "tpu.trace_stop"() : () -> ()
    %cst_73 = arith.constant dense<0xFF800000> : vector<2x8xf32>
    %208 = vector.multi_reduction <maximumf>, %207, %cst_73 [2] : vector<2x8x8xf32> to vector<2x8xf32>
    %209 = vector.shape_cast %208 : vector<2x8xf32> to vector<2x8x1xf32>
    %210 = vector.broadcast %209 : vector<2x8x1xf32> to vector<2x8x8xf32>
    %211 = arith.subf %207, %210 : vector<2x8x8xf32>
    %212 = math.exp %211 : vector<2x8x8xf32>
    %cst_74 = arith.constant dense<0.000000e+00> : vector<2x8xf32>
    %213 = vector.multi_reduction <add>, %212, %cst_74 [2] : vector<2x8x8xf32> to vector<2x8xf32>
    %214 = vector.shape_cast %213 : vector<2x8xf32> to vector<2x8x1xf32>
    %215 = tpu.reciprocal %214 {approx = true} : vector<2x8x1xf32> -> vector<2x8x1xf32>
    %216 = vector.broadcast %215 : vector<2x8x1xf32> to vector<2x8x8xf32>
    %217 = arith.mulf %212, %216 : vector<2x8x8xf32>
    "tpu.trace_start"() <{level = 10 : i32, message = "bqk,bkd->bqd"}> : () -> ()
    %cst_75 = arith.constant dense<0.000000e+00> : vector<2x8x8xf32>
    %218 = tpu.matmul %217, %206, %cst_75 {dimension_numbers = #tpu.dot_dimension_numbers<[2], [1], [1], [2], [0, 0, 0, 1, 1, 2], [0], [0]>} : vector<2x8x8xf32>, vector<2x8x8xf32>, vector<2x8x8xf32> -> vector<2x8x8xf32>
    "tpu.trace_stop"() : () -> ()
    %219 = vector.shape_cast %218 : vector<2x8x8xf32> to vector<16x8xf32>
    %220 = vector.extract_strided_slice %181 {offsets = [0, 16], sizes = [16, 8], strides = [1, 1]} : vector<16x96xf32> to vector<16x8xf32>
    %221 = vector.shape_cast %220 : vector<16x8xf32> to vector<2x8x8xf32>
    %222 = vector.extract_strided_slice %181 {offsets = [0, 48], sizes = [16, 8], strides = [1, 1]} : vector<16x96xf32> to vector<16x8xf32>
    %223 = vector.shape_cast %222 : vector<16x8xf32> to vector<2x8x8xf32>
    %224 = vector.extract_strided_slice %181 {offsets = [0, 80], sizes = [16, 8], strides = [1, 1]} : vector<16x96xf32> to vector<16x8xf32>
    %225 = vector.shape_cast %224 : vector<16x8xf32> to vector<2x8x8xf32>
    "tpu.trace_start"() <{level = 10 : i32, message = "bqd,bkd->bqk"}> : () -> ()
    %cst_76 = arith.constant dense<0.000000e+00> : vector<2x8x8xf32>
    %226 = tpu.matmul %221, %223, %cst_76 {dimension_numbers = #tpu.dot_dimension_numbers<[2], [2], [1], [1], [0, 0, 0, 1, 1, 1], [0], [0]>} : vector<2x8x8xf32>, vector<2x8x8xf32>, vector<2x8x8xf32> -> vector<2x8x8xf32>
    "tpu.trace_stop"() : () -> ()
    %cst_77 = arith.constant dense<0xFF800000> : vector<2x8xf32>
    %227 = vector.multi_reduction <maximumf>, %226, %cst_77 [2] : vector<2x8x8xf32> to vector<2x8xf32>
    %228 = vector.shape_cast %227 : vector<2x8xf32> to vector<2x8x1xf32>
    %229 = vector.broadcast %228 : vector<2x8x1xf32> to vector<2x8x8xf32>
    %230 = arith.subf %226, %229 : vector<2x8x8xf32>
    %231 = math.exp %230 : vector<2x8x8xf32>
    %cst_78 = arith.constant dense<0.000000e+00> : vector<2x8xf32>
    %232 = vector.multi_reduction <add>, %231, %cst_78 [2] : vector<2x8x8xf32> to vector<2x8xf32>
    %233 = vector.shape_cast %232 : vector<2x8xf32> to vector<2x8x1xf32>
    %234 = tpu.reciprocal %233 {approx = true} : vector<2x8x1xf32> -> vector<2x8x1xf32>
    %235 = vector.broadcast %234 : vector<2x8x1xf32> to vector<2x8x8xf32>
    %236 = arith.mulf %231, %235 : vector<2x8x8xf32>
    "tpu.trace_start"() <{level = 10 : i32, message = "bqk,bkd->bqd"}> : () -> ()
    %cst_79 = arith.constant dense<0.000000e+00> : vector<2x8x8xf32>
    %237 = tpu.matmul %236, %225, %cst_79 {dimension_numbers = #tpu.dot_dimension_numbers<[2], [1], [1], [2], [0, 0, 0, 1, 1, 2], [0], [0]>} : vector<2x8x8xf32>, vector<2x8x8xf32>, vector<2x8x8xf32> -> vector<2x8x8xf32>
    "tpu.trace_stop"() : () -> ()
    %238 = vector.shape_cast %237 : vector<2x8x8xf32> to vector<16x8xf32>
    %239 = vector.extract_strided_slice %181 {offsets = [0, 24], sizes = [16, 8], strides = [1, 1]} : vector<16x96xf32> to vector<16x8xf32>
    %240 = vector.shape_cast %239 : vector<16x8xf32> to vector<2x8x8xf32>
    %241 = vector.extract_strided_slice %181 {offsets = [0, 56], sizes = [16, 8], strides = [1, 1]} : vector<16x96xf32> to vector<16x8xf32>
    %242 = vector.shape_cast %241 : vector<16x8xf32> to vector<2x8x8xf32>
    %243 = vector.extract_strided_slice %181 {offsets = [0, 88], sizes = [16, 8], strides = [1, 1]} : vector<16x96xf32> to vector<16x8xf32>
    %244 = vector.shape_cast %243 : vector<16x8xf32> to vector<2x8x8xf32>
    "tpu.trace_start"() <{level = 10 : i32, message = "bqd,bkd->bqk"}> : () -> ()
    %cst_80 = arith.constant dense<0.000000e+00> : vector<2x8x8xf32>
    %245 = tpu.matmul %240, %242, %cst_80 {dimension_numbers = #tpu.dot_dimension_numbers<[2], [2], [1], [1], [0, 0, 0, 1, 1, 1], [0], [0]>} : vector<2x8x8xf32>, vector<2x8x8xf32>, vector<2x8x8xf32> -> vector<2x8x8xf32>
    "tpu.trace_stop"() : () -> ()
    %cst_81 = arith.constant dense<0xFF800000> : vector<2x8xf32>
    %246 = vector.multi_reduction <maximumf>, %245, %cst_81 [2] : vector<2x8x8xf32> to vector<2x8xf32>
    %247 = vector.shape_cast %246 : vector<2x8xf32> to vector<2x8x1xf32>
    %248 = vector.broadcast %247 : vector<2x8x1xf32> to vector<2x8x8xf32>
    %249 = arith.subf %245, %248 : vector<2x8x8xf32>
    %250 = math.exp %249 : vector<2x8x8xf32>
    %cst_82 = arith.constant dense<0.000000e+00> : vector<2x8xf32>
    %251 = vector.multi_reduction <add>, %250, %cst_82 [2] : vector<2x8x8xf32> to vector<2x8xf32>
    %252 = vector.shape_cast %251 : vector<2x8xf32> to vector<2x8x1xf32>
    %253 = tpu.reciprocal %252 {approx = true} : vector<2x8x1xf32> -> vector<2x8x1xf32>
    %254 = vector.broadcast %253 : vector<2x8x1xf32> to vector<2x8x8xf32>
    %255 = arith.mulf %250, %254 : vector<2x8x8xf32>
    "tpu.trace_start"() <{level = 10 : i32, message = "bqk,bkd->bqd"}> : () -> ()
    %cst_83 = arith.constant dense<0.000000e+00> : vector<2x8x8xf32>
    %256 = tpu.matmul %255, %244, %cst_83 {dimension_numbers = #tpu.dot_dimension_numbers<[2], [1], [1], [2], [0, 0, 0, 1, 1, 2], [0], [0]>} : vector<2x8x8xf32>, vector<2x8x8xf32>, vector<2x8x8xf32> -> vector<2x8x8xf32>
    "tpu.trace_stop"() : () -> ()
    %257 = vector.shape_cast %256 : vector<2x8x8xf32> to vector<16x8xf32>
    %258 = tpu.concatenate %200, %219, %238, %257 in 1 : vector<16x8xf32>, vector<16x8xf32>, vector<16x8xf32>, vector<16x8xf32> -> vector<16x32xf32>
    %cst_84 = arith.constant dense<0.000000e+00> : vector<16x32xf32>
    %259 = tpu.matmul %258, %164, %cst_84 {dimension_numbers = #tpu.dot_dimension_numbers<[1], [0], [0], [1], [0, 0, 1, 1], [], []>} : vector<16x32xf32>, vector<32x32xf32>, vector<16x32xf32> -> vector<16x32xf32>
    %260 = vector.broadcast %172 : vector<1x32xf32> to vector<16x32xf32>
    %261 = arith.addf %259, %260 : vector<16x32xf32>
    %262 = arith.addf %160, %261 : vector<16x32xf32>
    %cst_85 = arith.constant dense<0.000000e+00> : vector<16xf32>
    %263 = vector.multi_reduction <add>, %262, %cst_85 [1] : vector<16x32xf32> to vector<16xf32>
    %264 = vector.shape_cast %263 : vector<16xf32> to vector<16x1xf32>
    %cst_86 = arith.constant 3.200000e+01 : f32
    %265 = vector.broadcast %cst_86 : f32 to vector<16x1xf32>
    %266 = arith.divf %264, %265 : vector<16x1xf32>
    %267 = vector.broadcast %266 : vector<16x1xf32> to vector<16x32xf32>
    %268 = arith.subf %262, %267 : vector<16x32xf32>
    %269 = arith.mulf %268, %268 : vector<16x32xf32>
    %cst_87 = arith.constant dense<0.000000e+00> : vector<16xf32>
    %270 = vector.multi_reduction <add>, %269, %cst_87 [1] : vector<16x32xf32> to vector<16xf32>
    %271 = vector.shape_cast %270 : vector<16xf32> to vector<16x1xf32>
    %cst_88 = arith.constant 3.200000e+01 : f32
    %272 = vector.broadcast %cst_88 : f32 to vector<16x1xf32>
    %273 = arith.divf %271, %272 : vector<16x1xf32>
    %274 = vector.broadcast %266 : vector<16x1xf32> to vector<16x32xf32>
    %275 = arith.subf %262, %274 : vector<16x32xf32>
    %cst_89 = arith.constant 9.99999974E-6 : f32
    %276 = vector.broadcast %cst_89 : f32 to vector<16x1xf32>
    %277 = arith.addf %273, %276 : vector<16x1xf32>
    %278 = math.rsqrt %277 : vector<16x1xf32>
    %279 = vector.broadcast %278 : vector<16x1xf32> to vector<16x32xf32>
    %280 = arith.mulf %275, %279 : vector<16x32xf32>
    %281 = vector.broadcast %175 : vector<1x32xf32> to vector<16x32xf32>
    %282 = arith.mulf %280, %281 : vector<16x32xf32>
    %283 = vector.broadcast %176 : vector<1x32xf32> to vector<16x32xf32>
    %284 = arith.addf %282, %283 : vector<16x32xf32>
    %cst_90 = arith.constant dense<0.000000e+00> : vector<16x64xf32>
    %285 = tpu.matmul %284, %166, %cst_90 {dimension_numbers = #tpu.dot_dimension_numbers<[1], [0], [0], [1], [0, 0, 1, 1], [], []>} : vector<16x32xf32>, vector<32x64xf32>, vector<16x64xf32> -> vector<16x64xf32>
    %286 = vector.broadcast %173 : vector<1x64xf32> to vector<16x64xf32>
    %287 = arith.addf %285, %286 : vector<16x64xf32>
    %cst_91 = arith.constant 0.000000e+00 : f32
    %288 = vector.broadcast %cst_91 : f32 to vector<16x64xf32>
    %289 = arith.maximumf %287, %288 : vector<16x64xf32>
    %cst_92 = arith.constant dense<0.000000e+00> : vector<16x32xf32>
    %290 = tpu.matmul %289, %170, %cst_92 {dimension_numbers = #tpu.dot_dimension_numbers<[1], [0], [0], [1], [0, 0, 1, 1], [], []>} : vector<16x64xf32>, vector<64x32xf32>, vector<16x32xf32> -> vector<16x32xf32>
    %291 = vector.broadcast %174 : vector<1x32xf32> to vector<16x32xf32>
    %292 = arith.addf %290, %291 : vector<16x32xf32>
    %293 = arith.addf %284, %292 : vector<16x32xf32>
    %cst_93 = arith.constant dense<0.000000e+00> : vector<16xf32>
    %294 = vector.multi_reduction <add>, %293, %cst_93 [1] : vector<16x32xf32> to vector<16xf32>
    %295 = vector.shape_cast %294 : vector<16xf32> to vector<16x1xf32>
    %cst_94 = arith.constant 3.200000e+01 : f32
    %296 = vector.broadcast %cst_94 : f32 to vector<16x1xf32>
    %297 = arith.divf %295, %296 : vector<16x1xf32>
    %298 = vector.broadcast %297 : vector<16x1xf32> to vector<16x32xf32>
    %299 = arith.subf %293, %298 : vector<16x32xf32>
    %300 = arith.mulf %299, %299 : vector<16x32xf32>
    %cst_95 = arith.constant dense<0.000000e+00> : vector<16xf32>
    %301 = vector.multi_reduction <add>, %300, %cst_95 [1] : vector<16x32xf32> to vector<16xf32>
    %302 = vector.shape_cast %301 : vector<16xf32> to vector<16x1xf32>
    %cst_96 = arith.constant 3.200000e+01 : f32
    %303 = vector.broadcast %cst_96 : f32 to vector<16x1xf32>
    %304 = arith.divf %302, %303 : vector<16x1xf32>
    %305 = vector.broadcast %297 : vector<16x1xf32> to vector<16x32xf32>
    %306 = arith.subf %293, %305 : vector<16x32xf32>
    %cst_97 = arith.constant 9.99999974E-6 : f32
    %307 = vector.broadcast %cst_97 : f32 to vector<16x1xf32>
    %308 = arith.addf %304, %307 : vector<16x1xf32>
    %309 = math.rsqrt %308 : vector<16x1xf32>
    %310 = vector.broadcast %309 : vector<16x1xf32> to vector<16x32xf32>
    %311 = arith.mulf %306, %310 : vector<16x32xf32>
    %312 = vector.broadcast %177 : vector<1x32xf32> to vector<16x32xf32>
    %313 = arith.mulf %311, %312 : vector<16x32xf32>
    %314 = vector.broadcast %178 : vector<1x32xf32> to vector<16x32xf32>
    %315 = arith.addf %313, %314 : vector<16x32xf32>
    %316 = vector.extract_strided_slice %315 {offsets = [0, 0], sizes = [8, 32], strides = [1, 1]} : vector<16x32xf32> to vector<8x32xf32>
    %317 = vector.extract_strided_slice %315 {offsets = [8, 0], sizes = [8, 32], strides = [1, 1]} : vector<16x32xf32> to vector<8x32xf32>
    %318 = arith.addf %316, %317 : vector<8x32xf32>
    %cst_98 = arith.constant 5.000000e-01 : f32
    %319 = vector.broadcast %cst_98 : f32 to vector<8x32xf32>
    %320 = arith.mulf %318, %319 : vector<8x32xf32>
    %c128 = arith.constant 128 : index
    %c0_99 = arith.constant 0 : index
    %321 = vector.load %arg1[%c128, %c0_99] : memref<160x128xbf16, #tpu.memory_space<vmem>>, vector<32x128xbf16>
    %322 = arith.extf %321 : vector<32x128xbf16> to vector<32x128xf32>
    %c24 = arith.constant 24 : index
    %c0_100 = arith.constant 0 : index
    %323 = vector.load %arg2[%c24, %c0_100] : memref<32x128xf32, #tpu.memory_space<vmem>>, vector<1x128xf32>
    %cst_101 = arith.constant dense<0.000000e+00> : vector<8x128xf32>
    %324 = tpu.matmul %320, %322, %cst_101 {dimension_numbers = #tpu.dot_dimension_numbers<[1], [0], [0], [1], [0, 0, 1, 1], [], []>} : vector<8x32xf32>, vector<32x128xf32>, vector<8x128xf32> -> vector<8x128xf32>
    %325 = vector.broadcast %323 : vector<1x128xf32> to vector<8x128xf32>
    %326 = arith.addf %324, %325 : vector<8x128xf32>
    %c0_102 = arith.constant 0 : index
    %c0_103 = arith.constant 0 : index
    %327 = vector.load %arg3[%c0_102, %c0_103] : memref<8x128xf32, #tpu.memory_space<vmem>>, vector<8x128xf32>
    tpu.vector_store %arg3[%c0_102, %c0_103], %326 {strides = array<i32>} : memref<8x128xf32, #tpu.memory_space<vmem>>, vector<8x128xf32>,
    return
  }
}

</mosaic_0001>

<llo_original>
// kernel: transformer_classifier.1
$region0: #{transformer_classifier.1}
  #allocation0 [shape = 'u32[]', space=smem, size = 0x4, offset = 0x4, fixed_abs, tag = 'smem constant byte address 0x4 - core index']
  #allocation1 [shape = 'u32[144,128]{1,0:T(1,128)}', space=vmem, size = 0x12000, scoped, tag = 'internal scratch']
  %s0 = inlined_call_operand.vmem [shape: f32[2,8,32], index: 0, kind: input, shape index: {}]
  %s1 = inlined_call_operand.hbm [shape: bf16[160,128], index: 1, kind: input, shape index: {}]
  %s2 = inlined_call_operand.vmem [shape: f32[32,128], index: 2, kind: input, shape index: {}]
  %s3 = inlined_call_operand.hbm [shape: f32[8,128], index: 3, kind: output, shape index: {}]
  %s4 = sld [smem:[#allocation0]]
  $region26: #{transformer_classifier.1} parent=0
    _
  %s6 = ssub.s32 1, %s4
  %s7 = scalar_select 0, %s6, %s4
  $region1: #{transformer_classifier.1} parent=0
    #allocation2 [shape = 'u8[40960]{0}', space=vmem, size = 0xa000, scoped, tag = 'input window, operand 1, single buffered']
    #allocation3 [shape = 's32[1]{0}', space=sflag, size = 0x4, scoped, tag = 'scoped memory for transformer_classifier.1']
    #allocation4 [shape = 's32[1]{0}', space=sflag, size = 0x4, scoped, tag = 'scoped memory for transformer_classifier.1']
    #allocation5 [shape = 'u8[4096]{0}', space=vmem, size = 0x1000, scoped, tag = 'output window, operand 0, single buffered']
    %8 = vsyncpa [#allocation3], 0
    %9 = vsyncpa [#allocation4], 0
    // Predicated region
    $region2: #{transformer_classifier.1} parent=1 // pred_check
      _
    $region3: #{transformer_classifier.1} parent=1 // pred_check_branch
      %11 = sbr.rel (0) target = $region5
    $region4: #{transformer_classifier.1} parent=1 // pred_region
      _
    $region5: #{transformer_classifier.1} parent=1 // pred_fallthru
      _
    // Predicated region
    $region6: #{transformer_classifier.1} parent=1 // pred_check
      _
    $region7: #{transformer_classifier.1} parent=1 // pred_check_branch
      %13 = sbr.rel (0) target = $region9
    $region8: #{transformer_classifier.1} parent=1 // pred_region
      %s15 = ssub.s32 1280, 1280
      %16 = vsyncadd [#allocation3], %s15
      %s17 = sshll.u32 [#allocation2], 4
      %s18 = int_to_ptr.vmem [resolvable:$true] %s17
      %23 = dma.hbm_to_vmem [thread:$0]  %s1, 1280, %s18, [#allocation3], 64, 64, 4
    $region9: #{transformer_classifier.1} parent=1 // pred_fallthru
      _
    // Predicated region
    $region10: #{transformer_classifier.1} parent=1 // pred_check
      _
    $region11: #{transformer_classifier.1} parent=1 // pred_check_branch
      %25 = sbr.rel (0) target = $region13
    $region12: #{transformer_classifier.1} parent=1 // pred_region
      _
    $region13: #{transformer_classifier.1} parent=1 // pred_fallthru
      _
    // Predicated region
    $region14: #{transformer_classifier.1} parent=1 // pred_check
      _
    $region15: #{transformer_classifier.1} parent=1 // pred_check_branch
      %27 = sbr.rel (0) target = $region17
    $region16: #{transformer_classifier.1} parent=1 // pred_region
      %28 = dma.done [#allocation3], 1280
    $region17: #{transformer_classifier.1} parent=1 // pred_fallthru
      _
    %v29 = vld [vmem:[%s2 + $0x10] sm:$0xff]
    %v30 = vld [vmem:[%s0] sm:$0xff]
    %v31 = vld [vmem:[%s0 + $0x8] sm:$0xff]
    %v32 = vadd.f32 %v30, %v29
    %v33 = vadd.f32 %v31, %v29
    %v34 = vld [vmem:[#allocation2] sm:$0xf]
    %v35 = vld [vmem:[#allocation2 + $0x4] sm:$0xf]
    %v36 = vld [vmem:[#allocation2 + $0x8] sm:$0xf]
    %v37 = vld [vmem:[#allocation2 + $0xc] sm:$0xf]
    %v38 = vunpack.c.l.bf16 %v34
    %v39 = vunpack.c.l.bf16 %v35
    %v40 = vunpack.c.l.bf16 %v36
    %v41 = vunpack.c.l.bf16 %v37
    %v42 = vld [vmem:[#allocation2 + $0x10] sm:$0xf]
    %v43 = vld [vmem:[#allocation2 + $0x14] sm:$0xf]
    %v44 = vld [vmem:[#allocation2 + $0x18] sm:$0xf]
    %v45 = vld [vmem:[#allocation2 + $0x1c] sm:$0xf]
    %v46 = vunpack.c.l.bf16 %v42
    %v47 = vunpack.c.l.bf16 %v43
    %v48 = vunpack.c.l.bf16 %v44
    %v49 = vunpack.c.l.bf16 %v45
    %v54 = vunpack.c.l.b16 %v42
    %v55 = vunpack.c.l.b16 %v43
    %v56 = vunpack.c.l.b16 %v44
    %v57 = vunpack.c.l.b16 %v45
    %v58 = vpack.c.b16 %v55, %v54
    %v59 = vpack.c.b16 %v57, %v56
    %62 = vrot.lane.b32.xlu0 %v58, 96
    %v63 = vpop.permute.xlu0 %62
    %64 = vrot.lane.b32.xlu0 %v59, 96
    %v65 = vpop.permute.xlu0 %64
    %v68 = vunpack.c.l.bf16 %v58
    %v69 = vunpack.c.h.bf16 %v58
    %v70 = vunpack.c.l.bf16 %v59
    %v71 = vunpack.c.h.bf16 %v59
    %v72 = vunpack.c.l.bf16 %v63
    %v73 = vunpack.c.h.bf16 %v63
    %v74 = vunpack.c.l.bf16 %v65
    %v75 = vunpack.c.h.bf16 %v65
    %v76 = vld [vmem:[%s2] sm:$0x1]
    %v77 = vld [vmem:[%s2 + $0x1] sm:$0x1]
    %v78 = vld [vmem:[%s2 + $0x2] sm:$0x1]
    %v79 = vld [vmem:[%s2 + $0x3] sm:$0x1]
    %v80 = vld [vmem:[%s2 + $0x4] sm:$0x1]
    %v81 = vld [vmem:[%s2 + $0x5] sm:$0x1]
    %v82 = vld [vmem:[%s2 + $0x6] sm:$0x1]
    %v83 = vld [vmem:[%s2 + $0x7] sm:$0x1]
    %v84 = vlaneseq
    %v85 = vshrl.u32 %v84, 7
    %v86 = vsub.s32 0, %v85
    %v87 = vrot.slane %v76, %v86
    %vm88 = vcmask 261120
    %v90 = vsel %vm88, %v32, 0
    %v93 = vsel %vm88, %v33, 0
    %95 = vmatprep.subr.mxu0 0.0
    %96 = vmatpush1.msra.mxu0 0.0
    %97 = vmatprep.subr.mxu0 0.0
    %98 = vmatpush1.msra.mxu0 0.0
    %99 = vmatprep.subr.mxu0 0.0
    %100 = vmatpush1.msra.mxu0 0.0
    %101 = vmatprep.subr.mxu0 0.0
    %102 = vmatpush1.msra.mxu0 0.0
    %103 = vmatprep.subr.mxu0 0.0
    %104 = vmatpush1.msra.mxu0 0.0
    %105 = vmatprep.subr.mxu0 0.0
    %106 = vmatpush1.msra.mxu0 0.0
    %107 = vmatprep.subr.mxu0 0.0
    %108 = vmatpush1.msra.mxu0 0.0
    %109 = vmatprep.subr.mxu0 0.0
    %110 = vmatpush1.msra.mxu0 0.0
    %111 = vmatprep.subr.mxu0 0.0
    %112 = vmatpush1.msra.mxu0 0.0
    %113 = vmatprep.subr.mxu0 0.0
    %114 = vmatpush1.msra.mxu0 0.0
    %115 = vmatprep.subr.mxu0 0.0
    %116 = vmatpush1.msra.mxu0 0.0
    %117 = vmatprep.subr.mxu0 0.0
    %118 = vmatpush1.msra.mxu0 0.0
    %119 = vmatprep.subr.mxu0 0.0
    %120 = vmatpush1.msra.mxu0 %v41
    %121 = vmatprep.subr.mxu0 0.0
    %122 = vmatpush1.msra.mxu0 %v40
    %123 = vmatprep.subr.mxu0 0.0
    %124 = vmatpush1.msra.mxu0 %v39
    %125 = vmatprep.subr.mxu0 0.0
    %126 = vmatpush1.msra.mxu0 %v38
    %127 = vmatprep.subr.mxu0 0.0
    %128 = vmatpush2.msra.mxu0 0.0
    %129 = vmatprep.subr.mxu0 0.0
    %130 = vmatpush2.msra.mxu0 0.0
    %131 = vmatprep.subr.mxu0 0.0
    %132 = vmatpush2.msra.mxu0 0.0
    %133 = vmatprep.subr.mxu0 0.0
    %134 = vmatpush2.msra.mxu0 0.0
    %135 = vmatprep.subr.mxu0 0.0
    %136 = vmatpush2.msra.mxu0 0.0
    %137 = vmatprep.subr.mxu0 0.0
    %138 = vmatpush2.msra.mxu0 0.0
    %139 = vmatprep.subr.mxu0 0.0
    %140 = vmatpush2.msra.mxu0 0.0
    %141 = vmatprep.subr.mxu0 0.0
    %142 = vmatpush2.msra.mxu0 0.0
    %143 = vmatprep.subr.mxu0 0.0
    %144 = vmatpush2.msra.mxu0 0.0
    %145 = vmatprep.subr.mxu0 0.0
    %146 = vmatpush2.msra.mxu0 0.0
    %147 = vmatprep.subr.mxu0 0.0
    %148 = vmatpush2.msra.mxu0 0.0
    %149 = vmatprep.subr.mxu0 0.0
    %150 = vmatpush2.msra.mxu0 0.0
    %151 = vmatprep.subr.mxu0 0.0
    %152 = vmatpush2.msra.mxu0 0.0
    %153 = vmatprep.subr.mxu0 0.0
    %154 = vmatpush2.msra.mxu0 0.0
    %155 = vmatprep.subr.mxu0 0.0
    %156 = vmatpush2.msra.mxu0 0.0
    %157 = vmatprep.subr.mxu0 0.0
    %158 = vmatpush2.msra.mxu0 0.0
    %159 = vmatprep.mubr.f32.mxu0 0.0
    %160 = vmatmul.mubr.f32.gmra.mxu0 %v90
    %v161 = vpop.f32.mrf.mxu0
    %v162 = vadd.f32 %v87, %v161
    %v163 = vpop.f32.mrf.mxu0
    %164 = vmatprep.mubr.f32.mxu0 0.0
    %165 = vmatmul.mubr.f32.gmra.mxu0 %v93
    %v166 = vpop.f32.mrf.mxu0
    %v167 = vadd.f32 %v87, %v166
    %v168 = vpop.f32.mrf.mxu0
    %169 = vdwg.mxu0
    %171 = vrot.lane.b32.xlu0 %v162, 96
    %v172 = vpop.permute.xlu0 %171
    %vm173 = vcmask 64512
    %v174 = vsel %vm173, %v162, 0
    %v176 = vsel %vm173, %v172, 0
    %178 = vmatprep.subr.mxu0 0.0
    %179 = vmatpush1.xpose.msra.mxu0 0.0
    %180 = vmatprep.subr.mxu0 0.0
    %181 = vmatpush1.xpose.msra.mxu0 0.0
    %182 = vmatprep.subr.mxu0 0.0
    %183 = vmatpush1.xpose.msra.mxu0 0.0
    %184 = vmatprep.subr.mxu0 0.0
    %185 = vmatpush1.xpose.msra.mxu0 0.0
    %186 = vmatprep.subr.mxu0 0.0
    %187 = vmatpush1.xpose.msra.mxu0 0.0
    %188 = vmatprep.subr.mxu0 0.0
    %189 = vmatpush1.xpose.msra.mxu0 0.0
    %190 = vmatprep.subr.mxu0 0.0
    %191 = vmatpush1.xpose.msra.mxu0 0.0
    %192 = vmatprep.subr.mxu0 0.0
    %193 = vmatpush1.xpose.msra.mxu0 0.0
    %194 = vmatprep.subr.mxu0 0.0
    %195 = vmatpush1.xpose.msra.mxu0 0.0
    %196 = vmatprep.subr.mxu0 0.0
    %197 = vmatpush1.xpose.msra.mxu0 0.0
    %198 = vmatprep.subr.mxu0 0.0
    %199 = vmatpush1.xpose.msra.mxu0 0.0
    %200 = vmatprep.subr.mxu0 0.0
    %201 = vmatpush1.xpose.msra.mxu0 0.0
    %202 = vmatprep.subr.mxu0 0.0
    %203 = vmatpush1.xpose.msra.mxu0 0.0
    %204 = vmatprep.subr.mxu0 0.0
    %205 = vmatpush1.xpose.msra.mxu0 0.0
    %206 = vmatprep.subr.mxu0 0.0
    %207 = vmatpush1.xpose.msra.mxu0 0.0
    %208 = vmatprep.subr.mxu0 0.0
    %209 = vmatpush1.xpose.msra.mxu0 %v176
    %210 = vmatprep.subr.mxu0 0.0
    %211 = vmatpush2.xpose.msra.mxu0 0.0
    %212 = vmatprep.subr.mxu0 0.0
    %213 = vmatpush2.xpose.msra.mxu0 0.0
    %214 = vmatprep.subr.mxu0 0.0
    %215 = vmatpush2.xpose.msra.mxu0 0.0
    %216 = vmatprep.subr.mxu0 0.0
    %217 = vmatpush2.xpose.msra.mxu0 0.0
    %218 = vmatprep.subr.mxu0 0.0
    %219 = vmatpush2.xpose.msra.mxu0 0.0
    %220 = vmatprep.subr.mxu0 0.0
    %221 = vmatpush2.xpose.msra.mxu0 0.0
    %222 = vmatprep.subr.mxu0 0.0
    %223 = vmatpush2.xpose.msra.mxu0 0.0
    %224 = vmatprep.subr.mxu0 0.0
    %225 = vmatpush2.xpose.msra.mxu0 0.0
    %226 = vmatprep.subr.mxu0 0.0
    %227 = vmatpush2.xpose.msra.mxu0 0.0
    %228 = vmatprep.subr.mxu0 0.0
    %229 = vmatpush2.xpose.msra.mxu0 0.0
    %230 = vmatprep.subr.mxu0 0.0
    %231 = vmatpush2.xpose.msra.mxu0 0.0
    %232 = vmatprep.subr.mxu0 0.0
    %233 = vmatpush2.xpose.msra.mxu0 0.0
    %234 = vmatprep.subr.mxu0 0.0
    %235 = vmatpush2.xpose.msra.mxu0 0.0
    %236 = vmatprep.subr.mxu0 0.0
    %237 = vmatpush2.xpose.msra.mxu0 0.0
    %238 = vmatprep.subr.mxu0 0.0
    %239 = vmatpush2.xpose.msra.mxu0 0.0
    %240 = vmatprep.subr.mxu0 0.0
    %241 = vmatpush2.xpose.msra.mxu0 0.0
    %242 = vmatprep.mubr.f32.mxu0 0.0
    %243 = vmatmul.mubr.f32.gmra.mxu0 %v174
    %v244 = vpop.f32.mrf.mxu0
    %v245 = vadd.f32 0.0, %v244
    %v246 = vpop.f32.mrf.mxu0
    %247 = vdwg.mxu0
    %249 = vrot.lane.b32.xlu0 %v167, 96
    %v250 = vpop.permute.xlu0 %249
    %v251 = vsel %vm173, %v167, 0
    %v253 = vsel %vm173, %v250, 0
    %255 = vmatprep.subr.mxu0 0.0
    %256 = vmatpush1.xpose.msra.mxu0 0.0
    %257 = vmatprep.subr.mxu0 0.0
    %258 = vmatpush1.xpose.msra.mxu0 0.0
    %259 = vmatprep.subr.mxu0 0.0
    %260 = vmatpush1.xpose.msra.mxu0 0.0
    %261 = vmatprep.subr.mxu0 0.0
    %262 = vmatpush1.xpose.msra.mxu0 0.0
    %263 = vmatprep.subr.mxu0 0.0
    %264 = vmatpush1.xpose.msra.mxu0 0.0
    %265 = vmatprep.subr.mxu0 0.0
    %266 = vmatpush1.xpose.msra.mxu0 0.0
    %267 = vmatprep.subr.mxu0 0.0
    %268 = vmatpush1.xpose.msra.mxu0 0.0
    %269 = vmatprep.subr.mxu0 0.0
    %270 = vmatpush1.xpose.msra.mxu0 0.0
    %271 = vmatprep.subr.mxu0 0.0
    %272 = vmatpush1.xpose.msra.mxu0 0.0
    %273 = vmatprep.subr.mxu0 0.0
    %274 = vmatpush1.xpose.msra.mxu0 0.0
    %275 = vmatprep.subr.mxu0 0.0
    %276 = vmatpush1.xpose.msra.mxu0 0.0
    %277 = vmatprep.subr.mxu0 0.0
    %278 = vmatpush1.xpose.msra.mxu0 0.0
    %279 = vmatprep.subr.mxu0 0.0
    %280 = vmatpush1.xpose.msra.mxu0 0.0
    %281 = vmatprep.subr.mxu0 0.0
    %282 = vmatpush1.xpose.msra.mxu0 0.0
    %283 = vmatprep.subr.mxu0 0.0
    %284 = vmatpush1.xpose.msra.mxu0 0.0
    %285 = vmatprep.subr.mxu0 0.0
    %286 = vmatpush1.xpose.msra.mxu0 %v253
    %287 = vmatprep.subr.mxu0 0.0
    %288 = vmatpush2.xpose.msra.mxu0 0.0
    %289 = vmatprep.subr.mxu0 0.0
    %290 = vmatpush2.xpose.msra.mxu0 0.0
    %291 = vmatprep.subr.mxu0 0.0
    %292 = vmatpush2.xpose.msra.mxu0 0.0
    %293 = vmatprep.subr.mxu0 0.0
    %294 = vmatpush2.xpose.msra.mxu0 0.0
    %295 = vmatprep.subr.mxu0 0.0
    %296 = vmatpush2.xpose.msra.mxu0 0.0
    %297 = vmatprep.subr.mxu0 0.0
    %298 = vmatpush2.xpose.msra.mxu0 0.0
    %299 = vmatprep.subr.mxu0 0.0
    %300 = vmatpush2.xpose.msra.mxu0 0.0
    %301 = vmatprep.subr.mxu0 0.0
    %302 = vmatpush2.xpose.msra.mxu0 0.0
    %303 = vmatprep.subr.mxu0 0.0
    %304 = vmatpush2.xpose.msra.mxu0 0.0
    %305 = vmatprep.subr.mxu0 0.0
    %306 = vmatpush2.xpose.msra.mxu0 0.0
    %307 = vmatprep.subr.mxu0 0.0
    %308 = vmatpush2.xpose.msra.mxu0 0.0
    %309 = vmatprep.subr.mxu0 0.0
    %310 = vmatpush2.xpose.msra.mxu0 0.0
    %311 = vmatprep.subr.mxu0 0.0
    %312 = vmatpush2.xpose.msra.mxu0 0.0
    %313 = vmatprep.subr.mxu0 0.0
    %314 = vmatpush2.xpose.msra.mxu0 0.0
    %315 = vmatprep.subr.mxu0 0.0
    %316 = vmatpush2.xpose.msra.mxu0 0.0
    %317 = vmatprep.subr.mxu0 0.0
    %318 = vmatpush2.xpose.msra.mxu0 0.0
    %319 = vmatprep.mubr.f32.mxu0 0.0
    %320 = vmatmul.mubr.f32.gmra.mxu0 %v251
    %v321 = vpop.f32.mrf.mxu0
    %v322 = vadd.f32 0.0, %v321
    %v323 = vpop.f32.mrf.mxu0
    %324 = vdwg.mxu0
    %v325 = vsel %vm173, %v245, -inf
    %326 = vmax.xlane.f32.xlu0 %v325
    %v327 = vpop.xlane.xlu0 %326
    %v328 = vsel %vm173, %v322, -inf
    %329 = vmax.xlane.f32.xlu0 %v328
    %v330 = vpop.xlane.xlu0 %329
    %v331 = vsub.f32 %v245, %v327
    %v332 = vsub.f32 %v322, %v330
    %v333 = vmul.f32 %v331, 1.442695
    %v334 = vpow.pop %v333
    %v335 = vmul.f32 %v332, 1.442695
    %v336 = vpow.pop %v335
    %v337 = vsel %vm173, %v334, 0.0
    %338 = vadd.xlane.f32.xlu0 %v337
    %v339 = vpop.xlane.xlu0 %338
    %v340 = vsel %vm173, %v336, 0.0
    %341 = vadd.xlane.f32.xlu0 %v340
    %v342 = vpop.xlane.xlu0 %341
    %v343 = vrcp.pop %v339
    %v344 = vrcp.pop %v342
    %v345 = vmul.f32 %v334, %v343
    %v346 = vmul.f32 %v336, %v344
    %347 = vrot.lane.b32.xlu0 %v162, 64
    %v348 = vpop.permute.xlu0 %347
    %v351 = vsel %vm173, %v345, 0
    %353 = vmatprep.subr.mxu0 0.0
    %354 = vmatpush1.msra.mxu0 0.0
    %355 = vmatprep.subr.mxu0 0.0
    %356 = vmatpush1.msra.mxu0 0.0
    %357 = vmatprep.subr.mxu0 0.0
    %358 = vmatpush1.msra.mxu0 0.0
    %359 = vmatprep.subr.mxu0 0.0
    %360 = vmatpush1.msra.mxu0 0.0
    %361 = vmatprep.subr.mxu0 0.0
    %362 = vmatpush1.msra.mxu0 0.0
    %363 = vmatprep.subr.mxu0 0.0
    %364 = vmatpush1.msra.mxu0 0.0
    %365 = vmatprep.subr.mxu0 0.0
    %366 = vmatpush1.msra.mxu0 0.0
    %367 = vmatprep.subr.mxu0 0.0
    %368 = vmatpush1.msra.mxu0 0.0
    %369 = vmatprep.subr.mxu0 0.0
    %370 = vmatpush1.msra.mxu0 0.0
    %371 = vmatprep.subr.mxu0 0.0
    %372 = vmatpush1.msra.mxu0 0.0
    %373 = vmatprep.subr.mxu0 0.0
    %374 = vmatpush1.msra.mxu0 0.0
    %375 = vmatprep.subr.mxu0 0.0
    %376 = vmatpush1.msra.mxu0 0.0
    %377 = vmatprep.subr.mxu0 0.0
    %378 = vmatpush1.msra.mxu0 0.0
    %379 = vmatprep.subr.mxu0 0.0
    %380 = vmatpush1.msra.mxu0 0.0
    %381 = vmatprep.subr.mxu0 0.0
    %382 = vmatpush1.msra.mxu0 0.0
    %383 = vmatprep.subr.mxu0 0.0
    %384 = vmatpush1.msra.mxu0 %v348
    %385 = vmatprep.subr.mxu0 0.0
    %386 = vmatpush2.msra.mxu0 0.0
    %387 = vmatprep.subr.mxu0 0.0
    %388 = vmatpush2.msra.mxu0 0.0
    %389 = vmatprep.subr.mxu0 0.0
    %390 = vmatpush2.msra.mxu0 0.0
    %391 = vmatprep.subr.mxu0 0.0
    %392 = vmatpush2.msra.mxu0 0.0
    %393 = vmatprep.subr.mxu0 0.0
    %394 = vmatpush2.msra.mxu0 0.0
    %395 = vmatprep.subr.mxu0 0.0
    %396 = vmatpush2.msra.mxu0 0.0
    %397 = vmatprep.subr.mxu0 0.0
    %398 = vmatpush2.msra.mxu0 0.0
    %399 = vmatprep.subr.mxu0 0.0
    %400 = vmatpush2.msra.mxu0 0.0
    %401 = vmatprep.subr.mxu0 0.0
    %402 = vmatpush2.msra.mxu0 0.0
    %403 = vmatprep.subr.mxu0 0.0
    %404 = vmatpush2.msra.mxu0 0.0
    %405 = vmatprep.subr.mxu0 0.0
    %406 = vmatpush2.msra.mxu0 0.0
    %407 = vmatprep.subr.mxu0 0.0
    %408 = vmatpush2.msra.mxu0 0.0
    %409 = vmatprep.subr.mxu0 0.0
    %410 = vmatpush2.msra.mxu0 0.0
    %411 = vmatprep.subr.mxu0 0.0
    %412 = vmatpush2.msra.mxu0 0.0
    %413 = vmatprep.subr.mxu0 0.0
    %414 = vmatpush2.msra.mxu0 0.0
    %415 = vmatprep.subr.mxu0 0.0
    %416 = vmatpush2.msra.mxu0 0.0
    %417 = vmatprep.mubr.f32.mxu0 0.0
    %418 = vmatmul.mubr.f32.gmra.mxu0 %v351
    %v419 = vpop.f32.mrf.mxu0
    %v420 = vadd.f32 0.0, %v419
    %v421 = vpop.f32.mrf.mxu0
    %422 = vdwg.mxu0
    %423 = vrot.lane.b32.xlu0 %v167, 64
    %v424 = vpop.permute.xlu0 %423
    %v427 = vsel %vm173, %v346, 0
    %429 = vmatprep.subr.mxu0 0.0
    %430 = vmatpush1.msra.mxu0 0.0
    %431 = vmatprep.subr.mxu0 0.0
    %432 = vmatpush1.msra.mxu0 0.0
    %433 = vmatprep.subr.mxu0 0.0
    %434 = vmatpush1.msra.mxu0 0.0
    %435 = vmatprep.subr.mxu0 0.0
    %436 = vmatpush1.msra.mxu0 0.0
    %437 = vmatprep.subr.mxu0 0.0
    %438 = vmatpush1.msra.mxu0 0.0
    %439 = vmatprep.subr.mxu0 0.0
    %440 = vmatpush1.msra.mxu0 0.0
    %441 = vmatprep.subr.mxu0 0.0
    %442 = vmatpush1.msra.mxu0 0.0
    %443 = vmatprep.subr.mxu0 0.0
    %444 = vmatpush1.msra.mxu0 0.0
    %445 = vmatprep.subr.mxu0 0.0
    %446 = vmatpush1.msra.mxu0 0.0
    %447 = vmatprep.subr.mxu0 0.0
    %448 = vmatpush1.msra.mxu0 0.0
    %449 = vmatprep.subr.mxu0 0.0
    %450 = vmatpush1.msra.mxu0 0.0
    %451 = vmatprep.subr.mxu0 0.0
    %452 = vmatpush1.msra.mxu0 0.0
    %453 = vmatprep.subr.mxu0 0.0
    %454 = vmatpush1.msra.mxu0 0.0
    %455 = vmatprep.subr.mxu0 0.0
    %456 = vmatpush1.msra.mxu0 0.0
    %457 = vmatprep.subr.mxu0 0.0
    %458 = vmatpush1.msra.mxu0 0.0
    %459 = vmatprep.subr.mxu0 0.0
    %460 = vmatpush1.msra.mxu0 %v424
    %461 = vmatprep.subr.mxu0 0.0
    %462 = vmatpush2.msra.mxu0 0.0
    %463 = vmatprep.subr.mxu0 0.0
    %464 = vmatpush2.msra.mxu0 0.0
    %465 = vmatprep.subr.mxu0 0.0
    %466 = vmatpush2.msra.mxu0 0.0
    %467 = vmatprep.subr.mxu0 0.0
    %468 = vmatpush2.msra.mxu0 0.0
    %469 = vmatprep.subr.mxu0 0.0
    %470 = vmatpush2.msra.mxu0 0.0
    %471 = vmatprep.subr.mxu0 0.0
    %472 = vmatpush2.msra.mxu0 0.0
    %473 = vmatprep.subr.mxu0 0.0
    %474 = vmatpush2.msra.mxu0 0.0
    %475 = vmatprep.subr.mxu0 0.0
    %476 = vmatpush2.msra.mxu0 0.0
    %477 = vmatprep.subr.mxu0 0.0
    %478 = vmatpush2.msra.mxu0 0.0
    %479 = vmatprep.subr.mxu0 0.0
    %480 = vmatpush2.msra.mxu0 0.0
    %481 = vmatprep.subr.mxu0 0.0
    %482 = vmatpush2.msra.mxu0 0.0
    %483 = vmatprep.subr.mxu0 0.0
    %484 = vmatpush2.msra.mxu0 0.0
    %485 = vmatprep.subr.mxu0 0.0
    %486 = vmatpush2.msra.mxu0 0.0
    %487 = vmatprep.subr.mxu0 0.0
    %488 = vmatpush2.msra.mxu0 0.0
    %489 = vmatprep.subr.mxu0 0.0
    %490 = vmatpush2.msra.mxu0 0.0
    %491 = vmatprep.subr.mxu0 0.0
    %492 = vmatpush2.msra.mxu0 0.0
    %493 = vmatprep.mubr.f32.mxu0 0.0
    %494 = vmatmul.mubr.f32.gmra.mxu0 %v427
    %v495 = vpop.f32.mrf.mxu0
    %v496 = vadd.f32 0.0, %v495
    %v497 = vpop.f32.mrf.mxu0
    %498 = vdwg.mxu0
    %499 = vrot.lane.b32.xlu0 %v162, 120
    %v500 = vpop.permute.xlu0 %499
    %501 = vrot.lane.b32.xlu0 %v162, 88
    %v502 = vpop.permute.xlu0 %501
    %v503 = vsel %vm173, %v500, 0
    %v505 = vsel %vm173, %v502, 0
    %507 = vmatprep.subr.mxu0 0.0
    %508 = vmatpush1.xpose.msra.mxu0 0.0
    %509 = vmatprep.subr.mxu0 0.0
    %510 = vmatpush1.xpose.msra.mxu0 0.0
    %511 = vmatprep.subr.mxu0 0.0
    %512 = vmatpush1.xpose.msra.mxu0 0.0
    %513 = vmatprep.subr.mxu0 0.0
    %514 = vmatpush1.xpose.msra.mxu0 0.0
    %515 = vmatprep.subr.mxu0 0.0
    %516 = vmatpush1.xpose.msra.mxu0 0.0
    %517 = vmatprep.subr.mxu0 0.0
    %518 = vmatpush1.xpose.msra.mxu0 0.0
    %519 = vmatprep.subr.mxu0 0.0
    %520 = vmatpush1.xpose.msra.mxu0 0.0
    %521 = vmatprep.subr.mxu0 0.0
    %522 = vmatpush1.xpose.msra.mxu0 0.0
    %523 = vmatprep.subr.mxu0 0.0
    %524 = vmatpush1.xpose.msra.mxu0 0.0
    %525 = vmatprep.subr.mxu0 0.0
    %526 = vmatpush1.xpose.msra.mxu0 0.0
    %527 = vmatprep.subr.mxu0 0.0
    %528 = vmatpush1.xpose.msra.mxu0 0.0
    %529 = vmatprep.subr.mxu0 0.0
    %530 = vmatpush1.xpose.msra.mxu0 0.0
    %531 = vmatprep.subr.mxu0 0.0
    %532 = vmatpush1.xpose.msra.mxu0 0.0
    %533 = vmatprep.subr.mxu0 0.0
    %534 = vmatpush1.xpose.msra.mxu0 0.0
    %535 = vmatprep.subr.mxu0 0.0
    %536 = vmatpush1.xpose.msra.mxu0 0.0
    %537 = vmatprep.subr.mxu0 0.0
    %538 = vmatpush1.xpose.msra.mxu0 %v505
    %539 = vmatprep.subr.mxu0 0.0
    %540 = vmatpush2.xpose.msra.mxu0 0.0
    %541 = vmatprep.subr.mxu0 0.0
    %542 = vmatpush2.xpose.msra.mxu0 0.0
    %543 = vmatprep.subr.mxu0 0.0
    %544 = vmatpush2.xpose.msra.mxu0 0.0
    %545 = vmatprep.subr.mxu0 0.0
    %546 = vmatpush2.xpose.msra.mxu0 0.0
    %547 = vmatprep.subr.mxu0 0.0
    %548 = vmatpush2.xpose.msra.mxu0 0.0
    %549 = vmatprep.subr.mxu0 0.0
    %550 = vmatpush2.xpose.msra.mxu0 0.0
    %551 = vmatprep.subr.mxu0 0.0
    %552 = vmatpush2.xpose.msra.mxu0 0.0
    %553 = vmatprep.subr.mxu0 0.0
    %554 = vmatpush2.xpose.msra.mxu0 0.0
    %555 = vmatprep.subr.mxu0 0.0
    %556 = vmatpush2.xpose.msra.mxu0 0.0
    %557 = vmatprep.subr.mxu0 0.0
    %558 = vmatpush2.xpose.msra.mxu0 0.0
    %559 = vmatprep.subr.mxu0 0.0
    %560 = vmatpush2.xpose.msra.mxu0 0.0
    %561 = vmatprep.subr.mxu0 0.0
    %562 = vmatpush2.xpose.msra.mxu0 0.0
    %563 = vmatprep.subr.mxu0 0.0
    %564 = vmatpush2.xpose.msra.mxu0 0.0
    %565 = vmatprep.subr.mxu0 0.0
    %566 = vmatpush2.xpose.msra.mxu0 0.0
    %567 = vmatprep.subr.mxu0 0.0
    %568 = vmatpush2.xpose.msra.mxu0 0.0
    %569 = vmatprep.subr.mxu0 0.0
    %570 = vmatpush2.xpose.msra.mxu0 0.0
    %571 = vmatprep.mubr.f32.mxu0 0.0
    %572 = vmatmul.mubr.f32.gmra.mxu0 %v503
    %v573 = vpop.f32.mrf.mxu0
    %v574 = vadd.f32 0.0, %v573
    %v575 = vpop.f32.mrf.mxu0
    %576 = vdwg.mxu0
    %577 = vrot.lane.b32.xlu0 %v167, 120
    %v578 = vpop.permute.xlu0 %577
    %579 = vrot.lane.b32.xlu0 %v167, 88
    %v580 = vpop.permute.xlu0 %579
    %v581 = vsel %vm173, %v578, 0
    %v583 = vsel %vm173, %v580, 0
    %585 = vmatprep.subr.mxu0 0.0
    %586 = vmatpush1.xpose.msra.mxu0 0.0
    %587 = vmatprep.subr.mxu0 0.0
    %588 = vmatpush1.xpose.msra.mxu0 0.0
    %589 = vmatprep.subr.mxu0 0.0
    %590 = vmatpush1.xpose.msra.mxu0 0.0
    %591 = vmatprep.subr.mxu0 0.0
    %592 = vmatpush1.xpose.msra.mxu0 0.0
    %593 = vmatprep.subr.mxu0 0.0
    %594 = vmatpush1.xpose.msra.mxu0 0.0
    %595 = vmatprep.subr.mxu0 0.0
    %596 = vmatpush1.xpose.msra.mxu0 0.0
    %597 = vmatprep.subr.mxu0 0.0
    %598 = vmatpush1.xpose.msra.mxu0 0.0
    %599 = vmatprep.subr.mxu0 0.0
    %600 = vmatpush1.xpose.msra.mxu0 0.0
    %601 = vmatprep.subr.mxu0 0.0
    %602 = vmatpush1.xpose.msra.mxu0 0.0
    %603 = vmatprep.subr.mxu0 0.0
    %604 = vmatpush1.xpose.msra.mxu0 0.0
    %605 = vmatprep.subr.mxu0 0.0
    %606 = vmatpush1.xpose.msra.mxu0 0.0
    %607 = vmatprep.subr.mxu0 0.0
    %608 = vmatpush1.xpose.msra.mxu0 0.0
    %609 = vmatprep.subr.mxu0 0.0
    %610 = vmatpush1.xpose.msra.mxu0 0.0
    %611 = vmatprep.subr.mxu0 0.0
    %612 = vmatpush1.xpose.msra.mxu0 0.0
    %613 = vmatprep.subr.mxu0 0.0
    %614 = vmatpush1.xpose.msra.mxu0 0.0
    %615 = vmatprep.subr.mxu0 0.0
    %616 = vmatpush1.xpose.msra.mxu0 %v583
    %617 = vmatprep.subr.mxu0 0.0
    %618 = vmatpush2.xpose.msra.mxu0 0.0
    %619 = vmatprep.subr.mxu0 0.0
    %620 = vmatpush2.xpose.msra.mxu0 0.0
    %621 = vmatprep.subr.mxu0 0.0
    %622 = vmatpush2.xpose.msra.mxu0 0.0
    %623 = vmatprep.subr.mxu0 0.0
    %624 = vmatpush2.xpose.msra.mxu0 0.0
    %625 = vmatprep.subr.mxu0 0.0
    %626 = vmatpush2.xpose.msra.mxu0 0.0
    %627 = vmatprep.subr.mxu0 0.0
    %628 = vmatpush2.xpose.msra.mxu0 0.0
    %629 = vmatprep.subr.mxu0 0.0
    %630 = vmatpush2.xpose.msra.mxu0 0.0
    %631 = vmatprep.subr.mxu0 0.0
    %632 = vmatpush2.xpose.msra.mxu0 0.0
    %633 = vmatprep.subr.mxu0 0.0
    %634 = vmatpush2.xpose.msra.mxu0 0.0
    %635 = vmatprep.subr.mxu0 0.0
    %636 = vmatpush2.xpose.msra.mxu0 0.0
    %637 = vmatprep.subr.mxu0 0.0
    %638 = vmatpush2.xpose.msra.mxu0 0.0
    %639 = vmatprep.subr.mxu0 0.0
    %640 = vmatpush2.xpose.msra.mxu0 0.0
    %641 = vmatprep.subr.mxu0 0.0
    %642 = vmatpush2.xpose.msra.mxu0 0.0
    %643 = vmatprep.subr.mxu0 0.0
    %644 = vmatpush2.xpose.msra.mxu0 0.0
    %645 = vmatprep.subr.mxu0 0.0
    %646 = vmatpush2.xpose.msra.mxu0 0.0
    %647 = vmatprep.subr.mxu0 0.0
    %648 = vmatpush2.xpose.msra.mxu0 0.0
    %649 = vmatprep.mubr.f32.mxu0 0.0
    %650 = vmatmul.mubr.f32.gmra.mxu0 %v581
    %v651 = vpop.f32.mrf.mxu0
    %v652 = vadd.f32 0.0, %v651
    %v653 = vpop.f32.mrf.mxu0
    %654 = vdwg.mxu0
    %v655 = vsel %vm173, %v574, -inf
    %656 = vmax.xlane.f32.xlu0 %v655
    %v657 = vpop.xlane.xlu0 %656
    %v658 = vsel %vm173, %v652, -inf
    %659 = vmax.xlane.f32.xlu0 %v658
    %v660 = vpop.xlane.xlu0 %659
    %v661 = vsub.f32 %v574, %v657
    %v662 = vsub.f32 %v652, %v660
    %v663 = vmul.f32 %v661, 1.442695
    %v664 = vpow.pop %v663
    %v665 = vmul.f32 %v662, 1.442695
    %v666 = vpow.pop %v665
    %v667 = vsel %vm173, %v664, 0.0
    %668 = vadd.xlane.f32.xlu0 %v667
    %v669 = vpop.xlane.xlu0 %668
    %v670 = vsel %vm173, %v666, 0.0
    %671 = vadd.xlane.f32.xlu0 %v670
    %v672 = vpop.xlane.xlu0 %671
    %v673 = vrcp.pop %v669
    %v674 = vrcp.pop %v672
    %v675 = vmul.f32 %v664, %v673
    %v676 = vmul.f32 %v666, %v674
    %677 = vrot.lane.b32.xlu0 %v162, 56
    %v678 = vpop.permute.xlu0 %677
    %v681 = vsel %vm173, %v675, 0
    %683 = vmatprep.subr.mxu0 0.0
    %684 = vmatpush1.msra.mxu0 0.0
    %685 = vmatprep.subr.mxu0 0.0
    %686 = vmatpush1.msra.mxu0 0.0
    %687 = vmatprep.subr.mxu0 0.0
    %688 = vmatpush1.msra.mxu0 0.0
    %689 = vmatprep.subr.mxu0 0.0
    %690 = vmatpush1.msra.mxu0 0.0
    %691 = vmatprep.subr.mxu0 0.0
    %692 = vmatpush1.msra.mxu0 0.0
    %693 = vmatprep.subr.mxu0 0.0
    %694 = vmatpush1.msra.mxu0 0.0
    %695 = vmatprep.subr.mxu0 0.0
    %696 = vmatpush1.msra.mxu0 0.0
    %697 = vmatprep.subr.mxu0 0.0
    %698 = vmatpush1.msra.mxu0 0.0
    %699 = vmatprep.subr.mxu0 0.0
    %700 = vmatpush1.msra.mxu0 0.0
    %701 = vmatprep.subr.mxu0 0.0
    %702 = vmatpush1.msra.mxu0 0.0
    %703 = vmatprep.subr.mxu0 0.0
    %704 = vmatpush1.msra.mxu0 0.0
    %705 = vmatprep.subr.mxu0 0.0
    %706 = vmatpush1.msra.mxu0 0.0
    %707 = vmatprep.subr.mxu0 0.0
    %708 = vmatpush1.msra.mxu0 0.0
    %709 = vmatprep.subr.mxu0 0.0
    %710 = vmatpush1.msra.mxu0 0.0
    %711 = vmatprep.subr.mxu0 0.0
    %712 = vmatpush1.msra.mxu0 0.0
    %713 = vmatprep.subr.mxu0 0.0
    %714 = vmatpush1.msra.mxu0 %v678
    %715 = vmatprep.subr.mxu0 0.0
    %716 = vmatpush2.msra.mxu0 0.0
    %717 = vmatprep.subr.mxu0 0.0
    %718 = vmatpush2.msra.mxu0 0.0
    %719 = vmatprep.subr.mxu0 0.0
    %720 = vmatpush2.msra.mxu0 0.0
    %721 = vmatprep.subr.mxu0 0.0
    %722 = vmatpush2.msra.mxu0 0.0
    %723 = vmatprep.subr.mxu0 0.0
    %724 = vmatpush2.msra.mxu0 0.0
    %725 = vmatprep.subr.mxu0 0.0
    %726 = vmatpush2.msra.mxu0 0.0
    %727 = vmatprep.subr.mxu0 0.0
    %728 = vmatpush2.msra.mxu0 0.0
    %729 = vmatprep.subr.mxu0 0.0
    %730 = vmatpush2.msra.mxu0 0.0
    %731 = vmatprep.subr.mxu0 0.0
    %732 = vmatpush2.msra.mxu0 0.0
    %733 = vmatprep.subr.mxu0 0.0
    %734 = vmatpush2.msra.mxu0 0.0
    %735 = vmatprep.subr.mxu0 0.0
    %736 = vmatpush2.msra.mxu0 0.0
    %737 = vmatprep.subr.mxu0 0.0
    %738 = vmatpush2.msra.mxu0 0.0
    %739 = vmatprep.subr.mxu0 0.0
    %740 = vmatpush2.msra.mxu0 0.0
    %741 = vmatprep.subr.mxu0 0.0
    %742 = vmatpush2.msra.mxu0 0.0
    %743 = vmatprep.subr.mxu0 0.0
    %744 = vmatpush2.msra.mxu0 0.0
    %745 = vmatprep.subr.mxu0 0.0
    %746 = vmatpush2.msra.mxu0 0.0
    %747 = vmatprep.mubr.f32.mxu0 0.0
    %748 = vmatmul.mubr.f32.gmra.mxu0 %v681
    %v749 = vpop.f32.mrf.mxu0
    %v750 = vadd.f32 0.0, %v749
    %v751 = vpop.f32.mrf.mxu0
    %752 = vdwg.mxu0
    %753 = vrot.lane.b32.xlu0 %v167, 56
    %v754 = vpop.permute.xlu0 %753
    %v757 = vsel %vm173, %v676, 0
    %759 = vmatprep.subr.mxu0 0.0
    %760 = vmatpush1.msra.mxu0 0.0
    %761 = vmatprep.subr.mxu0 0.0
    %762 = vmatpush1.msra.mxu0 0.0
    %763 = vmatprep.subr.mxu0 0.0
    %764 = vmatpush1.msra.mxu0 0.0
    %765 = vmatprep.subr.mxu0 0.0
    %766 = vmatpush1.msra.mxu0 0.0
    %767 = vmatprep.subr.mxu0 0.0
    %768 = vmatpush1.msra.mxu0 0.0
    %769 = vmatprep.subr.mxu0 0.0
    %770 = vmatpush1.msra.mxu0 0.0
    %771 = vmatprep.subr.mxu0 0.0
    %772 = vmatpush1.msra.mxu0 0.0
    %773 = vmatprep.subr.mxu0 0.0
    %774 = vmatpush1.msra.mxu0 0.0
    %775 = vmatprep.subr.mxu0 0.0
    %776 = vmatpush1.msra.mxu0 0.0
    %777 = vmatprep.subr.mxu0 0.0
    %778 = vmatpush1.msra.mxu0 0.0
    %779 = vmatprep.subr.mxu0 0.0
    %780 = vmatpush1.msra.mxu0 0.0
    %781 = vmatprep.subr.mxu0 0.0
    %782 = vmatpush1.msra.mxu0 0.0
    %783 = vmatprep.subr.mxu0 0.0
    %784 = vmatpush1.msra.mxu0 0.0
    %785 = vmatprep.subr.mxu0 0.0
    %786 = vmatpush1.msra.mxu0 0.0
    %787 = vmatprep.subr.mxu0 0.0
    %788 = vmatpush1.msra.mxu0 0.0
    %789 = vmatprep.subr.mxu0 0.0
    %790 = vmatpush1.msra.mxu0 %v754
    %791 = vmatprep.subr.mxu0 0.0
    %792 = vmatpush2.msra.mxu0 0.0
    %793 = vmatprep.subr.mxu0 0.0
    %794 = vmatpush2.msra.mxu0 0.0
    %795 = vmatprep.subr.mxu0 0.0
    %796 = vmatpush2.msra.mxu0 0.0
    %797 = vmatprep.subr.mxu0 0.0
    %798 = vmatpush2.msra.mxu0 0.0
    %799 = vmatprep.subr.mxu0 0.0
    %800 = vmatpush2.msra.mxu0 0.0
    %801 = vmatprep.subr.mxu0 0.0
    %802 = vmatpush2.msra.mxu0 0.0
    %803 = vmatprep.subr.mxu0 0.0
    %804 = vmatpush2.msra.mxu0 0.0
    %805 = vmatprep.subr.mxu0 0.0
    %806 = vmatpush2.msra.mxu0 0.0
    %807 = vmatprep.subr.mxu0 0.0
    %808 = vmatpush2.msra.mxu0 0.0
    %809 = vmatprep.subr.mxu0 0.0
    %810 = vmatpush2.msra.mxu0 0.0
    %811 = vmatprep.subr.mxu0 0.0
    %812 = vmatpush2.msra.mxu0 0.0
    %813 = vmatprep.subr.mxu0 0.0
    %814 = vmatpush2.msra.mxu0 0.0
    %815 = vmatprep.subr.mxu0 0.0
    %816 = vmatpush2.msra.mxu0 0.0
    %817 = vmatprep.subr.mxu0 0.0
    %818 = vmatpush2.msra.mxu0 0.0
    %819 = vmatprep.subr.mxu0 0.0
    %820 = vmatpush2.msra.mxu0 0.0
    %821 = vmatprep.subr.mxu0 0.0
    %822 = vmatpush2.msra.mxu0 0.0
    %823 = vmatprep.mubr.f32.mxu0 0.0
    %824 = vmatmul.mubr.f32.gmra.mxu0 %v757
    %v825 = vpop.f32.mrf.mxu0
    %v826 = vadd.f32 0.0, %v825
    %v827 = vpop.f32.mrf.mxu0
    %828 = vdwg.mxu0
    %829 = vrot.lane.b32.xlu0 %v162, 112
    %v830 = vpop.permute.xlu0 %829
    %831 = vrot.lane.b32.xlu0 %v162, 80
    %v832 = vpop.permute.xlu0 %831
    %v833 = vsel %vm173, %v830, 0
    %v835 = vsel %vm173, %v832, 0
    %837 = vmatprep.subr.mxu0 0.0
    %838 = vmatpush1.xpose.msra.mxu0 0.0
    %839 = vmatprep.subr.mxu0 0.0
    %840 = vmatpush1.xpose.msra.mxu0 0.0
    %841 = vmatprep.subr.mxu0 0.0
    %842 = vmatpush1.xpose.msra.mxu0 0.0
    %843 = vmatprep.subr.mxu0 0.0
    %844 = vmatpush1.xpose.msra.mxu0 0.0
    %845 = vmatprep.subr.mxu0 0.0
    %846 = vmatpush1.xpose.msra.mxu0 0.0
    %847 = vmatprep.subr.mxu0 0.0
    %848 = vmatpush1.xpose.msra.mxu0 0.0
    %849 = vmatprep.subr.mxu0 0.0
    %850 = vmatpush1.xpose.msra.mxu0 0.0
    %851 = vmatprep.subr.mxu0 0.0
    %852 = vmatpush1.xpose.msra.mxu0 0.0
    %853 = vmatprep.subr.mxu0 0.0
    %854 = vmatpush1.xpose.msra.mxu0 0.0
    %855 = vmatprep.subr.mxu0 0.0
    %856 = vmatpush1.xpose.msra.mxu0 0.0
    %857 = vmatprep.subr.mxu0 0.0
    %858 = vmatpush1.xpose.msra.mxu0 0.0
    %859 = vmatprep.subr.mxu0 0.0
    %860 = vmatpush1.xpose.msra.mxu0 0.0
    %861 = vmatprep.subr.mxu0 0.0
    %862 = vmatpush1.xpose.msra.mxu0 0.0
    %863 = vmatprep.subr.mxu0 0.0
    %864 = vmatpush1.xpose.msra.mxu0 0.0
    %865 = vmatprep.subr.mxu0 0.0
    %866 = vmatpush1.xpose.msra.mxu0 0.0
    %867 = vmatprep.subr.mxu0 0.0
    %868 = vmatpush1.xpose.msra.mxu0 %v835
    %869 = vmatprep.subr.mxu0 0.0
    %870 = vmatpush2.xpose.msra.mxu0 0.0
    %871 = vmatprep.subr.mxu0 0.0
    %872 = vmatpush2.xpose.msra.mxu0 0.0
    %873 = vmatprep.subr.mxu0 0.0
    %874 = vmatpush2.xpose.msra.mxu0 0.0
    %875 = vmatprep.subr.mxu0 0.0
    %876 = vmatpush2.xpose.msra.mxu0 0.0
    %877 = vmatprep.subr.mxu0 0.0
    %878 = vmatpush2.xpose.msra.mxu0 0.0
    %879 = vmatprep.subr.mxu0 0.0
    %880 = vmatpush2.xpose.msra.mxu0 0.0
    %881 = vmatprep.subr.mxu0 0.0
    %882 = vmatpush2.xpose.msra.mxu0 0.0
    %883 = vmatprep.subr.mxu0 0.0
    %884 = vmatpush2.xpose.msra.mxu0 0.0
    %885 = vmatprep.subr.mxu0 0.0
    %886 = vmatpush2.xpose.msra.mxu0 0.0
    %887 = vmatprep.subr.mxu0 0.0
    %888 = vmatpush2.xpose.msra.mxu0 0.0
    %889 = vmatprep.subr.mxu0 0.0
    %890 = vmatpush2.xpose.msra.mxu0 0.0
    %891 = vmatprep.subr.mxu0 0.0
    %892 = vmatpush2.xpose.msra.mxu0 0.0
    %893 = vmatprep.subr.mxu0 0.0
    %894 = vmatpush2.xpose.msra.mxu0 0.0
    %895 = vmatprep.subr.mxu0 0.0
    %896 = vmatpush2.xpose.msra.mxu0 0.0
    %897 = vmatprep.subr.mxu0 0.0
    %898 = vmatpush2.xpose.msra.mxu0 0.0
    %899 = vmatprep.subr.mxu0 0.0
    %900 = vmatpush2.xpose.msra.mxu0 0.0
    %901 = vmatprep.mubr.f32.mxu0 0.0
    %902 = vmatmul.mubr.f32.gmra.mxu0 %v833
    %v903 = vpop.f32.mrf.mxu0
    %v904 = vadd.f32 0.0, %v903
    %v905 = vpop.f32.mrf.mxu0
    %906 = vdwg.mxu0
    %907 = vrot.lane.b32.xlu0 %v167, 112
    %v908 = vpop.permute.xlu0 %907
    %909 = vrot.lane.b32.xlu0 %v167, 80
    %v910 = vpop.permute.xlu0 %909
    %v911 = vsel %vm173, %v908, 0
    %v913 = vsel %vm173, %v910, 0
    %915 = vmatprep.subr.mxu0 0.0
    %916 = vmatpush1.xpose.msra.mxu0 0.0
    %917 = vmatprep.subr.mxu0 0.0
    %918 = vmatpush1.xpose.msra.mxu0 0.0
    %919 = vmatprep.subr.mxu0 0.0
    %920 = vmatpush1.xpose.msra.mxu0 0.0
    %921 = vmatprep.subr.mxu0 0.0
    %922 = vmatpush1.xpose.msra.mxu0 0.0
    %923 = vmatprep.subr.mxu0 0.0
    %924 = vmatpush1.xpose.msra.mxu0 0.0
    %925 = vmatprep.subr.mxu0 0.0
    %926 = vmatpush1.xpose.msra.mxu0 0.0
    %927 = vmatprep.subr.mxu0 0.0
    %928 = vmatpush1.xpose.msra.mxu0 0.0
    %929 = vmatprep.subr.mxu0 0.0
    %930 = vmatpush1.xpose.msra.mxu0 0.0
    %931 = vmatprep.subr.mxu0 0.0
    %932 = vmatpush1.xpose.msra.mxu0 0.0
    %933 = vmatprep.subr.mxu0 0.0
    %934 = vmatpush1.xpose.msra.mxu0 0.0
    %935 = vmatprep.subr.mxu0 0.0
    %936 = vmatpush1.xpose.msra.mxu0 0.0
    %937 = vmatprep.subr.mxu0 0.0
    %938 = vmatpush1.xpose.msra.mxu0 0.0
    %939 = vmatprep.subr.mxu0 0.0
    %940 = vmatpush1.xpose.msra.mxu0 0.0
    %941 = vmatprep.subr.mxu0 0.0
    %942 = vmatpush1.xpose.msra.mxu0 0.0
    %943 = vmatprep.subr.mxu0 0.0
    %944 = vmatpush1.xpose.msra.mxu0 0.0
    %945 = vmatprep.subr.mxu0 0.0
    %946 = vmatpush1.xpose.msra.mxu0 %v913
    %947 = vmatprep.subr.mxu0 0.0
    %948 = vmatpush2.xpose.msra.mxu0 0.0
    %949 = vmatprep.subr.mxu0 0.0
    %950 = vmatpush2.xpose.msra.mxu0 0.0
    %951 = vmatprep.subr.mxu0 0.0
    %952 = vmatpush2.xpose.msra.mxu0 0.0
    %953 = vmatprep.subr.mxu0 0.0
    %954 = vmatpush2.xpose.msra.mxu0 0.0
    %955 = vmatprep.subr.mxu0 0.0
    %956 = vmatpush2.xpose.msra.mxu0 0.0
    %957 = vmatprep.subr.mxu0 0.0
    %958 = vmatpush2.xpose.msra.mxu0 0.0
    %959 = vmatprep.subr.mxu0 0.0
    %960 = vmatpush2.xpose.msra.mxu0 0.0
    %961 = vmatprep.subr.mxu0 0.0
    %962 = vmatpush2.xpose.msra.mxu0 0.0
    %963 = vmatprep.subr.mxu0 0.0
    %964 = vmatpush2.xpose.msra.mxu0 0.0
    %965 = vmatprep.subr.mxu0 0.0
    %966 = vmatpush2.xpose.msra.mxu0 0.0
    %967 = vmatprep.subr.mxu0 0.0
    %968 = vmatpush2.xpose.msra.mxu0 0.0
    %969 = vmatprep.subr.mxu0 0.0
    %970 = vmatpush2.xpose.msra.mxu0 0.0
    %971 = vmatprep.subr.mxu0 0.0
    %972 = vmatpush2.xpose.msra.mxu0 0.0
    %973 = vmatprep.subr.mxu0 0.0
    %974 = vmatpush2.xpose.msra.mxu0 0.0
    %975 = vmatprep.subr.mxu0 0.0
    %976 = vmatpush2.xpose.msra.mxu0 0.0
    %977 = vmatprep.subr.mxu0 0.0
    %978 = vmatpush2.xpose.msra.mxu0 0.0
    %979 = vmatprep.mubr.f32.mxu0 0.0
    %980 = vmatmul.mubr.f32.gmra.mxu0 %v911
    %v981 = vpop.f32.mrf.mxu0
    %v982 = vadd.f32 0.0, %v981
    %v983 = vpop.f32.mrf.mxu0
    %984 = vdwg.mxu0
    %v985 = vsel %vm173, %v904, -inf
    %986 = vmax.xlane.f32.xlu0 %v985
    %v987 = vpop.xlane.xlu0 %986
    %v988 = vsel %vm173, %v982, -inf
    %989 = vmax.xlane.f32.xlu0 %v988
    %v990 = vpop.xlane.xlu0 %989
    %v991 = vsub.f32 %v904, %v987
    %v992 = vsub.f32 %v982, %v990
    %v993 = vmul.f32 %v991, 1.442695
    %v994 = vpow.pop %v993
    %v995 = vmul.f32 %v992, 1.442695
    %v996 = vpow.pop %v995
    %v997 = vsel %vm173, %v994, 0.0
    %998 = vadd.xlane.f32.xlu0 %v997
    %v999 = vpop.xlane.xlu0 %998
    %v1000 = vsel %vm173, %v996, 0.0
    %1001 = vadd.xlane.f32.xlu0 %v1000
    %v1002 = vpop.xlane.xlu0 %1001
    %v1003 = vrcp.pop %v999
    %v1004 = vrcp.pop %v1002
    %v1005 = vmul.f32 %v994, %v1003
    %v1006 = vmul.f32 %v996, %v1004
    %1007 = vrot.lane.b32.xlu0 %v162, 48
    %v1008 = vpop.permute.xlu0 %1007
    %v1011 = vsel %vm173, %v1005, 0
    %1013 = vmatprep.subr.mxu0 0.0
    %1014 = vmatpush1.msra.mxu0 0.0
    %1015 = vmatprep.subr.mxu0 0.0
    %1016 = vmatpush1.msra.mxu0 0.0
    %1017 = vmatprep.subr.mxu0 0.0
    %1018 = vmatpush1.msra.mxu0 0.0
    %1019 = vmatprep.subr.mxu0 0.0
    %1020 = vmatpush1.msra.mxu0 0.0
    %1021 = vmatprep.subr.mxu0 0.0
    %1022 = vmatpush1.msra.mxu0 0.0
    %1023 = vmatprep.subr.mxu0 0.0
    %1024 = vmatpush1.msra.mxu0 0.0
    %1025 = vmatprep.subr.mxu0 0.0
    %1026 = vmatpush1.msra.mxu0 0.0
    %1027 = vmatprep.subr.mxu0 0.0
    %1028 = vmatpush1.msra.mxu0 0.0
    %1029 = vmatprep.subr.mxu0 0.0
    %1030 = vmatpush1.msra.mxu0 0.0
    %1031 = vmatprep.subr.mxu0 0.0
    %1032 = vmatpush1.msra.mxu0 0.0
    %1033 = vmatprep.subr.mxu0 0.0
    %1034 = vmatpush1.msra.mxu0 0.0
    %1035 = vmatprep.subr.mxu0 0.0
    %1036 = vmatpush1.msra.mxu0 0.0
    %1037 = vmatprep.subr.mxu0 0.0
    %1038 = vmatpush1.msra.mxu0 0.0
    %1039 = vmatprep.subr.mxu0 0.0
    %1040 = vmatpush1.msra.mxu0 0.0
    %1041 = vmatprep.subr.mxu0 0.0
    %1042 = vmatpush1.msra.mxu0 0.0
    %1043 = vmatprep.subr.mxu0 0.0
    %1044 = vmatpush1.msra.mxu0 %v1008
    %1045 = vmatprep.subr.mxu0 0.0
    %1046 = vmatpush2.msra.mxu0 0.0
    %1047 = vmatprep.subr.mxu0 0.0
    %1048 = vmatpush2.msra.mxu0 0.0
    %1049 = vmatprep.subr.mxu0 0.0
    %1050 = vmatpush2.msra.mxu0 0.0
    %1051 = vmatprep.subr.mxu0 0.0
    %1052 = vmatpush2.msra.mxu0 0.0
    %1053 = vmatprep.subr.mxu0 0.0
    %1054 = vmatpush2.msra.mxu0 0.0
    %1055 = vmatprep.subr.mxu0 0.0
    %1056 = vmatpush2.msra.mxu0 0.0
    %1057 = vmatprep.subr.mxu0 0.0
    %1058 = vmatpush2.msra.mxu0 0.0
    %1059 = vmatprep.subr.mxu0 0.0
    %1060 = vmatpush2.msra.mxu0 0.0
    %1061 = vmatprep.subr.mxu0 0.0
    %1062 = vmatpush2.msra.mxu0 0.0
    %1063 = vmatprep.subr.mxu0 0.0
    %1064 = vmatpush2.msra.mxu0 0.0
    %1065 = vmatprep.subr.mxu0 0.0
    %1066 = vmatpush2.msra.mxu0 0.0
    %1067 = vmatprep.subr.mxu0 0.0
    %1068 = vmatpush2.msra.mxu0 0.0
    %1069 = vmatprep.subr.mxu0 0.0
    %1070 = vmatpush2.msra.mxu0 0.0
    %1071 = vmatprep.subr.mxu0 0.0
    %1072 = vmatpush2.msra.mxu0 0.0
    %1073 = vmatprep.subr.mxu0 0.0
    %1074 = vmatpush2.msra.mxu0 0.0
    %1075 = vmatprep.subr.mxu0 0.0
    %1076 = vmatpush2.msra.mxu0 0.0
    %1077 = vmatprep.mubr.f32.mxu0 0.0
    %1078 = vmatmul.mubr.f32.gmra.mxu0 %v1011
    %v1079 = vpop.f32.mrf.mxu0
    %v1080 = vadd.f32 0.0, %v1079
    %v1081 = vpop.f32.mrf.mxu0
    %1082 = vdwg.mxu0
    %1083 = vrot.lane.b32.xlu0 %v167, 48
    %v1084 = vpop.permute.xlu0 %1083
    %v1087 = vsel %vm173, %v1006, 0
    %1089 = vmatprep.subr.mxu0 0.0
    %1090 = vmatpush1.msra.mxu0 0.0
    %1091 = vmatprep.subr.mxu0 0.0
    %1092 = vmatpush1.msra.mxu0 0.0
    %1093 = vmatprep.subr.mxu0 0.0
    %1094 = vmatpush1.msra.mxu0 0.0
    %1095 = vmatprep.subr.mxu0 0.0
    %1096 = vmatpush1.msra.mxu0 0.0
    %1097 = vmatprep.subr.mxu0 0.0
    %1098 = vmatpush1.msra.mxu0 0.0
    %1099 = vmatprep.subr.mxu0 0.0
    %1100 = vmatpush1.msra.mxu0 0.0
    %1101 = vmatprep.subr.mxu0 0.0
    %1102 = vmatpush1.msra.mxu0 0.0
    %1103 = vmatprep.subr.mxu0 0.0
    %1104 = vmatpush1.msra.mxu0 0.0
    %1105 = vmatprep.subr.mxu0 0.0
    %1106 = vmatpush1.msra.mxu0 0.0
    %1107 = vmatprep.subr.mxu0 0.0
    %1108 = vmatpush1.msra.mxu0 0.0
    %1109 = vmatprep.subr.mxu0 0.0
    %1110 = vmatpush1.msra.mxu0 0.0
    %1111 = vmatprep.subr.mxu0 0.0
    %1112 = vmatpush1.msra.mxu0 0.0
    %1113 = vmatprep.subr.mxu0 0.0
    %1114 = vmatpush1.msra.mxu0 0.0
    %1115 = vmatprep.subr.mxu0 0.0
    %1116 = vmatpush1.msra.mxu0 0.0
    %1117 = vmatprep.subr.mxu0 0.0
    %1118 = vmatpush1.msra.mxu0 0.0
    %1119 = vmatprep.subr.mxu0 0.0
    %1120 = vmatpush1.msra.mxu0 %v1084
    %1121 = vmatprep.subr.mxu0 0.0
    %1122 = vmatpush2.msra.mxu0 0.0
    %1123 = vmatprep.subr.mxu0 0.0
    %1124 = vmatpush2.msra.mxu0 0.0
    %1125 = vmatprep.subr.mxu0 0.0
    %1126 = vmatpush2.msra.mxu0 0.0
    %1127 = vmatprep.subr.mxu0 0.0
    %1128 = vmatpush2.msra.mxu0 0.0
    %1129 = vmatprep.subr.mxu0 0.0
    %1130 = vmatpush2.msra.mxu0 0.0
    %1131 = vmatprep.subr.mxu0 0.0
    %1132 = vmatpush2.msra.mxu0 0.0
    %1133 = vmatprep.subr.mxu0 0.0
    %1134 = vmatpush2.msra.mxu0 0.0
    %1135 = vmatprep.subr.mxu0 0.0
    %1136 = vmatpush2.msra.mxu0 0.0
    %1137 = vmatprep.subr.mxu0 0.0
    %1138 = vmatpush2.msra.mxu0 0.0
    %1139 = vmatprep.subr.mxu0 0.0
    %1140 = vmatpush2.msra.mxu0 0.0
    %1141 = vmatprep.subr.mxu0 0.0
    %1142 = vmatpush2.msra.mxu0 0.0
    %1143 = vmatprep.subr.mxu0 0.0
    %1144 = vmatpush2.msra.mxu0 0.0
    %1145 = vmatprep.subr.mxu0 0.0
    %1146 = vmatpush2.msra.mxu0 0.0
    %1147 = vmatprep.subr.mxu0 0.0
    %1148 = vmatpush2.msra.mxu0 0.0
    %1149 = vmatprep.subr.mxu0 0.0
    %1150 = vmatpush2.msra.mxu0 0.0
    %1151 = vmatprep.subr.mxu0 0.0
    %1152 = vmatpush2.msra.mxu0 0.0
    %1153 = vmatprep.mubr.f32.mxu0 0.0
    %1154 = vmatmul.mubr.f32.gmra.mxu0 %v1087
    %v1155 = vpop.f32.mrf.mxu0
    %v1156 = vadd.f32 0.0, %v1155
    %v1157 = vpop.f32.mrf.mxu0
    %1158 = vdwg.mxu0
    %1159 = vrot.lane.b32.xlu0 %v162, 104
    %v1160 = vpop.permute.xlu0 %1159
    %1161 = vrot.lane.b32.xlu0 %v162, 72
    %v1162 = vpop.permute.xlu0 %1161
    %v1163 = vsel %vm173, %v1160, 0
    %v1165 = vsel %vm173, %v1162, 0
    %1167 = vmatprep.subr.mxu0 0.0
    %1168 = vmatpush1.xpose.msra.mxu0 0.0
    %1169 = vmatprep.subr.mxu0 0.0
    %1170 = vmatpush1.xpose.msra.mxu0 0.0
    %1171 = vmatprep.subr.mxu0 0.0
    %1172 = vmatpush1.xpose.msra.mxu0 0.0
    %1173 = vmatprep.subr.mxu0 0.0
    %1174 = vmatpush1.xpose.msra.mxu0 0.0
    %1175 = vmatprep.subr.mxu0 0.0
    %1176 = vmatpush1.xpose.msra.mxu0 0.0
    %1177 = vmatprep.subr.mxu0 0.0
    %1178 = vmatpush1.xpose.msra.mxu0 0.0
    %1179 = vmatprep.subr.mxu0 0.0
    %1180 = vmatpush1.xpose.msra.mxu0 0.0
    %1181 = vmatprep.subr.mxu0 0.0
    %1182 = vmatpush1.xpose.msra.mxu0 0.0
    %1183 = vmatprep.subr.mxu0 0.0
    %1184 = vmatpush1.xpose.msra.mxu0 0.0
    %1185 = vmatprep.subr.mxu0 0.0
    %1186 = vmatpush1.xpose.msra.mxu0 0.0
    %1187 = vmatprep.subr.mxu0 0.0
    %1188 = vmatpush1.xpose.msra.mxu0 0.0
    %1189 = vmatprep.subr.mxu0 0.0
    %1190 = vmatpush1.xpose.msra.mxu0 0.0
    %1191 = vmatprep.subr.mxu0 0.0
    %1192 = vmatpush1.xpose.msra.mxu0 0.0
    %1193 = vmatprep.subr.mxu0 0.0
    %1194 = vmatpush1.xpose.msra.mxu0 0.0
    %1195 = vmatprep.subr.mxu0 0.0
    %1196 = vmatpush1.xpose.msra.mxu0 0.0
    %1197 = vmatprep.subr.mxu0 0.0
    %1198 = vmatpush1.xpose.msra.mxu0 %v1165
    %1199 = vmatprep.subr.mxu0 0.0
    %1200 = vmatpush2.xpose.msra.mxu0 0.0
    %1201 = vmatprep.subr.mxu0 0.0
    %1202 = vmatpush2.xpose.msra.mxu0 0.0
    %1203 = vmatprep.subr.mxu0 0.0
    %1204 = vmatpush2.xpose.msra.mxu0 0.0
    %1205 = vmatprep.subr.mxu0 0.0
    %1206 = vmatpush2.xpose.msra.mxu0 0.0
    %1207 = vmatprep.subr.mxu0 0.0
    %1208 = vmatpush2.xpose.msra.mxu0 0.0
    %1209 = vmatprep.subr.mxu0 0.0
    %1210 = vmatpush2.xpose.msra.mxu0 0.0
    %1211 = vmatprep.subr.mxu0 0.0
    %1212 = vmatpush2.xpose.msra.mxu0 0.0
    %1213 = vmatprep.subr.mxu0 0.0
    %1214 = vmatpush2.xpose.msra.mxu0 0.0
    %1215 = vmatprep.subr.mxu0 0.0
    %1216 = vmatpush2.xpose.msra.mxu0 0.0
    %1217 = vmatprep.subr.mxu0 0.0
    %1218 = vmatpush2.xpose.msra.mxu0 0.0
    %1219 = vmatprep.subr.mxu0 0.0
    %1220 = vmatpush2.xpose.msra.mxu0 0.0
    %1221 = vmatprep.subr.mxu0 0.0
    %1222 = vmatpush2.xpose.msra.mxu0 0.0
    %1223 = vmatprep.subr.mxu0 0.0
    %1224 = vmatpush2.xpose.msra.mxu0 0.0
    %1225 = vmatprep.subr.mxu0 0.0
    %1226 = vmatpush2.xpose.msra.mxu0 0.0
    %1227 = vmatprep.subr.mxu0 0.0
    %1228 = vmatpush2.xpose.msra.mxu0 0.0
    %1229 = vmatprep.subr.mxu0 0.0
    %1230 = vmatpush2.xpose.msra.mxu0 0.0
    %1231 = vmatprep.mubr.f32.mxu0 0.0
    %1232 = vmatmul.mubr.f32.gmra.mxu0 %v1163
    %v1233 = vpop.f32.mrf.mxu0
    %v1234 = vadd.f32 0.0, %v1233
    %v1235 = vpop.f32.mrf.mxu0
    %1236 = vdwg.mxu0
    %1237 = vrot.lane.b32.xlu0 %v167, 104
    %v1238 = vpop.permute.xlu0 %1237
    %1239 = vrot.lane.b32.xlu0 %v167, 72
    %v1240 = vpop.permute.xlu0 %1239
    %v1241 = vsel %vm173, %v1238, 0
    %v1243 = vsel %vm173, %v1240, 0
    %1245 = vmatprep.subr.mxu0 0.0
    %1246 = vmatpush1.xpose.msra.mxu0 0.0
    %1247 = vmatprep.subr.mxu0 0.0
    %1248 = vmatpush1.xpose.msra.mxu0 0.0
    %1249 = vmatprep.subr.mxu0 0.0
    %1250 = vmatpush1.xpose.msra.mxu0 0.0
    %1251 = vmatprep.subr.mxu0 0.0
    %1252 = vmatpush1.xpose.msra.mxu0 0.0
    %1253 = vmatprep.subr.mxu0 0.0
    %1254 = vmatpush1.xpose.msra.mxu0 0.0
    %1255 = vmatprep.subr.mxu0 0.0
    %1256 = vmatpush1.xpose.msra.mxu0 0.0
    %1257 = vmatprep.subr.mxu0 0.0
    %1258 = vmatpush1.xpose.msra.mxu0 0.0
    %1259 = vmatprep.subr.mxu0 0.0
    %1260 = vmatpush1.xpose.msra.mxu0 0.0
    %1261 = vmatprep.subr.mxu0 0.0
    %1262 = vmatpush1.xpose.msra.mxu0 0.0
    %1263 = vmatprep.subr.mxu0 0.0
    %1264 = vmatpush1.xpose.msra.mxu0 0.0
    %1265 = vmatprep.subr.mxu0 0.0
    %1266 = vmatpush1.xpose.msra.mxu0 0.0
    %1267 = vmatprep.subr.mxu0 0.0
    %1268 = vmatpush1.xpose.msra.mxu0 0.0
    %1269 = vmatprep.subr.mxu0 0.0
    %1270 = vmatpush1.xpose.msra.mxu0 0.0
    %1271 = vmatprep.subr.mxu0 0.0
    %1272 = vmatpush1.xpose.msra.mxu0 0.0
    %1273 = vmatprep.subr.mxu0 0.0
    %1274 = vmatpush1.xpose.msra.mxu0 0.0
    %1275 = vmatprep.subr.mxu0 0.0
    %1276 = vmatpush1.xpose.msra.mxu0 %v1243
    %1277 = vmatprep.subr.mxu0 0.0
    %1278 = vmatpush2.xpose.msra.mxu0 0.0
    %1279 = vmatprep.subr.mxu0 0.0
    %1280 = vmatpush2.xpose.msra.mxu0 0.0
    %1281 = vmatprep.subr.mxu0 0.0
    %1282 = vmatpush2.xpose.msra.mxu0 0.0
    %1283 = vmatprep.subr.mxu0 0.0
    %1284 = vmatpush2.xpose.msra.mxu0 0.0
    %1285 = vmatprep.subr.mxu0 0.0
    %1286 = vmatpush2.xpose.msra.mxu0 0.0
    %1287 = vmatprep.subr.mxu0 0.0
    %1288 = vmatpush2.xpose.msra.mxu0 0.0
    %1289 = vmatprep.subr.mxu0 0.0
    %1290 = vmatpush2.xpose.msra.mxu0 0.0
    %1291 = vmatprep.subr.mxu0 0.0
    %1292 = vmatpush2.xpose.msra.mxu0 0.0
    %1293 = vmatprep.subr.mxu0 0.0
    %1294 = vmatpush2.xpose.msra.mxu0 0.0
    %1295 = vmatprep.subr.mxu0 0.0
    %1296 = vmatpush2.xpose.msra.mxu0 0.0
    %1297 = vmatprep.subr.mxu0 0.0
    %1298 = vmatpush2.xpose.msra.mxu0 0.0
    %1299 = vmatprep.subr.mxu0 0.0
    %1300 = vmatpush2.xpose.msra.mxu0 0.0
    %1301 = vmatprep.subr.mxu0 0.0
    %1302 = vmatpush2.xpose.msra.mxu0 0.0
    %1303 = vmatprep.subr.mxu0 0.0
    %1304 = vmatpush2.xpose.msra.mxu0 0.0
    %1305 = vmatprep.subr.mxu0 0.0
    %1306 = vmatpush2.xpose.msra.mxu0 0.0
    %1307 = vmatprep.subr.mxu0 0.0
    %1308 = vmatpush2.xpose.msra.mxu0 0.0
    %1309 = vmatprep.mubr.f32.mxu0 0.0
    %1310 = vmatmul.mubr.f32.gmra.mxu0 %v1241
    %v1311 = vpop.f32.mrf.mxu0
    %v1312 = vadd.f32 0.0, %v1311
    %v1313 = vpop.f32.mrf.mxu0
    %1314 = vdwg.mxu0
    %v1315 = vsel %vm173, %v1234, -inf
    %1316 = vmax.xlane.f32.xlu0 %v1315
    %v1317 = vpop.xlane.xlu0 %1316
    %v1318 = vsel %vm173, %v1312, -inf
    %1319 = vmax.xlane.f32.xlu0 %v1318
    %v1320 = vpop.xlane.xlu0 %1319
    %v1321 = vsub.f32 %v1234, %v1317
    %v1322 = vsub.f32 %v1312, %v1320
    %v1323 = vmul.f32 %v1321, 1.442695
    %v1324 = vpow.pop %v1323
    %v1325 = vmul.f32 %v1322, 1.442695
    %v1326 = vpow.pop %v1325
    %v1327 = vsel %vm173, %v1324, 0.0
    %1328 = vadd.xlane.f32.xlu0 %v1327
    %v1329 = vpop.xlane.xlu0 %1328
    %v1330 = vsel %vm173, %v1326, 0.0
    %1331 = vadd.xlane.f32.xlu0 %v1330
    %v1332 = vpop.xlane.xlu0 %1331
    %v1333 = vrcp.pop %v1329
    %v1334 = vrcp.pop %v1332
    %v1335 = vmul.f32 %v1324, %v1333
    %v1336 = vmul.f32 %v1326, %v1334
    %1337 = vrot.lane.b32.xlu0 %v162, 40
    %v1338 = vpop.permute.xlu0 %1337
    %v1341 = vsel %vm173, %v1335, 0
    %1343 = vmatprep.subr.mxu0 0.0
    %1344 = vmatpush1.msra.mxu0 0.0
    %1345 = vmatprep.subr.mxu0 0.0
    %1346 = vmatpush1.msra.mxu0 0.0
    %1347 = vmatprep.subr.mxu0 0.0
    %1348 = vmatpush1.msra.mxu0 0.0
    %1349 = vmatprep.subr.mxu0 0.0
    %1350 = vmatpush1.msra.mxu0 0.0
    %1351 = vmatprep.subr.mxu0 0.0
    %1352 = vmatpush1.msra.mxu0 0.0
    %1353 = vmatprep.subr.mxu0 0.0
    %1354 = vmatpush1.msra.mxu0 0.0
    %1355 = vmatprep.subr.mxu0 0.0
    %1356 = vmatpush1.msra.mxu0 0.0
    %1357 = vmatprep.subr.mxu0 0.0
    %1358 = vmatpush1.msra.mxu0 0.0
    %1359 = vmatprep.subr.mxu0 0.0
    %1360 = vmatpush1.msra.mxu0 0.0
    %1361 = vmatprep.subr.mxu0 0.0
    %1362 = vmatpush1.msra.mxu0 0.0
    %1363 = vmatprep.subr.mxu0 0.0
    %1364 = vmatpush1.msra.mxu0 0.0
    %1365 = vmatprep.subr.mxu0 0.0
    %1366 = vmatpush1.msra.mxu0 0.0
    %1367 = vmatprep.subr.mxu0 0.0
    %1368 = vmatpush1.msra.mxu0 0.0
    %1369 = vmatprep.subr.mxu0 0.0
    %1370 = vmatpush1.msra.mxu0 0.0
    %1371 = vmatprep.subr.mxu0 0.0
    %1372 = vmatpush1.msra.mxu0 0.0
    %1373 = vmatprep.subr.mxu0 0.0
    %1374 = vmatpush1.msra.mxu0 %v1338
    %1375 = vmatprep.subr.mxu0 0.0
    %1376 = vmatpush2.msra.mxu0 0.0
    %1377 = vmatprep.subr.mxu0 0.0
    %1378 = vmatpush2.msra.mxu0 0.0
    %1379 = vmatprep.subr.mxu0 0.0
    %1380 = vmatpush2.msra.mxu0 0.0
    %1381 = vmatprep.subr.mxu0 0.0
    %1382 = vmatpush2.msra.mxu0 0.0
    %1383 = vmatprep.subr.mxu0 0.0
    %1384 = vmatpush2.msra.mxu0 0.0
    %1385 = vmatprep.subr.mxu0 0.0
    %1386 = vmatpush2.msra.mxu0 0.0
    %1387 = vmatprep.subr.mxu0 0.0
    %1388 = vmatpush2.msra.mxu0 0.0
    %1389 = vmatprep.subr.mxu0 0.0
    %1390 = vmatpush2.msra.mxu0 0.0
    %1391 = vmatprep.subr.mxu0 0.0
    %1392 = vmatpush2.msra.mxu0 0.0
    %1393 = vmatprep.subr.mxu0 0.0
    %1394 = vmatpush2.msra.mxu0 0.0
    %1395 = vmatprep.subr.mxu0 0.0
    %1396 = vmatpush2.msra.mxu0 0.0
    %1397 = vmatprep.subr.mxu0 0.0
    %1398 = vmatpush2.msra.mxu0 0.0
    %1399 = vmatprep.subr.mxu0 0.0
    %1400 = vmatpush2.msra.mxu0 0.0
    %1401 = vmatprep.subr.mxu0 0.0
    %1402 = vmatpush2.msra.mxu0 0.0
    %1403 = vmatprep.subr.mxu0 0.0
    %1404 = vmatpush2.msra.mxu0 0.0
    %1405 = vmatprep.subr.mxu0 0.0
    %1406 = vmatpush2.msra.mxu0 0.0
    %1407 = vmatprep.mubr.f32.mxu0 0.0
    %1408 = vmatmul.mubr.f32.gmra.mxu0 %v1341
    %v1409 = vpop.f32.mrf.mxu0
    %v1410 = vadd.f32 0.0, %v1409
    %v1411 = vpop.f32.mrf.mxu0
    %1412 = vdwg.mxu0
    %1413 = vrot.lane.b32.xlu0 %v167, 40
    %v1414 = vpop.permute.xlu0 %1413
    %v1417 = vsel %vm173, %v1336, 0
    %1419 = vmatprep.subr.mxu0 0.0
    %1420 = vmatpush1.msra.mxu0 0.0
    %1421 = vmatprep.subr.mxu0 0.0
    %1422 = vmatpush1.msra.mxu0 0.0
    %1423 = vmatprep.subr.mxu0 0.0
    %1424 = vmatpush1.msra.mxu0 0.0
    %1425 = vmatprep.subr.mxu0 0.0
    %1426 = vmatpush1.msra.mxu0 0.0
    %1427 = vmatprep.subr.mxu0 0.0
    %1428 = vmatpush1.msra.mxu0 0.0
    %1429 = vmatprep.subr.mxu0 0.0
    %1430 = vmatpush1.msra.mxu0 0.0
    %1431 = vmatprep.subr.mxu0 0.0
    %1432 = vmatpush1.msra.mxu0 0.0
    %1433 = vmatprep.subr.mxu0 0.0
    %1434 = vmatpush1.msra.mxu0 0.0
    %1435 = vmatprep.subr.mxu0 0.0
    %1436 = vmatpush1.msra.mxu0 0.0
    %1437 = vmatprep.subr.mxu0 0.0
    %1438 = vmatpush1.msra.mxu0 0.0
    %1439 = vmatprep.subr.mxu0 0.0
    %1440 = vmatpush1.msra.mxu0 0.0
    %1441 = vmatprep.subr.mxu0 0.0
    %1442 = vmatpush1.msra.mxu0 0.0
    %1443 = vmatprep.subr.mxu0 0.0
    %1444 = vmatpush1.msra.mxu0 0.0
    %1445 = vmatprep.subr.mxu0 0.0
    %1446 = vmatpush1.msra.mxu0 0.0
    %1447 = vmatprep.subr.mxu0 0.0
    %1448 = vmatpush1.msra.mxu0 0.0
    %1449 = vmatprep.subr.mxu0 0.0
    %1450 = vmatpush1.msra.mxu0 %v1414
    %1451 = vmatprep.subr.mxu0 0.0
    %1452 = vmatpush2.msra.mxu0 0.0
    %1453 = vmatprep.subr.mxu0 0.0
    %1454 = vmatpush2.msra.mxu0 0.0
    %1455 = vmatprep.subr.mxu0 0.0
    %1456 = vmatpush2.msra.mxu0 0.0
    %1457 = vmatprep.subr.mxu0 0.0
    %1458 = vmatpush2.msra.mxu0 0.0
    %1459 = vmatprep.subr.mxu0 0.0
    %1460 = vmatpush2.msra.mxu0 0.0
    %1461 = vmatprep.subr.mxu0 0.0
    %1462 = vmatpush2.msra.mxu0 0.0
    %1463 = vmatprep.subr.mxu0 0.0
    %1464 = vmatpush2.msra.mxu0 0.0
    %1465 = vmatprep.subr.mxu0 0.0
    %1466 = vmatpush2.msra.mxu0 0.0
    %1467 = vmatprep.subr.mxu0 0.0
    %1468 = vmatpush2.msra.mxu0 0.0
    %1469 = vmatprep.subr.mxu0 0.0
    %1470 = vmatpush2.msra.mxu0 0.0
    %1471 = vmatprep.subr.mxu0 0.0
    %1472 = vmatpush2.msra.mxu0 0.0
    %1473 = vmatprep.subr.mxu0 0.0
    %1474 = vmatpush2.msra.mxu0 0.0
    %1475 = vmatprep.subr.mxu0 0.0
    %1476 = vmatpush2.msra.mxu0 0.0
    %1477 = vmatprep.subr.mxu0 0.0
    %1478 = vmatpush2.msra.mxu0 0.0
    %1479 = vmatprep.subr.mxu0 0.0
    %1480 = vmatpush2.msra.mxu0 0.0
    %1481 = vmatprep.subr.mxu0 0.0
    %1482 = vmatpush2.msra.mxu0 0.0
    %1483 = vmatprep.mubr.f32.mxu0 0.0
    %1484 = vmatmul.mubr.f32.gmra.mxu0 %v1417
    %v1485 = vpop.f32.mrf.mxu0
    %v1486 = vadd.f32 0.0, %v1485
    %v1487 = vpop.f32.mrf.mxu0
    %1488 = vdwg.mxu0
    %1491 = vrot.lane.b32.xlu0 %v750, 8
    %v1492 = vpop.permute.xlu0 %1491
    %1493 = vrot.lane.b32.xlu0 %v826, 8
    %v1494 = vpop.permute.xlu0 %1493
    %1499 = vrot.lane.b32.xlu0 %v1080, 16
    %v1500 = vpop.permute.xlu0 %1499
    %1501 = vrot.lane.b32.xlu0 %v1156, 16
    %v1502 = vpop.permute.xlu0 %1501
    %1507 = vrot.lane.b32.xlu0 %v1410, 24
    %v1508 = vpop.permute.xlu0 %1507
    %1509 = vrot.lane.b32.xlu0 %v1486, 24
    %v1510 = vpop.permute.xlu0 %1509
    %v1513 = vsel %vm173, %v420, %v1492
    %v1514 = vsel %vm173, %v496, %v1494
    %vm1515 = vcmask 130048
    %v1516 = vsel %vm1515, %v1513, %v1500
    %v1517 = vsel %vm1515, %v1514, %v1502
    %vm1518 = vcmask 195584
    %v1519 = vsel %vm1518, %v1516, %v1508
    %v1520 = vsel %vm1518, %v1517, %v1510
    %v1521 = vlaneseq
    %v1522 = vshrl.u32 %v1521, 7
    %v1523 = vsub.s32 0, %v1522
    %v1524 = vrot.slane %v77, %v1523
    %1529 = vrot.lane.b32.xlu0 %v38, 32
    %v1530 = vpop.permute.xlu0 %1529
    %1531 = vrot.lane.b32.xlu0 %v39, 32
    %v1532 = vpop.permute.xlu0 %1531
    %1533 = vrot.lane.b32.xlu0 %v40, 32
    %v1534 = vpop.permute.xlu0 %1533
    %1535 = vrot.lane.b32.xlu0 %v41, 32
    %v1536 = vpop.permute.xlu0 %1535
    %v1542 = vsel %vm88, %v1519, 0
    %v1545 = vsel %vm88, %v1520, 0
    %1547 = vmatprep.subr.mxu0 0.0
    %1548 = vmatpush1.msra.mxu0 0.0
    %1549 = vmatprep.subr.mxu0 0.0
    %1550 = vmatpush1.msra.mxu0 0.0
    %1551 = vmatprep.subr.mxu0 0.0
    %1552 = vmatpush1.msra.mxu0 0.0
    %1553 = vmatprep.subr.mxu0 0.0
    %1554 = vmatpush1.msra.mxu0 0.0
    %1555 = vmatprep.subr.mxu0 0.0
    %1556 = vmatpush1.msra.mxu0 0.0
    %1557 = vmatprep.subr.mxu0 0.0
    %1558 = vmatpush1.msra.mxu0 0.0
    %1559 = vmatprep.subr.mxu0 0.0
    %1560 = vmatpush1.msra.mxu0 0.0
    %1561 = vmatprep.subr.mxu0 0.0
    %1562 = vmatpush1.msra.mxu0 0.0
    %1563 = vmatprep.subr.mxu0 0.0
    %1564 = vmatpush1.msra.mxu0 0.0
    %1565 = vmatprep.subr.mxu0 0.0
    %1566 = vmatpush1.msra.mxu0 0.0
    %1567 = vmatprep.subr.mxu0 0.0
    %1568 = vmatpush1.msra.mxu0 0.0
    %1569 = vmatprep.subr.mxu0 0.0
    %1570 = vmatpush1.msra.mxu0 0.0
    %1571 = vmatprep.subr.mxu0 0.0
    %1572 = vmatpush1.msra.mxu0 %v1536
    %1573 = vmatprep.subr.mxu0 0.0
    %1574 = vmatpush1.msra.mxu0 %v1534
    %1575 = vmatprep.subr.mxu0 0.0
    %1576 = vmatpush1.msra.mxu0 %v1532
    %1577 = vmatprep.subr.mxu0 0.0
    %1578 = vmatpush1.msra.mxu0 %v1530
    %1579 = vmatprep.subr.mxu0 0.0
    %1580 = vmatpush2.msra.mxu0 0.0
    %1581 = vmatprep.subr.mxu0 0.0
    %1582 = vmatpush2.msra.mxu0 0.0
    %1583 = vmatprep.subr.mxu0 0.0
    %1584 = vmatpush2.msra.mxu0 0.0
    %1585 = vmatprep.subr.mxu0 0.0
    %1586 = vmatpush2.msra.mxu0 0.0
    %1587 = vmatprep.subr.mxu0 0.0
    %1588 = vmatpush2.msra.mxu0 0.0
    %1589 = vmatprep.subr.mxu0 0.0
    %1590 = vmatpush2.msra.mxu0 0.0
    %1591 = vmatprep.subr.mxu0 0.0
    %1592 = vmatpush2.msra.mxu0 0.0
    %1593 = vmatprep.subr.mxu0 0.0
    %1594 = vmatpush2.msra.mxu0 0.0
    %1595 = vmatprep.subr.mxu0 0.0
    %1596 = vmatpush2.msra.mxu0 0.0
    %1597 = vmatprep.subr.mxu0 0.0
    %1598 = vmatpush2.msra.mxu0 0.0
    %1599 = vmatprep.subr.mxu0 0.0
    %1600 = vmatpush2.msra.mxu0 0.0
    %1601 = vmatprep.subr.mxu0 0.0
    %1602 = vmatpush2.msra.mxu0 0.0
    %1603 = vmatprep.subr.mxu0 0.0
    %1604 = vmatpush2.msra.mxu0 0.0
    %1605 = vmatprep.subr.mxu0 0.0
    %1606 = vmatpush2.msra.mxu0 0.0
    %1607 = vmatprep.subr.mxu0 0.0
    %1608 = vmatpush2.msra.mxu0 0.0
    %1609 = vmatprep.subr.mxu0 0.0
    %1610 = vmatpush2.msra.mxu0 0.0
    %1611 = vmatprep.mubr.f32.mxu0 0.0
    %1612 = vmatmul.mubr.f32.gmra.mxu0 %v1542
    %v1613 = vpop.f32.mrf.mxu0
    %v1614 = vadd.f32 %v1524, %v1613
    %v1615 = vpop.f32.mrf.mxu0
    %1616 = vmatprep.mubr.f32.mxu0 0.0
    %1617 = vmatmul.mubr.f32.gmra.mxu0 %v1545
    %v1618 = vpop.f32.mrf.mxu0
    %v1619 = vadd.f32 %v1524, %v1618
    %v1620 = vpop.f32.mrf.mxu0
    %1621 = vdwg.mxu0
    %v1622 = vadd.f32 %v32, %v1614
    %v1623 = vadd.f32 %v33, %v1619
    %v1624 = vsel %vm88, %v1622, 0.0
    %1625 = vadd.xlane.f32.xlu0 %v1624
    %v1626 = vpop.xlane.xlu0 %1625
    %v1627 = vsel %vm88, %v1623, 0.0
    %1628 = vadd.xlane.f32.xlu0 %v1627
    %v1629 = vpop.xlane.xlu0 %1628
    %v1630 = vrcp.pop 32.0
    %v1631 = vmul.f32 %v1626, %v1630
    %v1632 = vmul.f32 %v1629, %v1630
    %v1633 = vsub.f32 %v1622, %v1631
    %v1634 = vsub.f32 %v1623, %v1632
    %v1635 = vmul.f32 %v1633, %v1633
    %v1636 = vmul.f32 %v1634, %v1634
    %v1637 = vsel %vm88, %v1635, 0.0
    %1638 = vadd.xlane.f32.xlu0 %v1637
    %v1639 = vpop.xlane.xlu0 %1638
    %v1640 = vsel %vm88, %v1636, 0.0
    %1641 = vadd.xlane.f32.xlu0 %v1640
    %v1642 = vpop.xlane.xlu0 %1641
    %v1643 = vmul.f32 %v1639, %v1630
    %v1644 = vmul.f32 %v1642, %v1630
    %v1645 = vadd.f32 %v1643, 1e-05
    %v1646 = vadd.f32 %v1644, 1e-05
    %v1647 = vrsqrt.pop %v1645
    %v1648 = vrsqrt.pop %v1646
    %v1649 = vmul.f32 %v1633, %v1647
    %v1650 = vmul.f32 %v1634, %v1648
    %v1651 = vlaneseq
    %v1652 = vshrl.u32 %v1651, 7
    %v1653 = vsub.s32 0, %v1652
    %v1654 = vrot.slane %v80, %v1653
    %v1655 = vmul.f32 %v1649, %v1654
    %v1656 = vmul.f32 %v1650, %v1654
    %v1657 = vlaneseq
    %v1658 = vshrl.u32 %v1657, 7
    %v1659 = vsub.s32 0, %v1658
    %v1660 = vrot.slane %v81, %v1659
    %v1661 = vadd.f32 %v1655, %v1660
    %v1662 = vadd.f32 %v1656, %v1660
    %v1663 = vlaneseq
    %v1664 = vshrl.u32 %v1663, 7
    %v1665 = vsub.s32 0, %v1664
    %v1666 = vrot.slane %v78, %v1665
    %v1668 = vsel %vm88, %v1661, 0
    %v1671 = vsel %vm88, %v1662, 0
    %1673 = vmatprep.subr.mxu0 0.0
    %1674 = vmatpush1.msra.mxu0 0.0
    %1675 = vmatprep.subr.mxu0 0.0
    %1676 = vmatpush1.msra.mxu0 0.0
    %1677 = vmatprep.subr.mxu0 0.0
    %1678 = vmatpush1.msra.mxu0 0.0
    %1679 = vmatprep.subr.mxu0 0.0
    %1680 = vmatpush1.msra.mxu0 0.0
    %1681 = vmatprep.subr.mxu0 0.0
    %1682 = vmatpush1.msra.mxu0 0.0
    %1683 = vmatprep.subr.mxu0 0.0
    %1684 = vmatpush1.msra.mxu0 0.0
    %1685 = vmatprep.subr.mxu0 0.0
    %1686 = vmatpush1.msra.mxu0 0.0
    %1687 = vmatprep.subr.mxu0 0.0
    %1688 = vmatpush1.msra.mxu0 0.0
    %1689 = vmatprep.subr.mxu0 0.0
    %1690 = vmatpush1.msra.mxu0 0.0
    %1691 = vmatprep.subr.mxu0 0.0
    %1692 = vmatpush1.msra.mxu0 0.0
    %1693 = vmatprep.subr.mxu0 0.0
    %1694 = vmatpush1.msra.mxu0 0.0
    %1695 = vmatprep.subr.mxu0 0.0
    %1696 = vmatpush1.msra.mxu0 0.0
    %1697 = vmatprep.subr.mxu0 0.0
    %1698 = vmatpush1.msra.mxu0 %v49
    %1699 = vmatprep.subr.mxu0 0.0
    %1700 = vmatpush1.msra.mxu0 %v48
    %1701 = vmatprep.subr.mxu0 0.0
    %1702 = vmatpush1.msra.mxu0 %v47
    %1703 = vmatprep.subr.mxu0 0.0
    %1704 = vmatpush1.msra.mxu0 %v46
    %1705 = vmatprep.subr.mxu0 0.0
    %1706 = vmatpush2.msra.mxu0 0.0
    %1707 = vmatprep.subr.mxu0 0.0
    %1708 = vmatpush2.msra.mxu0 0.0
    %1709 = vmatprep.subr.mxu0 0.0
    %1710 = vmatpush2.msra.mxu0 0.0
    %1711 = vmatprep.subr.mxu0 0.0
    %1712 = vmatpush2.msra.mxu0 0.0
    %1713 = vmatprep.subr.mxu0 0.0
    %1714 = vmatpush2.msra.mxu0 0.0
    %1715 = vmatprep.subr.mxu0 0.0
    %1716 = vmatpush2.msra.mxu0 0.0
    %1717 = vmatprep.subr.mxu0 0.0
    %1718 = vmatpush2.msra.mxu0 0.0
    %1719 = vmatprep.subr.mxu0 0.0
    %1720 = vmatpush2.msra.mxu0 0.0
    %1721 = vmatprep.subr.mxu0 0.0
    %1722 = vmatpush2.msra.mxu0 0.0
    %1723 = vmatprep.subr.mxu0 0.0
    %1724 = vmatpush2.msra.mxu0 0.0
    %1725 = vmatprep.subr.mxu0 0.0
    %1726 = vmatpush2.msra.mxu0 0.0
    %1727 = vmatprep.subr.mxu0 0.0
    %1728 = vmatpush2.msra.mxu0 0.0
    %1729 = vmatprep.subr.mxu0 0.0
    %1730 = vmatpush2.msra.mxu0 0.0
    %1731 = vmatprep.subr.mxu0 0.0
    %1732 = vmatpush2.msra.mxu0 0.0
    %1733 = vmatprep.subr.mxu0 0.0
    %1734 = vmatpush2.msra.mxu0 0.0
    %1735 = vmatprep.subr.mxu0 0.0
    %1736 = vmatpush2.msra.mxu0 0.0
    %1737 = vmatprep.mubr.f32.mxu0 0.0
    %1738 = vmatmul.mubr.f32.gmra.mxu0 %v1668
    %v1739 = vpop.f32.mrf.mxu0
    %v1740 = vadd.f32 %v1666, %v1739
    %v1741 = vpop.f32.mrf.mxu0
    %1742 = vmatprep.mubr.f32.mxu0 0.0
    %1743 = vmatmul.mubr.f32.gmra.mxu0 %v1671
    %v1744 = vpop.f32.mrf.mxu0
    %v1745 = vadd.f32 %v1666, %v1744
    %v1746 = vpop.f32.mrf.mxu0
    %1747 = vdwg.mxu0
    %v1748 = vmax.f32 %v1740, 0.0
    %v1749 = vmax.f32 %v1745, 0.0
    %v1750 = vlaneseq
    %v1751 = vshrl.u32 %v1750, 7
    %v1752 = vsub.s32 0, %v1751
    %v1753 = vrot.slane %v79, %v1752
    %1762 = vrot.lane.b32.xlu0 %v68, 64
    %v1763 = vpop.permute.xlu0 %1762
    %1764 = vrot.lane.b32.xlu0 %v69, 64
    %v1765 = vpop.permute.xlu0 %1764
    %1766 = vrot.lane.b32.xlu0 %v70, 64
    %v1767 = vpop.permute.xlu0 %1766
    %1768 = vrot.lane.b32.xlu0 %v71, 64
    %v1769 = vpop.permute.xlu0 %1768
    %1770 = vrot.lane.b32.xlu0 %v72, 64
    %v1771 = vpop.permute.xlu0 %1770
    %1772 = vrot.lane.b32.xlu0 %v73, 64
    %v1773 = vpop.permute.xlu0 %1772
    %1774 = vrot.lane.b32.xlu0 %v74, 64
    %v1775 = vpop.permute.xlu0 %1774
    %1776 = vrot.lane.b32.xlu0 %v75, 64
    %v1777 = vpop.permute.xlu0 %1776
    %vm1786 = vcmask 523264
    %v1788 = vsel %vm1786, %v1748, 0
    %v1791 = vsel %vm1786, %v1749, 0
    %1793 = vmatprep.subr.mxu0 0.0
    %1794 = vmatpush1.msra.mxu0 0.0
    %1795 = vmatprep.subr.mxu0 0.0
    %1796 = vmatpush1.msra.mxu0 0.0
    %1797 = vmatprep.subr.mxu0 0.0
    %1798 = vmatpush1.msra.mxu0 0.0
    %1799 = vmatprep.subr.mxu0 0.0
    %1800 = vmatpush1.msra.mxu0 0.0
    %1801 = vmatprep.subr.mxu0 0.0
    %1802 = vmatpush1.msra.mxu0 0.0
    %1803 = vmatprep.subr.mxu0 0.0
    %1804 = vmatpush1.msra.mxu0 0.0
    %1805 = vmatprep.subr.mxu0 0.0
    %1806 = vmatpush1.msra.mxu0 0.0
    %1807 = vmatprep.subr.mxu0 0.0
    %1808 = vmatpush1.msra.mxu0 0.0
    %1809 = vmatprep.subr.mxu0 0.0
    %1810 = vmatpush1.msra.mxu0 %v1777
    %1811 = vmatprep.subr.mxu0 0.0
    %1812 = vmatpush1.msra.mxu0 %v1775
    %1813 = vmatprep.subr.mxu0 0.0
    %1814 = vmatpush1.msra.mxu0 %v1773
    %1815 = vmatprep.subr.mxu0 0.0
    %1816 = vmatpush1.msra.mxu0 %v1771
    %1817 = vmatprep.subr.mxu0 0.0
    %1818 = vmatpush1.msra.mxu0 %v1769
    %1819 = vmatprep.subr.mxu0 0.0
    %1820 = vmatpush1.msra.mxu0 %v1767
    %1821 = vmatprep.subr.mxu0 0.0
    %1822 = vmatpush1.msra.mxu0 %v1765
    %1823 = vmatprep.subr.mxu0 0.0
    %1824 = vmatpush1.msra.mxu0 %v1763
    %1825 = vmatprep.subr.mxu0 0.0
    %1826 = vmatpush2.msra.mxu0 0.0
    %1827 = vmatprep.subr.mxu0 0.0
    %1828 = vmatpush2.msra.mxu0 0.0
    %1829 = vmatprep.subr.mxu0 0.0
    %1830 = vmatpush2.msra.mxu0 0.0
    %1831 = vmatprep.subr.mxu0 0.0
    %1832 = vmatpush2.msra.mxu0 0.0
    %1833 = vmatprep.subr.mxu0 0.0
    %1834 = vmatpush2.msra.mxu0 0.0
    %1835 = vmatprep.subr.mxu0 0.0
    %1836 = vmatpush2.msra.mxu0 0.0
    %1837 = vmatprep.subr.mxu0 0.0
    %1838 = vmatpush2.msra.mxu0 0.0
    %1839 = vmatprep.subr.mxu0 0.0
    %1840 = vmatpush2.msra.mxu0 0.0
    %1841 = vmatprep.subr.mxu0 0.0
    %1842 = vmatpush2.msra.mxu0 0.0
    %1843 = vmatprep.subr.mxu0 0.0
    %1844 = vmatpush2.msra.mxu0 0.0
    %1845 = vmatprep.subr.mxu0 0.0
    %1846 = vmatpush2.msra.mxu0 0.0
    %1847 = vmatprep.subr.mxu0 0.0
    %1848 = vmatpush2.msra.mxu0 0.0
    %1849 = vmatprep.subr.mxu0 0.0
    %1850 = vmatpush2.msra.mxu0 0.0
    %1851 = vmatprep.subr.mxu0 0.0
    %1852 = vmatpush2.msra.mxu0 0.0
    %1853 = vmatprep.subr.mxu0 0.0
    %1854 = vmatpush2.msra.mxu0 0.0
    %1855 = vmatprep.subr.mxu0 0.0
    %1856 = vmatpush2.msra.mxu0 0.0
    %1857 = vmatprep.mubr.f32.mxu0 0.0
    %1858 = vmatmul.mubr.f32.gmra.mxu0 %v1788
    %v1859 = vpop.f32.mrf.mxu0
    %v1860 = vadd.f32 %v1753, %v1859
    %v1861 = vpop.f32.mrf.mxu0
    %1862 = vmatprep.mubr.f32.mxu0 0.0
    %1863 = vmatmul.mubr.f32.gmra.mxu0 %v1791
    %v1864 = vpop.f32.mrf.mxu0
    %v1865 = vadd.f32 %v1753, %v1864
    %v1866 = vpop.f32.mrf.mxu0
    %1867 = vdwg.mxu0
    %v1868 = vadd.f32 %v1661, %v1860
    %v1869 = vadd.f32 %v1662, %v1865
    %v1870 = vsel %vm88, %v1868, 0.0
    %1871 = vadd.xlane.f32.xlu0 %v1870
    %v1872 = vpop.xlane.xlu0 %1871
    %v1873 = vsel %vm88, %v1869, 0.0
    %1874 = vadd.xlane.f32.xlu0 %v1873
    %v1875 = vpop.xlane.xlu0 %1874
    %v1876 = vmul.f32 %v1872, %v1630
    %v1877 = vmul.f32 %v1875, %v1630
    %v1878 = vsub.f32 %v1868, %v1876
    %v1879 = vsub.f32 %v1869, %v1877
    %v1880 = vmul.f32 %v1878, %v1878
    %v1881 = vmul.f32 %v1879, %v1879
    %v1882 = vsel %vm88, %v1880, 0.0
    %1883 = vadd.xlane.f32.xlu0 %v1882
    %v1884 = vpop.xlane.xlu0 %1883
    %v1885 = vsel %vm88, %v1881, 0.0
    %1886 = vadd.xlane.f32.xlu0 %v1885
    %v1887 = vpop.xlane.xlu0 %1886
    %v1888 = vmul.f32 %v1884, %v1630
    %v1889 = vmul.f32 %v1887, %v1630
    %v1890 = vadd.f32 %v1888, 1e-05
    %v1891 = vadd.f32 %v1889, 1e-05
    %v1892 = vrsqrt.pop %v1890
    %v1893 = vrsqrt.pop %v1891
    %v1894 = vmul.f32 %v1878, %v1892
    %v1895 = vmul.f32 %v1879, %v1893
    %v1896 = vlaneseq
    %v1897 = vshrl.u32 %v1896, 7
    %v1898 = vsub.s32 0, %v1897
    %v1899 = vrot.slane %v82, %v1898
    %v1900 = vmul.f32 %v1894, %v1899
    %v1901 = vmul.f32 %v1895, %v1899
    %v1902 = vlaneseq
    %v1903 = vshrl.u32 %v1902, 7
    %v1904 = vsub.s32 0, %v1903
    %v1905 = vrot.slane %v83, %v1904
    %v1906 = vadd.f32 %v1900, %v1905
    %v1907 = vadd.f32 %v1901, %v1905
    %v1908 = vld [vmem:[#allocation2 + $0x20] sm:$0xf]
    %v1909 = vld [vmem:[#allocation2 + $0x24] sm:$0xf]
    %v1910 = vld [vmem:[#allocation2 + $0x28] sm:$0xf]
    %v1911 = vld [vmem:[#allocation2 + $0x2c] sm:$0xf]
    %v1912 = vunpack.c.l.bf16 %v1908
    %v1913 = vunpack.c.l.bf16 %v1909
    %v1914 = vunpack.c.l.bf16 %v1910
    %v1915 = vunpack.c.l.bf16 %v1911
    %v1916 = vld [vmem:[#allocation2 + $0x30] sm:$0xf]
    %v1917 = vld [vmem:[#allocation2 + $0x34] sm:$0xf]
    %v1918 = vld [vmem:[#allocation2 + $0x38] sm:$0xf]
    %v1919 = vld [vmem:[#allocation2 + $0x3c] sm:$0xf]
    %v1920 = vunpack.c.l.bf16 %v1916
    %v1921 = vunpack.c.l.bf16 %v1917
    %v1922 = vunpack.c.l.bf16 %v1918
    %v1923 = vunpack.c.l.bf16 %v1919
    %v1928 = vunpack.c.l.b16 %v1916
    %v1929 = vunpack.c.l.b16 %v1917
    %v1930 = vunpack.c.l.b16 %v1918
    %v1931 = vunpack.c.l.b16 %v1919
    %v1932 = vpack.c.b16 %v1929, %v1928
    %v1933 = vpack.c.b16 %v1931, %v1930
    %1936 = vrot.lane.b32.xlu0 %v1932, 96
    %v1937 = vpop.permute.xlu0 %1936
    %1938 = vrot.lane.b32.xlu0 %v1933, 96
    %v1939 = vpop.permute.xlu0 %1938
    %v1942 = vunpack.c.l.bf16 %v1932
    %v1943 = vunpack.c.h.bf16 %v1932
    %v1944 = vunpack.c.l.bf16 %v1933
    %v1945 = vunpack.c.h.bf16 %v1933
    %v1946 = vunpack.c.l.bf16 %v1937
    %v1947 = vunpack.c.h.bf16 %v1937
    %v1948 = vunpack.c.l.bf16 %v1939
    %v1949 = vunpack.c.h.bf16 %v1939
    %v1950 = vld [vmem:[%s2 + $0x8] sm:$0x1]
    %v1951 = vld [vmem:[%s2 + $0x9] sm:$0x1]
    %v1952 = vld [vmem:[%s2 + $0xa] sm:$0x1]
    %v1953 = vld [vmem:[%s2 + $0xb] sm:$0x1]
    %v1954 = vld [vmem:[%s2 + $0xc] sm:$0x1]
    %v1955 = vld [vmem:[%s2 + $0xd] sm:$0x1]
    %v1956 = vld [vmem:[%s2 + $0xe] sm:$0x1]
    %v1957 = vld [vmem:[%s2 + $0xf] sm:$0x1]
    %v1958 = vlaneseq
    %v1959 = vshrl.u32 %v1958, 7
    %v1960 = vsub.s32 0, %v1959
    %v1961 = vrot.slane %v1950, %v1960
    %v1963 = vsel %vm88, %v1906, 0
    %v1966 = vsel %vm88, %v1907, 0
    %1968 = vmatprep.subr.mxu0 0.0
    %1969 = vmatpush1.msra.mxu0 0.0
    %1970 = vmatprep.subr.mxu0 0.0
    %1971 = vmatpush1.msra.mxu0 0.0
    %1972 = vmatprep.subr.mxu0 0.0
    %1973 = vmatpush1.msra.mxu0 0.0
    %1974 = vmatprep.subr.mxu0 0.0
    %1975 = vmatpush1.msra.mxu0 0.0
    %1976 = vmatprep.subr.mxu0 0.0
    %1977 = vmatpush1.msra.mxu0 0.0
    %1978 = vmatprep.subr.mxu0 0.0
    %1979 = vmatpush1.msra.mxu0 0.0
    %1980 = vmatprep.subr.mxu0 0.0
    %1981 = vmatpush1.msra.mxu0 0.0
    %1982 = vmatprep.subr.mxu0 0.0
    %1983 = vmatpush1.msra.mxu0 0.0
    %1984 = vmatprep.subr.mxu0 0.0
    %1985 = vmatpush1.msra.mxu0 0.0
    %1986 = vmatprep.subr.mxu0 0.0
    %1987 = vmatpush1.msra.mxu0 0.0
    %1988 = vmatprep.subr.mxu0 0.0
    %1989 = vmatpush1.msra.mxu0 0.0
    %1990 = vmatprep.subr.mxu0 0.0
    %1991 = vmatpush1.msra.mxu0 0.0
    %1992 = vmatprep.subr.mxu0 0.0
    %1993 = vmatpush1.msra.mxu0 %v1915
    %1994 = vmatprep.subr.mxu0 0.0
    %1995 = vmatpush1.msra.mxu0 %v1914
    %1996 = vmatprep.subr.mxu0 0.0
    %1997 = vmatpush1.msra.mxu0 %v1913
    %1998 = vmatprep.subr.mxu0 0.0
    %1999 = vmatpush1.msra.mxu0 %v1912
    %2000 = vmatprep.subr.mxu0 0.0
    %2001 = vmatpush2.msra.mxu0 0.0
    %2002 = vmatprep.subr.mxu0 0.0
    %2003 = vmatpush2.msra.mxu0 0.0
    %2004 = vmatprep.subr.mxu0 0.0
    %2005 = vmatpush2.msra.mxu0 0.0
    %2006 = vmatprep.subr.mxu0 0.0
    %2007 = vmatpush2.msra.mxu0 0.0
    %2008 = vmatprep.subr.mxu0 0.0
    %2009 = vmatpush2.msra.mxu0 0.0
    %2010 = vmatprep.subr.mxu0 0.0
    %2011 = vmatpush2.msra.mxu0 0.0
    %2012 = vmatprep.subr.mxu0 0.0
    %2013 = vmatpush2.msra.mxu0 0.0
    %2014 = vmatprep.subr.mxu0 0.0
    %2015 = vmatpush2.msra.mxu0 0.0
    %2016 = vmatprep.subr.mxu0 0.0
    %2017 = vmatpush2.msra.mxu0 0.0
    %2018 = vmatprep.subr.mxu0 0.0
    %2019 = vmatpush2.msra.mxu0 0.0
    %2020 = vmatprep.subr.mxu0 0.0
    %2021 = vmatpush2.msra.mxu0 0.0
    %2022 = vmatprep.subr.mxu0 0.0
    %2023 = vmatpush2.msra.mxu0 0.0
    %2024 = vmatprep.subr.mxu0 0.0
    %2025 = vmatpush2.msra.mxu0 0.0
    %2026 = vmatprep.subr.mxu0 0.0
    %2027 = vmatpush2.msra.mxu0 0.0
    %2028 = vmatprep.subr.mxu0 0.0
    %2029 = vmatpush2.msra.mxu0 0.0
    %2030 = vmatprep.subr.mxu0 0.0
    %2031 = vmatpush2.msra.mxu0 0.0
    %2032 = vmatprep.mubr.f32.mxu0 0.0
    %2033 = vmatmul.mubr.f32.gmra.mxu0 %v1963
    %v2034 = vpop.f32.mrf.mxu0
    %v2035 = vadd.f32 %v1961, %v2034
    %v2036 = vpop.f32.mrf.mxu0
    %2037 = vmatprep.mubr.f32.mxu0 0.0
    %2038 = vmatmul.mubr.f32.gmra.mxu0 %v1966
    %v2039 = vpop.f32.mrf.mxu0
    %v2040 = vadd.f32 %v1961, %v2039
    %v2041 = vpop.f32.mrf.mxu0
    %2042 = vdwg.mxu0
    %2044 = vrot.lane.b32.xlu0 %v2035, 96
    %v2045 = vpop.permute.xlu0 %2044
    %v2046 = vsel %vm173, %v2035, 0
    %v2048 = vsel %vm173, %v2045, 0
    %2050 = vmatprep.subr.mxu0 0.0
    %2051 = vmatpush1.xpose.msra.mxu0 0.0
    %2052 = vmatprep.subr.mxu0 0.0
    %2053 = vmatpush1.xpose.msra.mxu0 0.0
    %2054 = vmatprep.subr.mxu0 0.0
    %2055 = vmatpush1.xpose.msra.mxu0 0.0
    %2056 = vmatprep.subr.mxu0 0.0
    %2057 = vmatpush1.xpose.msra.mxu0 0.0
    %2058 = vmatprep.subr.mxu0 0.0
    %2059 = vmatpush1.xpose.msra.mxu0 0.0
    %2060 = vmatprep.subr.mxu0 0.0
    %2061 = vmatpush1.xpose.msra.mxu0 0.0
    %2062 = vmatprep.subr.mxu0 0.0
    %2063 = vmatpush1.xpose.msra.mxu0 0.0
    %2064 = vmatprep.subr.mxu0 0.0
    %2065 = vmatpush1.xpose.msra.mxu0 0.0
    %2066 = vmatprep.subr.mxu0 0.0
    %2067 = vmatpush1.xpose.msra.mxu0 0.0
    %2068 = vmatprep.subr.mxu0 0.0
    %2069 = vmatpush1.xpose.msra.mxu0 0.0
    %2070 = vmatprep.subr.mxu0 0.0
    %2071 = vmatpush1.xpose.msra.mxu0 0.0
    %2072 = vmatprep.subr.mxu0 0.0
    %2073 = vmatpush1.xpose.msra.mxu0 0.0
    %2074 = vmatprep.subr.mxu0 0.0
    %2075 = vmatpush1.xpose.msra.mxu0 0.0
    %2076 = vmatprep.subr.mxu0 0.0
    %2077 = vmatpush1.xpose.msra.mxu0 0.0
    %2078 = vmatprep.subr.mxu0 0.0
    %2079 = vmatpush1.xpose.msra.mxu0 0.0
    %2080 = vmatprep.subr.mxu0 0.0
    %2081 = vmatpush1.xpose.msra.mxu0 %v2048
    %2082 = vmatprep.subr.mxu0 0.0
    %2083 = vmatpush2.xpose.msra.mxu0 0.0
    %2084 = vmatprep.subr.mxu0 0.0
    %2085 = vmatpush2.xpose.msra.mxu0 0.0
    %2086 = vmatprep.subr.mxu0 0.0
    %2087 = vmatpush2.xpose.msra.mxu0 0.0
    %2088 = vmatprep.subr.mxu0 0.0
    %2089 = vmatpush2.xpose.msra.mxu0 0.0
    %2090 = vmatprep.subr.mxu0 0.0
    %2091 = vmatpush2.xpose.msra.mxu0 0.0
    %2092 = vmatprep.subr.mxu0 0.0
    %2093 = vmatpush2.xpose.msra.mxu0 0.0
    %2094 = vmatprep.subr.mxu0 0.0
    %2095 = vmatpush2.xpose.msra.mxu0 0.0
    %2096 = vmatprep.subr.mxu0 0.0
    %2097 = vmatpush2.xpose.msra.mxu0 0.0
    %2098 = vmatprep.subr.mxu0 0.0
    %2099 = vmatpush2.xpose.msra.mxu0 0.0
    %2100 = vmatprep.subr.mxu0 0.0
    %2101 = vmatpush2.xpose.msra.mxu0 0.0
    %2102 = vmatprep.subr.mxu0 0.0
    %2103 = vmatpush2.xpose.msra.mxu0 0.0
    %2104 = vmatprep.subr.mxu0 0.0
    %2105 = vmatpush2.xpose.msra.mxu0 0.0
    %2106 = vmatprep.subr.mxu0 0.0
    %2107 = vmatpush2.xpose.msra.mxu0 0.0
    %2108 = vmatprep.subr.mxu0 0.0
    %2109 = vmatpush2.xpose.msra.mxu0 0.0
    %2110 = vmatprep.subr.mxu0 0.0
    %2111 = vmatpush2.xpose.msra.mxu0 0.0
    %2112 = vmatprep.subr.mxu0 0.0
    %2113 = vmatpush2.xpose.msra.mxu0 0.0
    %2114 = vmatprep.mubr.f32.mxu0 0.0
    %2115 = vmatmul.mubr.f32.gmra.mxu0 %v2046
    %v2116 = vpop.f32.mrf.mxu0
    %v2117 = vadd.f32 0.0, %v2116
    %v2118 = vpop.f32.mrf.mxu0
    %2119 = vdwg.mxu0
    %2121 = vrot.lane.b32.xlu0 %v2040, 96
    %v2122 = vpop.permute.xlu0 %2121
    %v2123 = vsel %vm173, %v2040, 0
    %v2125 = vsel %vm173, %v2122, 0
    %2127 = vmatprep.subr.mxu0 0.0
    %2128 = vmatpush1.xpose.msra.mxu0 0.0
    %2129 = vmatprep.subr.mxu0 0.0
    %2130 = vmatpush1.xpose.msra.mxu0 0.0
    %2131 = vmatprep.subr.mxu0 0.0
    %2132 = vmatpush1.xpose.msra.mxu0 0.0
    %2133 = vmatprep.subr.mxu0 0.0
    %2134 = vmatpush1.xpose.msra.mxu0 0.0
    %2135 = vmatprep.subr.mxu0 0.0
    %2136 = vmatpush1.xpose.msra.mxu0 0.0
    %2137 = vmatprep.subr.mxu0 0.0
    %2138 = vmatpush1.xpose.msra.mxu0 0.0
    %2139 = vmatprep.subr.mxu0 0.0
    %2140 = vmatpush1.xpose.msra.mxu0 0.0
    %2141 = vmatprep.subr.mxu0 0.0
    %2142 = vmatpush1.xpose.msra.mxu0 0.0
    %2143 = vmatprep.subr.mxu0 0.0
    %2144 = vmatpush1.xpose.msra.mxu0 0.0
    %2145 = vmatprep.subr.mxu0 0.0
    %2146 = vmatpush1.xpose.msra.mxu0 0.0
    %2147 = vmatprep.subr.mxu0 0.0
    %2148 = vmatpush1.xpose.msra.mxu0 0.0
    %2149 = vmatprep.subr.mxu0 0.0
    %2150 = vmatpush1.xpose.msra.mxu0 0.0
    %2151 = vmatprep.subr.mxu0 0.0
    %2152 = vmatpush1.xpose.msra.mxu0 0.0
    %2153 = vmatprep.subr.mxu0 0.0
    %2154 = vmatpush1.xpose.msra.mxu0 0.0
    %2155 = vmatprep.subr.mxu0 0.0
    %2156 = vmatpush1.xpose.msra.mxu0 0.0
    %2157 = vmatprep.subr.mxu0 0.0
    %2158 = vmatpush1.xpose.msra.mxu0 %v2125
    %2159 = vmatprep.subr.mxu0 0.0
    %2160 = vmatpush2.xpose.msra.mxu0 0.0
    %2161 = vmatprep.subr.mxu0 0.0
    %2162 = vmatpush2.xpose.msra.mxu0 0.0
    %2163 = vmatprep.subr.mxu0 0.0
    %2164 = vmatpush2.xpose.msra.mxu0 0.0
    %2165 = vmatprep.subr.mxu0 0.0
    %2166 = vmatpush2.xpose.msra.mxu0 0.0
    %2167 = vmatprep.subr.mxu0 0.0
    %2168 = vmatpush2.xpose.msra.mxu0 0.0
    %2169 = vmatprep.subr.mxu0 0.0
    %2170 = vmatpush2.xpose.msra.mxu0 0.0
    %2171 = vmatprep.subr.mxu0 0.0
    %2172 = vmatpush2.xpose.msra.mxu0 0.0
    %2173 = vmatprep.subr.mxu0 0.0
    %2174 = vmatpush2.xpose.msra.mxu0 0.0
    %2175 = vmatprep.subr.mxu0 0.0
    %2176 = vmatpush2.xpose.msra.mxu0 0.0
    %2177 = vmatprep.subr.mxu0 0.0
    %2178 = vmatpush2.xpose.msra.mxu0 0.0
    %2179 = vmatprep.subr.mxu0 0.0
    %2180 = vmatpush2.xpose.msra.mxu0 0.0
    %2181 = vmatprep.subr.mxu0 0.0
    %2182 = vmatpush2.xpose.msra.mxu0 0.0
    %2183 = vmatprep.subr.mxu0 0.0
    %2184 = vmatpush2.xpose.msra.mxu0 0.0
    %2185 = vmatprep.subr.mxu0 0.0
    %2186 = vmatpush2.xpose.msra.mxu0 0.0
    %2187 = vmatprep.subr.mxu0 0.0
    %2188 = vmatpush2.xpose.msra.mxu0 0.0
    %2189 = vmatprep.subr.mxu0 0.0
    %2190 = vmatpush2.xpose.msra.mxu0 0.0
    %2191 = vmatprep.mubr.f32.mxu0 0.0
    %2192 = vmatmul.mubr.f32.gmra.mxu0 %v2123
    %v2193 = vpop.f32.mrf.mxu0
    %v2194 = vadd.f32 0.0, %v2193
    %v2195 = vpop.f32.mrf.mxu0
    %2196 = vdwg.mxu0
    %v2197 = vsel %vm173, %v2117, -inf
    %2198 = vmax.xlane.f32.xlu0 %v2197
    %v2199 = vpop.xlane.xlu0 %2198
    %v2200 = vsel %vm173, %v2194, -inf
    %2201 = vmax.xlane.f32.xlu0 %v2200
    %v2202 = vpop.xlane.xlu0 %2201
    %v2203 = vsub.f32 %v2117, %v2199
    %v2204 = vsub.f32 %v2194, %v2202
    %v2205 = vmul.f32 %v2203, 1.442695
    %v2206 = vpow.pop %v2205
    %v2207 = vmul.f32 %v2204, 1.442695
    %v2208 = vpow.pop %v2207
    %v2209 = vsel %vm173, %v2206, 0.0
    %2210 = vadd.xlane.f32.xlu0 %v2209
    %v2211 = vpop.xlane.xlu0 %2210
    %v2212 = vsel %vm173, %v2208, 0.0
    %2213 = vadd.xlane.f32.xlu0 %v2212
    %v2214 = vpop.xlane.xlu0 %2213
    %v2215 = vrcp.pop %v2211
    %v2216 = vrcp.pop %v2214
    %v2217 = vmul.f32 %v2206, %v2215
    %v2218 = vmul.f32 %v2208, %v2216
    %2219 = vrot.lane.b32.xlu0 %v2035, 64
    %v2220 = vpop.permute.xlu0 %2219
    %v2223 = vsel %vm173, %v2217, 0
    %2225 = vmatprep.subr.mxu0 0.0
    %2226 = vmatpush1.msra.mxu0 0.0
    %2227 = vmatprep.subr.mxu0 0.0
    %2228 = vmatpush1.msra.mxu0 0.0
    %2229 = vmatprep.subr.mxu0 0.0
    %2230 = vmatpush1.msra.mxu0 0.0
    %2231 = vmatprep.subr.mxu0 0.0
    %2232 = vmatpush1.msra.mxu0 0.0
    %2233 = vmatprep.subr.mxu0 0.0
    %2234 = vmatpush1.msra.mxu0 0.0
    %2235 = vmatprep.subr.mxu0 0.0
    %2236 = vmatpush1.msra.mxu0 0.0
    %2237 = vmatprep.subr.mxu0 0.0
    %2238 = vmatpush1.msra.mxu0 0.0
    %2239 = vmatprep.subr.mxu0 0.0
    %2240 = vmatpush1.msra.mxu0 0.0
    %2241 = vmatprep.subr.mxu0 0.0
    %2242 = vmatpush1.msra.mxu0 0.0
    %2243 = vmatprep.subr.mxu0 0.0
    %2244 = vmatpush1.msra.mxu0 0.0
    %2245 = vmatprep.subr.mxu0 0.0
    %2246 = vmatpush1.msra.mxu0 0.0
    %2247 = vmatprep.subr.mxu0 0.0
    %2248 = vmatpush1.msra.mxu0 0.0
    %2249 = vmatprep.subr.mxu0 0.0
    %2250 = vmatpush1.msra.mxu0 0.0
    %2251 = vmatprep.subr.mxu0 0.0
    %2252 = vmatpush1.msra.mxu0 0.0
    %2253 = vmatprep.subr.mxu0 0.0
    %2254 = vmatpush1.msra.mxu0 0.0
    %2255 = vmatprep.subr.mxu0 0.0
    %2256 = vmatpush1.msra.mxu0 %v2220
    %2257 = vmatprep.subr.mxu0 0.0
    %2258 = vmatpush2.msra.mxu0 0.0
    %2259 = vmatprep.subr.mxu0 0.0
    %2260 = vmatpush2.msra.mxu0 0.0
    %2261 = vmatprep.subr.mxu0 0.0
    %2262 = vmatpush2.msra.mxu0 0.0
    %2263 = vmatprep.subr.mxu0 0.0
    %2264 = vmatpush2.msra.mxu0 0.0
    %2265 = vmatprep.subr.mxu0 0.0
    %2266 = vmatpush2.msra.mxu0 0.0
    %2267 = vmatprep.subr.mxu0 0.0
    %2268 = vmatpush2.msra.mxu0 0.0
    %2269 = vmatprep.subr.mxu0 0.0
    %2270 = vmatpush2.msra.mxu0 0.0
    %2271 = vmatprep.subr.mxu0 0.0
    %2272 = vmatpush2.msra.mxu0 0.0
    %2273 = vmatprep.subr.mxu0 0.0
    %2274 = vmatpush2.msra.mxu0 0.0
    %2275 = vmatprep.subr.mxu0 0.0
    %2276 = vmatpush2.msra.mxu0 0.0
    %2277 = vmatprep.subr.mxu0 0.0
    %2278 = vmatpush2.msra.mxu0 0.0
    %2279 = vmatprep.subr.mxu0 0.0
    %2280 = vmatpush2.msra.mxu0 0.0
    %2281 = vmatprep.subr.mxu0 0.0
    %2282 = vmatpush2.msra.mxu0 0.0
    %2283 = vmatprep.subr.mxu0 0.0
    %2284 = vmatpush2.msra.mxu0 0.0
    %2285 = vmatprep.subr.mxu0 0.0
    %2286 = vmatpush2.msra.mxu0 0.0
    %2287 = vmatprep.subr.mxu0 0.0
    %2288 = vmatpush2.msra.mxu0 0.0
    %2289 = vmatprep.mubr.f32.mxu0 0.0
    %2290 = vmatmul.mubr.f32.gmra.mxu0 %v2223
    %v2291 = vpop.f32.mrf.mxu0
    %v2292 = vadd.f32 0.0, %v2291
    %v2293 = vpop.f32.mrf.mxu0
    %2294 = vdwg.mxu0
    %2295 = vrot.lane.b32.xlu0 %v2040, 64
    %v2296 = vpop.permute.xlu0 %2295
    %v2299 = vsel %vm173, %v2218, 0
    %2301 = vmatprep.subr.mxu0 0.0
    %2302 = vmatpush1.msra.mxu0 0.0
    %2303 = vmatprep.subr.mxu0 0.0
    %2304 = vmatpush1.msra.mxu0 0.0
    %2305 = vmatprep.subr.mxu0 0.0
    %2306 = vmatpush1.msra.mxu0 0.0
    %2307 = vmatprep.subr.mxu0 0.0
    %2308 = vmatpush1.msra.mxu0 0.0
    %2309 = vmatprep.subr.mxu0 0.0
    %2310 = vmatpush1.msra.mxu0 0.0
    %2311 = vmatprep.subr.mxu0 0.0
    %2312 = vmatpush1.msra.mxu0 0.0
    %2313 = vmatprep.subr.mxu0 0.0
    %2314 = vmatpush1.msra.mxu0 0.0
    %2315 = vmatprep.subr.mxu0 0.0
    %2316 = vmatpush1.msra.mxu0 0.0
    %2317 = vmatprep.subr.mxu0 0.0
    %2318 = vmatpush1.msra.mxu0 0.0
    %2319 = vmatprep.subr.mxu0 0.0
    %2320 = vmatpush1.msra.mxu0 0.0
    %2321 = vmatprep.subr.mxu0 0.0
    %2322 = vmatpush1.msra.mxu0 0.0
    %2323 = vmatprep.subr.mxu0 0.0
    %2324 = vmatpush1.msra.mxu0 0.0
    %2325 = vmatprep.subr.mxu0 0.0
    %2326 = vmatpush1.msra.mxu0 0.0
    %2327 = vmatprep.subr.mxu0 0.0
    %2328 = vmatpush1.msra.mxu0 0.0
    %2329 = vmatprep.subr.mxu0 0.0
    %2330 = vmatpush1.msra.mxu0 0.0
    %2331 = vmatprep.subr.mxu0 0.0
    %2332 = vmatpush1.msra.mxu0 %v2296
    %2333 = vmatprep.subr.mxu0 0.0
    %2334 = vmatpush2.msra.mxu0 0.0
    %2335 = vmatprep.subr.mxu0 0.0
    %2336 = vmatpush2.msra.mxu0 0.0
    %2337 = vmatprep.subr.mxu0 0.0
    %2338 = vmatpush2.msra.mxu0 0.0
    %2339 = vmatprep.subr.mxu0 0.0
    %2340 = vmatpush2.msra.mxu0 0.0
    %2341 = vmatprep.subr.mxu0 0.0
    %2342 = vmatpush2.msra.mxu0 0.0
    %2343 = vmatprep.subr.mxu0 0.0
    %2344 = vmatpush2.msra.mxu0 0.0
    %2345 = vmatprep.subr.mxu0 0.0
    %2346 = vmatpush2.msra.mxu0 0.0
    %2347 = vmatprep.subr.mxu0 0.0
    %2348 = vmatpush2.msra.mxu0 0.0
    %2349 = vmatprep.subr.mxu0 0.0
    %2350 = vmatpush2.msra.mxu0 0.0
    %2351 = vmatprep.subr.mxu0 0.0
    %2352 = vmatpush2.msra.mxu0 0.0
    %2353 = vmatprep.subr.mxu0 0.0
    %2354 = vmatpush2.msra.mxu0 0.0
    %2355 = vmatprep.subr.mxu0 0.0
    %2356 = vmatpush2.msra.mxu0 0.0
    %2357 = vmatprep.subr.mxu0 0.0
    %2358 = vmatpush2.msra.mxu0 0.0
    %2359 = vmatprep.subr.mxu0 0.0
    %2360 = vmatpush2.msra.mxu0 0.0
    %2361 = vmatprep.subr.mxu0 0.0
    %2362 = vmatpush2.msra.mxu0 0.0
    %2363 = vmatprep.subr.mxu0 0.0
    %2364 = vmatpush2.msra.mxu0 0.0
    %2365 = vmatprep.mubr.f32.mxu0 0.0
    %2366 = vmatmul.mubr.f32.gmra.mxu0 %v2299
    %v2367 = vpop.f32.mrf.mxu0
    %v2368 = vadd.f32 0.0, %v2367
    %v2369 = vpop.f32.mrf.mxu0
    %2370 = vdwg.mxu0
    %2371 = vrot.lane.b32.xlu0 %v2035, 120
    %v2372 = vpop.permute.xlu0 %2371
    %2373 = vrot.lane.b32.xlu0 %v2035, 88
    %v2374 = vpop.permute.xlu0 %2373
    %v2375 = vsel %vm173, %v2372, 0
    %v2377 = vsel %vm173, %v2374, 0
    %2379 = vmatprep.subr.mxu0 0.0
    %2380 = vmatpush1.xpose.msra.mxu0 0.0
    %2381 = vmatprep.subr.mxu0 0.0
    %2382 = vmatpush1.xpose.msra.mxu0 0.0
    %2383 = vmatprep.subr.mxu0 0.0
    %2384 = vmatpush1.xpose.msra.mxu0 0.0
    %2385 = vmatprep.subr.mxu0 0.0
    %2386 = vmatpush1.xpose.msra.mxu0 0.0
    %2387 = vmatprep.subr.mxu0 0.0
    %2388 = vmatpush1.xpose.msra.mxu0 0.0
    %2389 = vmatprep.subr.mxu0 0.0
    %2390 = vmatpush1.xpose.msra.mxu0 0.0
    %2391 = vmatprep.subr.mxu0 0.0
    %2392 = vmatpush1.xpose.msra.mxu0 0.0
    %2393 = vmatprep.subr.mxu0 0.0
    %2394 = vmatpush1.xpose.msra.mxu0 0.0
    %2395 = vmatprep.subr.mxu0 0.0
    %2396 = vmatpush1.xpose.msra.mxu0 0.0
    %2397 = vmatprep.subr.mxu0 0.0
    %2398 = vmatpush1.xpose.msra.mxu0 0.0
    %2399 = vmatprep.subr.mxu0 0.0
    %2400 = vmatpush1.xpose.msra.mxu0 0.0
    %2401 = vmatprep.subr.mxu0 0.0
    %2402 = vmatpush1.xpose.msra.mxu0 0.0
    %2403 = vmatprep.subr.mxu0 0.0
    %2404 = vmatpush1.xpose.msra.mxu0 0.0
    %2405 = vmatprep.subr.mxu0 0.0
    %2406 = vmatpush1.xpose.msra.mxu0 0.0
    %2407 = vmatprep.subr.mxu0 0.0
    %2408 = vmatpush1.xpose.msra.mxu0 0.0
    %2409 = vmatprep.subr.mxu0 0.0
    %2410 = vmatpush1.xpose.msra.mxu0 %v2377
    %2411 = vmatprep.subr.mxu0 0.0
    %2412 = vmatpush2.xpose.msra.mxu0 0.0
    %2413 = vmatprep.subr.mxu0 0.0
    %2414 = vmatpush2.xpose.msra.mxu0 0.0
    %2415 = vmatprep.subr.mxu0 0.0
    %2416 = vmatpush2.xpose.msra.mxu0 0.0
    %2417 = vmatprep.subr.mxu0 0.0
    %2418 = vmatpush2.xpose.msra.mxu0 0.0
    %2419 = vmatprep.subr.mxu0 0.0
    %2420 = vmatpush2.xpose.msra.mxu0 0.0
    %2421 = vmatprep.subr.mxu0 0.0
    %2422 = vmatpush2.xpose.msra.mxu0 0.0
    %2423 = vmatprep.subr.mxu0 0.0
    %2424 = vmatpush2.xpose.msra.mxu0 0.0
    %2425 = vmatprep.subr.mxu0 0.0
    %2426 = vmatpush2.xpose.msra.mxu0 0.0
    %2427 = vmatprep.subr.mxu0 0.0
    %2428 = vmatpush2.xpose.msra.mxu0 0.0
    %2429 = vmatprep.subr.mxu0 0.0
    %2430 = vmatpush2.xpose.msra.mxu0 0.0
    %2431 = vmatprep.subr.mxu0 0.0
    %2432 = vmatpush2.xpose.msra.mxu0 0.0
    %2433 = vmatprep.subr.mxu0 0.0
    %2434 = vmatpush2.xpose.msra.mxu0 0.0
    %2435 = vmatprep.subr.mxu0 0.0
    %2436 = vmatpush2.xpose.msra.mxu0 0.0
    %2437 = vmatprep.subr.mxu0 0.0
    %2438 = vmatpush2.xpose.msra.mxu0 0.0
    %2439 = vmatprep.subr.mxu0 0.0
    %2440 = vmatpush2.xpose.msra.mxu0 0.0
    %2441 = vmatprep.subr.mxu0 0.0
    %2442 = vmatpush2.xpose.msra.mxu0 0.0
    %2443 = vmatprep.mubr.f32.mxu0 0.0
    %2444 = vmatmul.mubr.f32.gmra.mxu0 %v2375
    %v2445 = vpop.f32.mrf.mxu0
    %v2446 = vadd.f32 0.0, %v2445
    %v2447 = vpop.f32.mrf.mxu0
    %2448 = vdwg.mxu0
    %2449 = vrot.lane.b32.xlu0 %v2040, 120
    %v2450 = vpop.permute.xlu0 %2449
    %2451 = vrot.lane.b32.xlu0 %v2040, 88
    %v2452 = vpop.permute.xlu0 %2451
    %v2453 = vsel %vm173, %v2450, 0
    %v2455 = vsel %vm173, %v2452, 0
    %2457 = vmatprep.subr.mxu0 0.0
    %2458 = vmatpush1.xpose.msra.mxu0 0.0
    %2459 = vmatprep.subr.mxu0 0.0
    %2460 = vmatpush1.xpose.msra.mxu0 0.0
    %2461 = vmatprep.subr.mxu0 0.0
    %2462 = vmatpush1.xpose.msra.mxu0 0.0
    %2463 = vmatprep.subr.mxu0 0.0
    %2464 = vmatpush1.xpose.msra.mxu0 0.0
    %2465 = vmatprep.subr.mxu0 0.0
    %2466 = vmatpush1.xpose.msra.mxu0 0.0
    %2467 = vmatprep.subr.mxu0 0.0
    %2468 = vmatpush1.xpose.msra.mxu0 0.0
    %2469 = vmatprep.subr.mxu0 0.0
    %2470 = vmatpush1.xpose.msra.mxu0 0.0
    %2471 = vmatprep.subr.mxu0 0.0
    %2472 = vmatpush1.xpose.msra.mxu0 0.0
    %2473 = vmatprep.subr.mxu0 0.0
    %2474 = vmatpush1.xpose.msra.mxu0 0.0
    %2475 = vmatprep.subr.mxu0 0.0
    %2476 = vmatpush1.xpose.msra.mxu0 0.0
    %2477 = vmatprep.subr.mxu0 0.0
    %2478 = vmatpush1.xpose.msra.mxu0 0.0
    %2479 = vmatprep.subr.mxu0 0.0
    %2480 = vmatpush1.xpose.msra.mxu0 0.0
    %2481 = vmatprep.subr.mxu0 0.0
    %2482 = vmatpush1.xpose.msra.mxu0 0.0
    %2483 = vmatprep.subr.mxu0 0.0
    %2484 = vmatpush1.xpose.msra.mxu0 0.0
    %2485 = vmatprep.subr.mxu0 0.0
    %2486 = vmatpush1.xpose.msra.mxu0 0.0
    %2487 = vmatprep.subr.mxu0 0.0
    %2488 = vmatpush1.xpose.msra.mxu0 %v2455
    %2489 = vmatprep.subr.mxu0 0.0
    %2490 = vmatpush2.xpose.msra.mxu0 0.0
    %2491 = vmatprep.subr.mxu0 0.0
    %2492 = vmatpush2.xpose.msra.mxu0 0.0
    %2493 = vmatprep.subr.mxu0 0.0
    %2494 = vmatpush2.xpose.msra.mxu0 0.0
    %2495 = vmatprep.subr.mxu0 0.0
    %2496 = vmatpush2.xpose.msra.mxu0 0.0
    %2497 = vmatprep.subr.mxu0 0.0
    %2498 = vmatpush2.xpose.msra.mxu0 0.0
    %2499 = vmatprep.subr.mxu0 0.0
    %2500 = vmatpush2.xpose.msra.mxu0 0.0
    %2501 = vmatprep.subr.mxu0 0.0
    %2502 = vmatpush2.xpose.msra.mxu0 0.0
    %2503 = vmatprep.subr.mxu0 0.0
    %2504 = vmatpush2.xpose.msra.mxu0 0.0
    %2505 = vmatprep.subr.mxu0 0.0
    %2506 = vmatpush2.xpose.msra.mxu0 0.0
    %2507 = vmatprep.subr.mxu0 0.0
    %2508 = vmatpush2.xpose.msra.mxu0 0.0
    %2509 = vmatprep.subr.mxu0 0.0
    %2510 = vmatpush2.xpose.msra.mxu0 0.0
    %2511 = vmatprep.subr.mxu0 0.0
    %2512 = vmatpush2.xpose.msra.mxu0 0.0
    %2513 = vmatprep.subr.mxu0 0.0
    %2514 = vmatpush2.xpose.msra.mxu0 0.0
    %2515 = vmatprep.subr.mxu0 0.0
    %2516 = vmatpush2.xpose.msra.mxu0 0.0
    %2517 = vmatprep.subr.mxu0 0.0
    %2518 = vmatpush2.xpose.msra.mxu0 0.0
    %2519 = vmatprep.subr.mxu0 0.0
    %2520 = vmatpush2.xpose.msra.mxu0 0.0
    %2521 = vmatprep.mubr.f32.mxu0 0.0
    %2522 = vmatmul.mubr.f32.gmra.mxu0 %v2453
    %v2523 = vpop.f32.mrf.mxu0
    %v2524 = vadd.f32 0.0, %v2523
    %v2525 = vpop.f32.mrf.mxu0
    %2526 = vdwg.mxu0
    %v2527 = vsel %vm173, %v2446, -inf
    %2528 = vmax.xlane.f32.xlu0 %v2527
    %v2529 = vpop.xlane.xlu0 %2528
    %v2530 = vsel %vm173, %v2524, -inf
    %2531 = vmax.xlane.f32.xlu0 %v2530
    %v2532 = vpop.xlane.xlu0 %2531
    %v2533 = vsub.f32 %v2446, %v2529
    %v2534 = vsub.f32 %v2524, %v2532
    %v2535 = vmul.f32 %v2533, 1.442695
    %v2536 = vpow.pop %v2535
    %v2537 = vmul.f32 %v2534, 1.442695
    %v2538 = vpow.pop %v2537
    %v2539 = vsel %vm173, %v2536, 0.0
    %2540 = vadd.xlane.f32.xlu0 %v2539
    %v2541 = vpop.xlane.xlu0 %2540
    %v2542 = vsel %vm173, %v2538, 0.0
    %2543 = vadd.xlane.f32.xlu0 %v2542
    %v2544 = vpop.xlane.xlu0 %2543
    %v2545 = vrcp.pop %v2541
    %v2546 = vrcp.pop %v2544
    %v2547 = vmul.f32 %v2536, %v2545
    %v2548 = vmul.f32 %v2538, %v2546
    %2549 = vrot.lane.b32.xlu0 %v2035, 56
    %v2550 = vpop.permute.xlu0 %2549
    %v2553 = vsel %vm173, %v2547, 0
    %2555 = vmatprep.subr.mxu0 0.0
    %2556 = vmatpush1.msra.mxu0 0.0
    %2557 = vmatprep.subr.mxu0 0.0
    %2558 = vmatpush1.msra.mxu0 0.0
    %2559 = vmatprep.subr.mxu0 0.0
    %2560 = vmatpush1.msra.mxu0 0.0
    %2561 = vmatprep.subr.mxu0 0.0
    %2562 = vmatpush1.msra.mxu0 0.0
    %2563 = vmatprep.subr.mxu0 0.0
    %2564 = vmatpush1.msra.mxu0 0.0
    %2565 = vmatprep.subr.mxu0 0.0
    %2566 = vmatpush1.msra.mxu0 0.0
    %2567 = vmatprep.subr.mxu0 0.0
    %2568 = vmatpush1.msra.mxu0 0.0
    %2569 = vmatprep.subr.mxu0 0.0
    %2570 = vmatpush1.msra.mxu0 0.0
    %2571 = vmatprep.subr.mxu0 0.0
    %2572 = vmatpush1.msra.mxu0 0.0
    %2573 = vmatprep.subr.mxu0 0.0
    %2574 = vmatpush1.msra.mxu0 0.0
    %2575 = vmatprep.subr.mxu0 0.0
    %2576 = vmatpush1.msra.mxu0 0.0
    %2577 = vmatprep.subr.mxu0 0.0
    %2578 = vmatpush1.msra.mxu0 0.0
    %2579 = vmatprep.subr.mxu0 0.0
    %2580 = vmatpush1.msra.mxu0 0.0
    %2581 = vmatprep.subr.mxu0 0.0
    %2582 = vmatpush1.msra.mxu0 0.0
    %2583 = vmatprep.subr.mxu0 0.0
    %2584 = vmatpush1.msra.mxu0 0.0
    %2585 = vmatprep.subr.mxu0 0.0
    %2586 = vmatpush1.msra.mxu0 %v2550
    %2587 = vmatprep.subr.mxu0 0.0
    %2588 = vmatpush2.msra.mxu0 0.0
    %2589 = vmatprep.subr.mxu0 0.0
    %2590 = vmatpush2.msra.mxu0 0.0
    %2591 = vmatprep.subr.mxu0 0.0
    %2592 = vmatpush2.msra.mxu0 0.0
    %2593 = vmatprep.subr.mxu0 0.0
    %2594 = vmatpush2.msra.mxu0 0.0
    %2595 = vmatprep.subr.mxu0 0.0
    %2596 = vmatpush2.msra.mxu0 0.0
    %2597 = vmatprep.subr.mxu0 0.0
    %2598 = vmatpush2.msra.mxu0 0.0
    %2599 = vmatprep.subr.mxu0 0.0
    %2600 = vmatpush2.msra.mxu0 0.0
    %2601 = vmatprep.subr.mxu0 0.0
    %2602 = vmatpush2.msra.mxu0 0.0
    %2603 = vmatprep.subr.mxu0 0.0
    %2604 = vmatpush2.msra.mxu0 0.0
    %2605 = vmatprep.subr.mxu0 0.0
    %2606 = vmatpush2.msra.mxu0 0.0
    %2607 = vmatprep.subr.mxu0 0.0
    %2608 = vmatpush2.msra.mxu0 0.0
    %2609 = vmatprep.subr.mxu0 0.0
    %2610 = vmatpush2.msra.mxu0 0.0
    %2611 = vmatprep.subr.mxu0 0.0
    %2612 = vmatpush2.msra.mxu0 0.0
    %2613 = vmatprep.subr.mxu0 0.0
    %2614 = vmatpush2.msra.mxu0 0.0
    %2615 = vmatprep.subr.mxu0 0.0
    %2616 = vmatpush2.msra.mxu0 0.0
    %2617 = vmatprep.subr.mxu0 0.0
    %2618 = vmatpush2.msra.mxu0 0.0
    %2619 = vmatprep.mubr.f32.mxu0 0.0
    %2620 = vmatmul.mubr.f32.gmra.mxu0 %v2553
    %v2621 = vpop.f32.mrf.mxu0
    %v2622 = vadd.f32 0.0, %v2621
    %v2623 = vpop.f32.mrf.mxu0
    %2624 = vdwg.mxu0
    %2625 = vrot.lane.b32.xlu0 %v2040, 56
    %v2626 = vpop.permute.xlu0 %2625
    %v2629 = vsel %vm173, %v2548, 0
    %2631 = vmatprep.subr.mxu0 0.0
    %2632 = vmatpush1.msra.mxu0 0.0
    %2633 = vmatprep.subr.mxu0 0.0
    %2634 = vmatpush1.msra.mxu0 0.0
    %2635 = vmatprep.subr.mxu0 0.0
    %2636 = vmatpush1.msra.mxu0 0.0
    %2637 = vmatprep.subr.mxu0 0.0
    %2638 = vmatpush1.msra.mxu0 0.0
    %2639 = vmatprep.subr.mxu0 0.0
    %2640 = vmatpush1.msra.mxu0 0.0
    %2641 = vmatprep.subr.mxu0 0.0
    %2642 = vmatpush1.msra.mxu0 0.0
    %2643 = vmatprep.subr.mxu0 0.0
    %2644 = vmatpush1.msra.mxu0 0.0
    %2645 = vmatprep.subr.mxu0 0.0
    %2646 = vmatpush1.msra.mxu0 0.0
    %2647 = vmatprep.subr.mxu0 0.0
    %2648 = vmatpush1.msra.mxu0 0.0
    %2649 = vmatprep.subr.mxu0 0.0
    %2650 = vmatpush1.msra.mxu0 0.0
    %2651 = vmatprep.subr.mxu0 0.0
    %2652 = vmatpush1.msra.mxu0 0.0
    %2653 = vmatprep.subr.mxu0 0.0
    %2654 = vmatpush1.msra.mxu0 0.0
    %2655 = vmatprep.subr.mxu0 0.0
    %2656 = vmatpush1.msra.mxu0 0.0
    %2657 = vmatprep.subr.mxu0 0.0
    %2658 = vmatpush1.msra.mxu0 0.0
    %2659 = vmatprep.subr.mxu0 0.0
    %2660 = vmatpush1.msra.mxu0 0.0
    %2661 = vmatprep.subr.mxu0 0.0
    %2662 = vmatpush1.msra.mxu0 %v2626
    %2663 = vmatprep.subr.mxu0 0.0
    %2664 = vmatpush2.msra.mxu0 0.0
    %2665 = vmatprep.subr.mxu0 0.0
    %2666 = vmatpush2.msra.mxu0 0.0
    %2667 = vmatprep.subr.mxu0 0.0
    %2668 = vmatpush2.msra.mxu0 0.0
    %2669 = vmatprep.subr.mxu0 0.0
    %2670 = vmatpush2.msra.mxu0 0.0
    %2671 = vmatprep.subr.mxu0 0.0
    %2672 = vmatpush2.msra.mxu0 0.0
    %2673 = vmatprep.subr.mxu0 0.0
    %2674 = vmatpush2.msra.mxu0 0.0
    %2675 = vmatprep.subr.mxu0 0.0
    %2676 = vmatpush2.msra.mxu0 0.0
    %2677 = vmatprep.subr.mxu0 0.0
    %2678 = vmatpush2.msra.mxu0 0.0
    %2679 = vmatprep.subr.mxu0 0.0
    %2680 = vmatpush2.msra.mxu0 0.0
    %2681 = vmatprep.subr.mxu0 0.0
    %2682 = vmatpush2.msra.mxu0 0.0
    %2683 = vmatprep.subr.mxu0 0.0
    %2684 = vmatpush2.msra.mxu0 0.0
    %2685 = vmatprep.subr.mxu0 0.0
    %2686 = vmatpush2.msra.mxu0 0.0
    %2687 = vmatprep.subr.mxu0 0.0
    %2688 = vmatpush2.msra.mxu0 0.0
    %2689 = vmatprep.subr.mxu0 0.0
    %2690 = vmatpush2.msra.mxu0 0.0
    %2691 = vmatprep.subr.mxu0 0.0
    %2692 = vmatpush2.msra.mxu0 0.0
    %2693 = vmatprep.subr.mxu0 0.0
    %2694 = vmatpush2.msra.mxu0 0.0
    %2695 = vmatprep.mubr.f32.mxu0 0.0
    %2696 = vmatmul.mubr.f32.gmra.mxu0 %v2629
    %v2697 = vpop.f32.mrf.mxu0
    %v2698 = vadd.f32 0.0, %v2697
    %v2699 = vpop.f32.mrf.mxu0
    %2700 = vdwg.mxu0
    %2701 = vrot.lane.b32.xlu0 %v2035, 112
    %v2702 = vpop.permute.xlu0 %2701
    %2703 = vrot.lane.b32.xlu0 %v2035, 80
    %v2704 = vpop.permute.xlu0 %2703
    %v2705 = vsel %vm173, %v2702, 0
    %v2707 = vsel %vm173, %v2704, 0
    %2709 = vmatprep.subr.mxu0 0.0
    %2710 = vmatpush1.xpose.msra.mxu0 0.0
    %2711 = vmatprep.subr.mxu0 0.0
    %2712 = vmatpush1.xpose.msra.mxu0 0.0
    %2713 = vmatprep.subr.mxu0 0.0
    %2714 = vmatpush1.xpose.msra.mxu0 0.0
    %2715 = vmatprep.subr.mxu0 0.0
    %2716 = vmatpush1.xpose.msra.mxu0 0.0
    %2717 = vmatprep.subr.mxu0 0.0
    %2718 = vmatpush1.xpose.msra.mxu0 0.0
    %2719 = vmatprep.subr.mxu0 0.0
    %2720 = vmatpush1.xpose.msra.mxu0 0.0
    %2721 = vmatprep.subr.mxu0 0.0
    %2722 = vmatpush1.xpose.msra.mxu0 0.0
    %2723 = vmatprep.subr.mxu0 0.0
    %2724 = vmatpush1.xpose.msra.mxu0 0.0
    %2725 = vmatprep.subr.mxu0 0.0
    %2726 = vmatpush1.xpose.msra.mxu0 0.0
    %2727 = vmatprep.subr.mxu0 0.0
    %2728 = vmatpush1.xpose.msra.mxu0 0.0
    %2729 = vmatprep.subr.mxu0 0.0
    %2730 = vmatpush1.xpose.msra.mxu0 0.0
    %2731 = vmatprep.subr.mxu0 0.0
    %2732 = vmatpush1.xpose.msra.mxu0 0.0
    %2733 = vmatprep.subr.mxu0 0.0
    %2734 = vmatpush1.xpose.msra.mxu0 0.0
    %2735 = vmatprep.subr.mxu0 0.0
    %2736 = vmatpush1.xpose.msra.mxu0 0.0
    %2737 = vmatprep.subr.mxu0 0.0
    %2738 = vmatpush1.xpose.msra.mxu0 0.0
    %2739 = vmatprep.subr.mxu0 0.0
    %2740 = vmatpush1.xpose.msra.mxu0 %v2707
    %2741 = vmatprep.subr.mxu0 0.0
    %2742 = vmatpush2.xpose.msra.mxu0 0.0
    %2743 = vmatprep.subr.mxu0 0.0
    %2744 = vmatpush2.xpose.msra.mxu0 0.0
    %2745 = vmatprep.subr.mxu0 0.0
    %2746 = vmatpush2.xpose.msra.mxu0 0.0
    %2747 = vmatprep.subr.mxu0 0.0
    %2748 = vmatpush2.xpose.msra.mxu0 0.0
    %2749 = vmatprep.subr.mxu0 0.0
    %2750 = vmatpush2.xpose.msra.mxu0 0.0
    %2751 = vmatprep.subr.mxu0 0.0
    %2752 = vmatpush2.xpose.msra.mxu0 0.0
    %2753 = vmatprep.subr.mxu0 0.0
    %2754 = vmatpush2.xpose.msra.mxu0 0.0
    %2755 = vmatprep.subr.mxu0 0.0
    %2756 = vmatpush2.xpose.msra.mxu0 0.0
    %2757 = vmatprep.subr.mxu0 0.0
    %2758 = vmatpush2.xpose.msra.mxu0 0.0
    %2759 = vmatprep.subr.mxu0 0.0
    %2760 = vmatpush2.xpose.msra.mxu0 0.0
    %2761 = vmatprep.subr.mxu0 0.0
    %2762 = vmatpush2.xpose.msra.mxu0 0.0
    %2763 = vmatprep.subr.mxu0 0.0
    %2764 = vmatpush2.xpose.msra.mxu0 0.0
    %2765 = vmatprep.subr.mxu0 0.0
    %2766 = vmatpush2.xpose.msra.mxu0 0.0
    %2767 = vmatprep.subr.mxu0 0.0
    %2768 = vmatpush2.xpose.msra.mxu0 0.0
    %2769 = vmatprep.subr.mxu0 0.0
    %2770 = vmatpush2.xpose.msra.mxu0 0.0
    %2771 = vmatprep.subr.mxu0 0.0
    %2772 = vmatpush2.xpose.msra.mxu0 0.0
    %2773 = vmatprep.mubr.f32.mxu0 0.0
    %2774 = vmatmul.mubr.f32.gmra.mxu0 %v2705
    %v2775 = vpop.f32.mrf.mxu0
    %v2776 = vadd.f32 0.0, %v2775
    %v2777 = vpop.f32.mrf.mxu0
    %2778 = vdwg.mxu0
    %2779 = vrot.lane.b32.xlu0 %v2040, 112
    %v2780 = vpop.permute.xlu0 %2779
    %2781 = vrot.lane.b32.xlu0 %v2040, 80
    %v2782 = vpop.permute.xlu0 %2781
    %v2783 = vsel %vm173, %v2780, 0
    %v2785 = vsel %vm173, %v2782, 0
    %2787 = vmatprep.subr.mxu0 0.0
    %2788 = vmatpush1.xpose.msra.mxu0 0.0
    %2789 = vmatprep.subr.mxu0 0.0
    %2790 = vmatpush1.xpose.msra.mxu0 0.0
    %2791 = vmatprep.subr.mxu0 0.0
    %2792 = vmatpush1.xpose.msra.mxu0 0.0
    %2793 = vmatprep.subr.mxu0 0.0
    %2794 = vmatpush1.xpose.msra.mxu0 0.0
    %2795 = vmatprep.subr.mxu0 0.0
    %2796 = vmatpush1.xpose.msra.mxu0 0.0
    %2797 = vmatprep.subr.mxu0 0.0
    %2798 = vmatpush1.xpose.msra.mxu0 0.0
    %2799 = vmatprep.subr.mxu0 0.0
    %2800 = vmatpush1.xpose.msra.mxu0 0.0
    %2801 = vmatprep.subr.mxu0 0.0
    %2802 = vmatpush1.xpose.msra.mxu0 0.0
    %2803 = vmatprep.subr.mxu0 0.0
    %2804 = vmatpush1.xpose.msra.mxu0 0.0
    %2805 = vmatprep.subr.mxu0 0.0
    %2806 = vmatpush1.xpose.msra.mxu0 0.0
    %2807 = vmatprep.subr.mxu0 0.0
    %2808 = vmatpush1.xpose.msra.mxu0 0.0
    %2809 = vmatprep.subr.mxu0 0.0
    %2810 = vmatpush1.xpose.msra.mxu0 0.0
    %2811 = vmatprep.subr.mxu0 0.0
    %2812 = vmatpush1.xpose.msra.mxu0 0.0
    %2813 = vmatprep.subr.mxu0 0.0
    %2814 = vmatpush1.xpose.msra.mxu0 0.0
    %2815 = vmatprep.subr.mxu0 0.0
    %2816 = vmatpush1.xpose.msra.mxu0 0.0
    %2817 = vmatprep.subr.mxu0 0.0
    %2818 = vmatpush1.xpose.msra.mxu0 %v2785
    %2819 = vmatprep.subr.mxu0 0.0
    %2820 = vmatpush2.xpose.msra.mxu0 0.0
    %2821 = vmatprep.subr.mxu0 0.0
    %2822 = vmatpush2.xpose.msra.mxu0 0.0
    %2823 = vmatprep.subr.mxu0 0.0
    %2824 = vmatpush2.xpose.msra.mxu0 0.0
    %2825 = vmatprep.subr.mxu0 0.0
    %2826 = vmatpush2.xpose.msra.mxu0 0.0
    %2827 = vmatprep.subr.mxu0 0.0
    %2828 = vmatpush2.xpose.msra.mxu0 0.0
    %2829 = vmatprep.subr.mxu0 0.0
    %2830 = vmatpush2.xpose.msra.mxu0 0.0
    %2831 = vmatprep.subr.mxu0 0.0
    %2832 = vmatpush2.xpose.msra.mxu0 0.0
    %2833 = vmatprep.subr.mxu0 0.0
    %2834 = vmatpush2.xpose.msra.mxu0 0.0
    %2835 = vmatprep.subr.mxu0 0.0
    %2836 = vmatpush2.xpose.msra.mxu0 0.0
    %2837 = vmatprep.subr.mxu0 0.0
    %2838 = vmatpush2.xpose.msra.mxu0 0.0
    %2839 = vmatprep.subr.mxu0 0.0
    %2840 = vmatpush2.xpose.msra.mxu0 0.0
    %2841 = vmatprep.subr.mxu0 0.0
    %2842 = vmatpush2.xpose.msra.mxu0 0.0
    %2843 = vmatprep.subr.mxu0 0.0
    %2844 = vmatpush2.xpose.msra.mxu0 0.0
    %2845 = vmatprep.subr.mxu0 0.0
    %2846 = vmatpush2.xpose.msra.mxu0 0.0
    %2847 = vmatprep.subr.mxu0 0.0
    %2848 = vmatpush2.xpose.msra.mxu0 0.0
    %2849 = vmatprep.subr.mxu0 0.0
    %2850 = vmatpush2.xpose.msra.mxu0 0.0
    %2851 = vmatprep.mubr.f32.mxu0 0.0
    %2852 = vmatmul.mubr.f32.gmra.mxu0 %v2783
    %v2853 = vpop.f32.mrf.mxu0
    %v2854 = vadd.f32 0.0, %v2853
    %v2855 = vpop.f32.mrf.mxu0
    %2856 = vdwg.mxu0
    %v2857 = vsel %vm173, %v2776, -inf
    %2858 = vmax.xlane.f32.xlu0 %v2857
    %v2859 = vpop.xlane.xlu0 %2858
    %v2860 = vsel %vm173, %v2854, -inf
    %2861 = vmax.xlane.f32.xlu0 %v2860
    %v2862 = vpop.xlane.xlu0 %2861
    %v2863 = vsub.f32 %v2776, %v2859
    %v2864 = vsub.f32 %v2854, %v2862
    %v2865 = vmul.f32 %v2863, 1.442695
    %v2866 = vpow.pop %v2865
    %v2867 = vmul.f32 %v2864, 1.442695
    %v2868 = vpow.pop %v2867
    %v2869 = vsel %vm173, %v2866, 0.0
    %2870 = vadd.xlane.f32.xlu0 %v2869
    %v2871 = vpop.xlane.xlu0 %2870
    %v2872 = vsel %vm173, %v2868, 0.0
    %2873 = vadd.xlane.f32.xlu0 %v2872
    %v2874 = vpop.xlane.xlu0 %2873
    %v2875 = vrcp.pop %v2871
    %v2876 = vrcp.pop %v2874
    %v2877 = vmul.f32 %v2866, %v2875
    %v2878 = vmul.f32 %v2868, %v2876
    %2879 = vrot.lane.b32.xlu0 %v2035, 48
    %v2880 = vpop.permute.xlu0 %2879
    %v2883 = vsel %vm173, %v2877, 0
    %2885 = vmatprep.subr.mxu0 0.0
    %2886 = vmatpush1.msra.mxu0 0.0
    %2887 = vmatprep.subr.mxu0 0.0
    %2888 = vmatpush1.msra.mxu0 0.0
    %2889 = vmatprep.subr.mxu0 0.0
    %2890 = vmatpush1.msra.mxu0 0.0
    %2891 = vmatprep.subr.mxu0 0.0
    %2892 = vmatpush1.msra.mxu0 0.0
    %2893 = vmatprep.subr.mxu0 0.0
    %2894 = vmatpush1.msra.mxu0 0.0
    %2895 = vmatprep.subr.mxu0 0.0
    %2896 = vmatpush1.msra.mxu0 0.0
    %2897 = vmatprep.subr.mxu0 0.0
    %2898 = vmatpush1.msra.mxu0 0.0
    %2899 = vmatprep.subr.mxu0 0.0
    %2900 = vmatpush1.msra.mxu0 0.0
    %2901 = vmatprep.subr.mxu0 0.0
    %2902 = vmatpush1.msra.mxu0 0.0
    %2903 = vmatprep.subr.mxu0 0.0
    %2904 = vmatpush1.msra.mxu0 0.0
    %2905 = vmatprep.subr.mxu0 0.0
    %2906 = vmatpush1.msra.mxu0 0.0
    %2907 = vmatprep.subr.mxu0 0.0
    %2908 = vmatpush1.msra.mxu0 0.0
    %2909 = vmatprep.subr.mxu0 0.0
    %2910 = vmatpush1.msra.mxu0 0.0
    %2911 = vmatprep.subr.mxu0 0.0
    %2912 = vmatpush1.msra.mxu0 0.0
    %2913 = vmatprep.subr.mxu0 0.0
    %2914 = vmatpush1.msra.mxu0 0.0
    %2915 = vmatprep.subr.mxu0 0.0
    %2916 = vmatpush1.msra.mxu0 %v2880
    %2917 = vmatprep.subr.mxu0 0.0
    %2918 = vmatpush2.msra.mxu0 0.0
    %2919 = vmatprep.subr.mxu0 0.0
    %2920 = vmatpush2.msra.mxu0 0.0
    %2921 = vmatprep.subr.mxu0 0.0
    %2922 = vmatpush2.msra.mxu0 0.0
    %2923 = vmatprep.subr.mxu0 0.0
    %2924 = vmatpush2.msra.mxu0 0.0
    %2925 = vmatprep.subr.mxu0 0.0
    %2926 = vmatpush2.msra.mxu0 0.0
    %2927 = vmatprep.subr.mxu0 0.0
    %2928 = vmatpush2.msra.mxu0 0.0
    %2929 = vmatprep.subr.mxu0 0.0
    %2930 = vmatpush2.msra.mxu0 0.0
    %2931 = vmatprep.subr.mxu0 0.0
    %2932 = vmatpush2.msra.mxu0 0.0
    %2933 = vmatprep.subr.mxu0 0.0
    %2934 = vmatpush2.msra.mxu0 0.0
    %2935 = vmatprep.subr.mxu0 0.0
    %2936 = vmatpush2.msra.mxu0 0.0
    %2937 = vmatprep.subr.mxu0 0.0
    %2938 = vmatpush2.msra.mxu0 0.0
    %2939 = vmatprep.subr.mxu0 0.0
    %2940 = vmatpush2.msra.mxu0 0.0
    %2941 = vmatprep.subr.mxu0 0.0
    %2942 = vmatpush2.msra.mxu0 0.0
    %2943 = vmatprep.subr.mxu0 0.0
    %2944 = vmatpush2.msra.mxu0 0.0
    %2945 = vmatprep.subr.mxu0 0.0
    %2946 = vmatpush2.msra.mxu0 0.0
    %2947 = vmatprep.subr.mxu0 0.0
    %2948 = vmatpush2.msra.mxu0 0.0
    %2949 = vmatprep.mubr.f32.mxu0 0.0
    %2950 = vmatmul.mubr.f32.gmra.mxu0 %v2883
    %v2951 = vpop.f32.mrf.mxu0
    %v2952 = vadd.f32 0.0, %v2951
    %v2953 = vpop.f32.mrf.mxu0
    %2954 = vdwg.mxu0
    %2955 = vrot.lane.b32.xlu0 %v2040, 48
    %v2956 = vpop.permute.xlu0 %2955
    %v2959 = vsel %vm173, %v2878, 0
    %2961 = vmatprep.subr.mxu0 0.0
    %2962 = vmatpush1.msra.mxu0 0.0
    %2963 = vmatprep.subr.mxu0 0.0
    %2964 = vmatpush1.msra.mxu0 0.0
    %2965 = vmatprep.subr.mxu0 0.0
    %2966 = vmatpush1.msra.mxu0 0.0
    %2967 = vmatprep.subr.mxu0 0.0
    %2968 = vmatpush1.msra.mxu0 0.0
    %2969 = vmatprep.subr.mxu0 0.0
    %2970 = vmatpush1.msra.mxu0 0.0
    %2971 = vmatprep.subr.mxu0 0.0
    %2972 = vmatpush1.msra.mxu0 0.0
    %2973 = vmatprep.subr.mxu0 0.0
    %2974 = vmatpush1.msra.mxu0 0.0
    %2975 = vmatprep.subr.mxu0 0.0
    %2976 = vmatpush1.msra.mxu0 0.0
    %2977 = vmatprep.subr.mxu0 0.0
    %2978 = vmatpush1.msra.mxu0 0.0
    %2979 = vmatprep.subr.mxu0 0.0
    %2980 = vmatpush1.msra.mxu0 0.0
    %2981 = vmatprep.subr.mxu0 0.0
    %2982 = vmatpush1.msra.mxu0 0.0
    %2983 = vmatprep.subr.mxu0 0.0
    %2984 = vmatpush1.msra.mxu0 0.0
    %2985 = vmatprep.subr.mxu0 0.0
    %2986 = vmatpush1.msra.mxu0 0.0
    %2987 = vmatprep.subr.mxu0 0.0
    %2988 = vmatpush1.msra.mxu0 0.0
    %2989 = vmatprep.subr.mxu0 0.0
    %2990 = vmatpush1.msra.mxu0 0.0
    %2991 = vmatprep.subr.mxu0 0.0
    %2992 = vmatpush1.msra.mxu0 %v2956
    %2993 = vmatprep.subr.mxu0 0.0
    %2994 = vmatpush2.msra.mxu0 0.0
    %2995 = vmatprep.subr.mxu0 0.0
    %2996 = vmatpush2.msra.mxu0 0.0
    %2997 = vmatprep.subr.mxu0 0.0
    %2998 = vmatpush2.msra.mxu0 0.0
    %2999 = vmatprep.subr.mxu0 0.0
    %3000 = vmatpush2.msra.mxu0 0.0
    %3001 = vmatprep.subr.mxu0 0.0
    %3002 = vmatpush2.msra.mxu0 0.0
    %3003 = vmatprep.subr.mxu0 0.0
    %3004 = vmatpush2.msra.mxu0 0.0
    %3005 = vmatprep.subr.mxu0 0.0
    %3006 = vmatpush2.msra.mxu0 0.0
    %3007 = vmatprep.subr.mxu0 0.0
    %3008 = vmatpush2.msra.mxu0 0.0
    %3009 = vmatprep.subr.mxu0 0.0
    %3010 = vmatpush2.msra.mxu0 0.0
    %3011 = vmatprep.subr.mxu0 0.0
    %3012 = vmatpush2.msra.mxu0 0.0
    %3013 = vmatprep.subr.mxu0 0.0
    %3014 = vmatpush2.msra.mxu0 0.0
    %3015 = vmatprep.subr.mxu0 0.0
    %3016 = vmatpush2.msra.mxu0 0.0
    %3017 = vmatprep.subr.mxu0 0.0
    %3018 = vmatpush2.msra.mxu0 0.0
    %3019 = vmatprep.subr.mxu0 0.0
    %3020 = vmatpush2.msra.mxu0 0.0
    %3021 = vmatprep.subr.mxu0 0.0
    %3022 = vmatpush2.msra.mxu0 0.0
    %3023 = vmatprep.subr.mxu0 0.0
    %3024 = vmatpush2.msra.mxu0 0.0
    %3025 = vmatprep.mubr.f32.mxu0 0.0
    %3026 = vmatmul.mubr.f32.gmra.mxu0 %v2959
    %v3027 = vpop.f32.mrf.mxu0
    %v3028 = vadd.f32 0.0, %v3027
    %v3029 = vpop.f32.mrf.mxu0
    %3030 = vdwg.mxu0
    %3031 = vrot.lane.b32.xlu0 %v2035, 104
    %v3032 = vpop.permute.xlu0 %3031
    %3033 = vrot.lane.b32.xlu0 %v2035, 72
    %v3034 = vpop.permute.xlu0 %3033
    %v3035 = vsel %vm173, %v3032, 0
    %v3037 = vsel %vm173, %v3034, 0
    %3039 = vmatprep.subr.mxu0 0.0
    %3040 = vmatpush1.xpose.msra.mxu0 0.0
    %3041 = vmatprep.subr.mxu0 0.0
    %3042 = vmatpush1.xpose.msra.mxu0 0.0
    %3043 = vmatprep.subr.mxu0 0.0
    %3044 = vmatpush1.xpose.msra.mxu0 0.0
    %3045 = vmatprep.subr.mxu0 0.0
    %3046 = vmatpush1.xpose.msra.mxu0 0.0
    %3047 = vmatprep.subr.mxu0 0.0
    %3048 = vmatpush1.xpose.msra.mxu0 0.0
    %3049 = vmatprep.subr.mxu0 0.0
    %3050 = vmatpush1.xpose.msra.mxu0 0.0
    %3051 = vmatprep.subr.mxu0 0.0
    %3052 = vmatpush1.xpose.msra.mxu0 0.0
    %3053 = vmatprep.subr.mxu0 0.0
    %3054 = vmatpush1.xpose.msra.mxu0 0.0
    %3055 = vmatprep.subr.mxu0 0.0
    %3056 = vmatpush1.xpose.msra.mxu0 0.0
    %3057 = vmatprep.subr.mxu0 0.0
    %3058 = vmatpush1.xpose.msra.mxu0 0.0
    %3059 = vmatprep.subr.mxu0 0.0
    %3060 = vmatpush1.xpose.msra.mxu0 0.0
    %3061 = vmatprep.subr.mxu0 0.0
    %3062 = vmatpush1.xpose.msra.mxu0 0.0
    %3063 = vmatprep.subr.mxu0 0.0
    %3064 = vmatpush1.xpose.msra.mxu0 0.0
    %3065 = vmatprep.subr.mxu0 0.0
    %3066 = vmatpush1.xpose.msra.mxu0 0.0
    %3067 = vmatprep.subr.mxu0 0.0
    %3068 = vmatpush1.xpose.msra.mxu0 0.0
    %3069 = vmatprep.subr.mxu0 0.0
    %3070 = vmatpush1.xpose.msra.mxu0 %v3037
    %3071 = vmatprep.subr.mxu0 0.0
    %3072 = vmatpush2.xpose.msra.mxu0 0.0
    %3073 = vmatprep.subr.mxu0 0.0
    %3074 = vmatpush2.xpose.msra.mxu0 0.0
    %3075 = vmatprep.subr.mxu0 0.0
    %3076 = vmatpush2.xpose.msra.mxu0 0.0
    %3077 = vmatprep.subr.mxu0 0.0
    %3078 = vmatpush2.xpose.msra.mxu0 0.0
    %3079 = vmatprep.subr.mxu0 0.0
    %3080 = vmatpush2.xpose.msra.mxu0 0.0
    %3081 = vmatprep.subr.mxu0 0.0
    %3082 = vmatpush2.xpose.msra.mxu0 0.0
    %3083 = vmatprep.subr.mxu0 0.0
    %3084 = vmatpush2.xpose.msra.mxu0 0.0
    %3085 = vmatprep.subr.mxu0 0.0
    %3086 = vmatpush2.xpose.msra.mxu0 0.0
    %3087 = vmatprep.subr.mxu0 0.0
    %3088 = vmatpush2.xpose.msra.mxu0 0.0
    %3089 = vmatprep.subr.mxu0 0.0
    %3090 = vmatpush2.xpose.msra.mxu0 0.0
    %3091 = vmatprep.subr.mxu0 0.0
    %3092 = vmatpush2.xpose.msra.mxu0 0.0
    %3093 = vmatprep.subr.mxu0 0.0
    %3094 = vmatpush2.xpose.msra.mxu0 0.0
    %3095 = vmatprep.subr.mxu0 0.0
    %3096 = vmatpush2.xpose.msra.mxu0 0.0
    %3097 = vmatprep.subr.mxu0 0.0
    %3098 = vmatpush2.xpose.msra.mxu0 0.0
    %3099 = vmatprep.subr.mxu0 0.0
    %3100 = vmatpush2.xpose.msra.mxu0 0.0
    %3101 = vmatprep.subr.mxu0 0.0
    %3102 = vmatpush2.xpose.msra.mxu0 0.0
    %3103 = vmatprep.mubr.f32.mxu0 0.0
    %3104 = vmatmul.mubr.f32.gmra.mxu0 %v3035
    %v3105 = vpop.f32.mrf.mxu0
    %v3106 = vadd.f32 0.0, %v3105
    %v3107 = vpop.f32.mrf.mxu0
    %3108 = vdwg.mxu0
    %3109 = vrot.lane.b32.xlu0 %v2040, 104
    %v3110 = vpop.permute.xlu0 %3109
    %3111 = vrot.lane.b32.xlu0 %v2040, 72
    %v3112 = vpop.permute.xlu0 %3111
    %v3113 = vsel %vm173, %v3110, 0
    %v3115 = vsel %vm173, %v3112, 0
    %3117 = vmatprep.subr.mxu0 0.0
    %3118 = vmatpush1.xpose.msra.mxu0 0.0
    %3119 = vmatprep.subr.mxu0 0.0
    %3120 = vmatpush1.xpose.msra.mxu0 0.0
    %3121 = vmatprep.subr.mxu0 0.0
    %3122 = vmatpush1.xpose.msra.mxu0 0.0
    %3123 = vmatprep.subr.mxu0 0.0
    %3124 = vmatpush1.xpose.msra.mxu0 0.0
    %3125 = vmatprep.subr.mxu0 0.0
    %3126 = vmatpush1.xpose.msra.mxu0 0.0
    %3127 = vmatprep.subr.mxu0 0.0
    %3128 = vmatpush1.xpose.msra.mxu0 0.0
    %3129 = vmatprep.subr.mxu0 0.0
    %3130 = vmatpush1.xpose.msra.mxu0 0.0
    %3131 = vmatprep.subr.mxu0 0.0
    %3132 = vmatpush1.xpose.msra.mxu0 0.0
    %3133 = vmatprep.subr.mxu0 0.0
    %3134 = vmatpush1.xpose.msra.mxu0 0.0
    %3135 = vmatprep.subr.mxu0 0.0
    %3136 = vmatpush1.xpose.msra.mxu0 0.0
    %3137 = vmatprep.subr.mxu0 0.0
    %3138 = vmatpush1.xpose.msra.mxu0 0.0
    %3139 = vmatprep.subr.mxu0 0.0
    %3140 = vmatpush1.xpose.msra.mxu0 0.0
    %3141 = vmatprep.subr.mxu0 0.0
    %3142 = vmatpush1.xpose.msra.mxu0 0.0
    %3143 = vmatprep.subr.mxu0 0.0
    %3144 = vmatpush1.xpose.msra.mxu0 0.0
    %3145 = vmatprep.subr.mxu0 0.0
    %3146 = vmatpush1.xpose.msra.mxu0 0.0
    %3147 = vmatprep.subr.mxu0 0.0
    %3148 = vmatpush1.xpose.msra.mxu0 %v3115
    %3149 = vmatprep.subr.mxu0 0.0
    %3150 = vmatpush2.xpose.msra.mxu0 0.0
    %3151 = vmatprep.subr.mxu0 0.0
    %3152 = vmatpush2.xpose.msra.mxu0 0.0
    %3153 = vmatprep.subr.mxu0 0.0
    %3154 = vmatpush2.xpose.msra.mxu0 0.0
    %3155 = vmatprep.subr.mxu0 0.0
    %3156 = vmatpush2.xpose.msra.mxu0 0.0
    %3157 = vmatprep.subr.mxu0 0.0
    %3158 = vmatpush2.xpose.msra.mxu0 0.0
    %3159 = vmatprep.subr.mxu0 0.0
    %3160 = vmatpush2.xpose.msra.mxu0 0.0
    %3161 = vmatprep.subr.mxu0 0.0
    %3162 = vmatpush2.xpose.msra.mxu0 0.0
    %3163 = vmatprep.subr.mxu0 0.0
    %3164 = vmatpush2.xpose.msra.mxu0 0.0
    %3165 = vmatprep.subr.mxu0 0.0
    %3166 = vmatpush2.xpose.msra.mxu0 0.0
    %3167 = vmatprep.subr.mxu0 0.0
    %3168 = vmatpush2.xpose.msra.mxu0 0.0
    %3169 = vmatprep.subr.mxu0 0.0
    %3170 = vmatpush2.xpose.msra.mxu0 0.0
    %3171 = vmatprep.subr.mxu0 0.0
    %3172 = vmatpush2.xpose.msra.mxu0 0.0
    %3173 = vmatprep.subr.mxu0 0.0
    %3174 = vmatpush2.xpose.msra.mxu0 0.0
    %3175 = vmatprep.subr.mxu0 0.0
    %3176 = vmatpush2.xpose.msra.mxu0 0.0
    %3177 = vmatprep.subr.mxu0 0.0
    %3178 = vmatpush2.xpose.msra.mxu0 0.0
    %3179 = vmatprep.subr.mxu0 0.0
    %3180 = vmatpush2.xpose.msra.mxu0 0.0
    %3181 = vmatprep.mubr.f32.mxu0 0.0
    %3182 = vmatmul.mubr.f32.gmra.mxu0 %v3113
    %v3183 = vpop.f32.mrf.mxu0
    %v3184 = vadd.f32 0.0, %v3183
    %v3185 = vpop.f32.mrf.mxu0
    %3186 = vdwg.mxu0
    %v3187 = vsel %vm173, %v3106, -inf
    %3188 = vmax.xlane.f32.xlu0 %v3187
    %v3189 = vpop.xlane.xlu0 %3188
    %v3190 = vsel %vm173, %v3184, -inf
    %3191 = vmax.xlane.f32.xlu0 %v3190
    %v3192 = vpop.xlane.xlu0 %3191
    %v3193 = vsub.f32 %v3106, %v3189
    %v3194 = vsub.f32 %v3184, %v3192
    %v3195 = vmul.f32 %v3193, 1.442695
    %v3196 = vpow.pop %v3195
    %v3197 = vmul.f32 %v3194, 1.442695
    %v3198 = vpow.pop %v3197
    %v3199 = vsel %vm173, %v3196, 0.0
    %3200 = vadd.xlane.f32.xlu0 %v3199
    %v3201 = vpop.xlane.xlu0 %3200
    %v3202 = vsel %vm173, %v3198, 0.0
    %3203 = vadd.xlane.f32.xlu0 %v3202
    %v3204 = vpop.xlane.xlu0 %3203
    %v3205 = vrcp.pop %v3201
    %v3206 = vrcp.pop %v3204
    %v3207 = vmul.f32 %v3196, %v3205
    %v3208 = vmul.f32 %v3198, %v3206
    %3209 = vrot.lane.b32.xlu0 %v2035, 40
    %v3210 = vpop.permute.xlu0 %3209
    %v3213 = vsel %vm173, %v3207, 0
    %3215 = vmatprep.subr.mxu0 0.0
    %3216 = vmatpush1.msra.mxu0 0.0
    %3217 = vmatprep.subr.mxu0 0.0
    %3218 = vmatpush1.msra.mxu0 0.0
    %3219 = vmatprep.subr.mxu0 0.0
    %3220 = vmatpush1.msra.mxu0 0.0
    %3221 = vmatprep.subr.mxu0 0.0
    %3222 = vmatpush1.msra.mxu0 0.0
    %3223 = vmatprep.subr.mxu0 0.0
    %3224 = vmatpush1.msra.mxu0 0.0
    %3225 = vmatprep.subr.mxu0 0.0
    %3226 = vmatpush1.msra.mxu0 0.0
    %3227 = vmatprep.subr.mxu0 0.0
    %3228 = vmatpush1.msra.mxu0 0.0
    %3229 = vmatprep.subr.mxu0 0.0
    %3230 = vmatpush1.msra.mxu0 0.0
    %3231 = vmatprep.subr.mxu0 0.0
    %3232 = vmatpush1.msra.mxu0 0.0
    %3233 = vmatprep.subr.mxu0 0.0
    %3234 = vmatpush1.msra.mxu0 0.0
    %3235 = vmatprep.subr.mxu0 0.0
    %3236 = vmatpush1.msra.mxu0 0.0
    %3237 = vmatprep.subr.mxu0 0.0
    %3238 = vmatpush1.msra.mxu0 0.0
    %3239 = vmatprep.subr.mxu0 0.0
    %3240 = vmatpush1.msra.mxu0 0.0
    %3241 = vmatprep.subr.mxu0 0.0
    %3242 = vmatpush1.msra.mxu0 0.0
    %3243 = vmatprep.subr.mxu0 0.0
    %3244 = vmatpush1.msra.mxu0 0.0
    %3245 = vmatprep.subr.mxu0 0.0
    %3246 = vmatpush1.msra.mxu0 %v3210
    %3247 = vmatprep.subr.mxu0 0.0
    %3248 = vmatpush2.msra.mxu0 0.0
    %3249 = vmatprep.subr.mxu0 0.0
    %3250 = vmatpush2.msra.mxu0 0.0
    %3251 = vmatprep.subr.mxu0 0.0
    %3252 = vmatpush2.msra.mxu0 0.0
    %3253 = vmatprep.subr.mxu0 0.0
    %3254 = vmatpush2.msra.mxu0 0.0
    %3255 = vmatprep.subr.mxu0 0.0
    %3256 = vmatpush2.msra.mxu0 0.0
    %3257 = vmatprep.subr.mxu0 0.0
    %3258 = vmatpush2.msra.mxu0 0.0
    %3259 = vmatprep.subr.mxu0 0.0
    %3260 = vmatpush2.msra.mxu0 0.0
    %3261 = vmatprep.subr.mxu0 0.0
    %3262 = vmatpush2.msra.mxu0 0.0
    %3263 = vmatprep.subr.mxu0 0.0
    %3264 = vmatpush2.msra.mxu0 0.0
    %3265 = vmatprep.subr.mxu0 0.0
    %3266 = vmatpush2.msra.mxu0 0.0
    %3267 = vmatprep.subr.mxu0 0.0
    %3268 = vmatpush2.msra.mxu0 0.0
    %3269 = vmatprep.subr.mxu0 0.0
    %3270 = vmatpush2.msra.mxu0 0.0
    %3271 = vmatprep.subr.mxu0 0.0
    %3272 = vmatpush2.msra.mxu0 0.0
    %3273 = vmatprep.subr.mxu0 0.0
    %3274 = vmatpush2.msra.mxu0 0.0
    %3275 = vmatprep.subr.mxu0 0.0
    %3276 = vmatpush2.msra.mxu0 0.0
    %3277 = vmatprep.subr.mxu0 0.0
    %3278 = vmatpush2.msra.mxu0 0.0
    %3279 = vmatprep.mubr.f32.mxu0 0.0
    %3280 = vmatmul.mubr.f32.gmra.mxu0 %v3213
    %v3281 = vpop.f32.mrf.mxu0
    %v3282 = vadd.f32 0.0, %v3281
    %v3283 = vpop.f32.mrf.mxu0
    %3284 = vdwg.mxu0
    %3285 = vrot.lane.b32.xlu0 %v2040, 40
    %v3286 = vpop.permute.xlu0 %3285
    %v3289 = vsel %vm173, %v3208, 0
    %3291 = vmatprep.subr.mxu0 0.0
    %3292 = vmatpush1.msra.mxu0 0.0
    %3293 = vmatprep.subr.mxu0 0.0
    %3294 = vmatpush1.msra.mxu0 0.0
    %3295 = vmatprep.subr.mxu0 0.0
    %3296 = vmatpush1.msra.mxu0 0.0
    %3297 = vmatprep.subr.mxu0 0.0
    %3298 = vmatpush1.msra.mxu0 0.0
    %3299 = vmatprep.subr.mxu0 0.0
    %3300 = vmatpush1.msra.mxu0 0.0
    %3301 = vmatprep.subr.mxu0 0.0
    %3302 = vmatpush1.msra.mxu0 0.0
    %3303 = vmatprep.subr.mxu0 0.0
    %3304 = vmatpush1.msra.mxu0 0.0
    %3305 = vmatprep.subr.mxu0 0.0
    %3306 = vmatpush1.msra.mxu0 0.0
    %3307 = vmatprep.subr.mxu0 0.0
    %3308 = vmatpush1.msra.mxu0 0.0
    %3309 = vmatprep.subr.mxu0 0.0
    %3310 = vmatpush1.msra.mxu0 0.0
    %3311 = vmatprep.subr.mxu0 0.0
    %3312 = vmatpush1.msra.mxu0 0.0
    %3313 = vmatprep.subr.mxu0 0.0
    %3314 = vmatpush1.msra.mxu0 0.0
    %3315 = vmatprep.subr.mxu0 0.0
    %3316 = vmatpush1.msra.mxu0 0.0
    %3317 = vmatprep.subr.mxu0 0.0
    %3318 = vmatpush1.msra.mxu0 0.0
    %3319 = vmatprep.subr.mxu0 0.0
    %3320 = vmatpush1.msra.mxu0 0.0
    %3321 = vmatprep.subr.mxu0 0.0
    %3322 = vmatpush1.msra.mxu0 %v3286
    %3323 = vmatprep.subr.mxu0 0.0
    %3324 = vmatpush2.msra.mxu0 0.0
    %3325 = vmatprep.subr.mxu0 0.0
    %3326 = vmatpush2.msra.mxu0 0.0
    %3327 = vmatprep.subr.mxu0 0.0
    %3328 = vmatpush2.msra.mxu0 0.0
    %3329 = vmatprep.subr.mxu0 0.0
    %3330 = vmatpush2.msra.mxu0 0.0
    %3331 = vmatprep.subr.mxu0 0.0
    %3332 = vmatpush2.msra.mxu0 0.0
    %3333 = vmatprep.subr.mxu0 0.0
    %3334 = vmatpush2.msra.mxu0 0.0
    %3335 = vmatprep.subr.mxu0 0.0
    %3336 = vmatpush2.msra.mxu0 0.0
    %3337 = vmatprep.subr.mxu0 0.0
    %3338 = vmatpush2.msra.mxu0 0.0
    %3339 = vmatprep.subr.mxu0 0.0
    %3340 = vmatpush2.msra.mxu0 0.0
    %3341 = vmatprep.subr.mxu0 0.0
    %3342 = vmatpush2.msra.mxu0 0.0
    %3343 = vmatprep.subr.mxu0 0.0
    %3344 = vmatpush2.msra.mxu0 0.0
    %3345 = vmatprep.subr.mxu0 0.0
    %3346 = vmatpush2.msra.mxu0 0.0
    %3347 = vmatprep.subr.mxu0 0.0
    %3348 = vmatpush2.msra.mxu0 0.0
    %3349 = vmatprep.subr.mxu0 0.0
    %3350 = vmatpush2.msra.mxu0 0.0
    %3351 = vmatprep.subr.mxu0 0.0
    %3352 = vmatpush2.msra.mxu0 0.0
    %3353 = vmatprep.subr.mxu0 0.0
    %3354 = vmatpush2.msra.mxu0 0.0
    %3355 = vmatprep.mubr.f32.mxu0 0.0
    %3356 = vmatmul.mubr.f32.gmra.mxu0 %v3289
    %v3357 = vpop.f32.mrf.mxu0
    %v3358 = vadd.f32 0.0, %v3357
    %v3359 = vpop.f32.mrf.mxu0
    %3360 = vdwg.mxu0
    %3363 = vrot.lane.b32.xlu0 %v2622, 8
    %v3364 = vpop.permute.xlu0 %3363
    %3365 = vrot.lane.b32.xlu0 %v2698, 8
    %v3366 = vpop.permute.xlu0 %3365
    %3371 = vrot.lane.b32.xlu0 %v2952, 16
    %v3372 = vpop.permute.xlu0 %3371
    %3373 = vrot.lane.b32.xlu0 %v3028, 16
    %v3374 = vpop.permute.xlu0 %3373
    %3379 = vrot.lane.b32.xlu0 %v3282, 24
    %v3380 = vpop.permute.xlu0 %3379
    %3381 = vrot.lane.b32.xlu0 %v3358, 24
    %v3382 = vpop.permute.xlu0 %3381
    %v3385 = vsel %vm173, %v2292, %v3364
    %v3386 = vsel %vm173, %v2368, %v3366
    %v3387 = vsel %vm1515, %v3385, %v3372
    %v3388 = vsel %vm1515, %v3386, %v3374
    %v3389 = vsel %vm1518, %v3387, %v3380
    %v3390 = vsel %vm1518, %v3388, %v3382
    %v3391 = vlaneseq
    %v3392 = vshrl.u32 %v3391, 7
    %v3393 = vsub.s32 0, %v3392
    %v3394 = vrot.slane %v1951, %v3393
    %3399 = vrot.lane.b32.xlu0 %v1912, 32
    %v3400 = vpop.permute.xlu0 %3399
    %3401 = vrot.lane.b32.xlu0 %v1913, 32
    %v3402 = vpop.permute.xlu0 %3401
    %3403 = vrot.lane.b32.xlu0 %v1914, 32
    %v3404 = vpop.permute.xlu0 %3403
    %3405 = vrot.lane.b32.xlu0 %v1915, 32
    %v3406 = vpop.permute.xlu0 %3405
    %v3412 = vsel %vm88, %v3389, 0
    %v3415 = vsel %vm88, %v3390, 0
    %3417 = vmatprep.subr.mxu0 0.0
    %3418 = vmatpush1.msra.mxu0 0.0
    %3419 = vmatprep.subr.mxu0 0.0
    %3420 = vmatpush1.msra.mxu0 0.0
    %3421 = vmatprep.subr.mxu0 0.0
    %3422 = vmatpush1.msra.mxu0 0.0
    %3423 = vmatprep.subr.mxu0 0.0
    %3424 = vmatpush1.msra.mxu0 0.0
    %3425 = vmatprep.subr.mxu0 0.0
    %3426 = vmatpush1.msra.mxu0 0.0
    %3427 = vmatprep.subr.mxu0 0.0
    %3428 = vmatpush1.msra.mxu0 0.0
    %3429 = vmatprep.subr.mxu0 0.0
    %3430 = vmatpush1.msra.mxu0 0.0
    %3431 = vmatprep.subr.mxu0 0.0
    %3432 = vmatpush1.msra.mxu0 0.0
    %3433 = vmatprep.subr.mxu0 0.0
    %3434 = vmatpush1.msra.mxu0 0.0
    %3435 = vmatprep.subr.mxu0 0.0
    %3436 = vmatpush1.msra.mxu0 0.0
    %3437 = vmatprep.subr.mxu0 0.0
    %3438 = vmatpush1.msra.mxu0 0.0
    %3439 = vmatprep.subr.mxu0 0.0
    %3440 = vmatpush1.msra.mxu0 0.0
    %3441 = vmatprep.subr.mxu0 0.0
    %3442 = vmatpush1.msra.mxu0 %v3406
    %3443 = vmatprep.subr.mxu0 0.0
    %3444 = vmatpush1.msra.mxu0 %v3404
    %3445 = vmatprep.subr.mxu0 0.0
    %3446 = vmatpush1.msra.mxu0 %v3402
    %3447 = vmatprep.subr.mxu0 0.0
    %3448 = vmatpush1.msra.mxu0 %v3400
    %3449 = vmatprep.subr.mxu0 0.0
    %3450 = vmatpush2.msra.mxu0 0.0
    %3451 = vmatprep.subr.mxu0 0.0
    %3452 = vmatpush2.msra.mxu0 0.0
    %3453 = vmatprep.subr.mxu0 0.0
    %3454 = vmatpush2.msra.mxu0 0.0
    %3455 = vmatprep.subr.mxu0 0.0
    %3456 = vmatpush2.msra.mxu0 0.0
    %3457 = vmatprep.subr.mxu0 0.0
    %3458 = vmatpush2.msra.mxu0 0.0
    %3459 = vmatprep.subr.mxu0 0.0
    %3460 = vmatpush2.msra.mxu0 0.0
    %3461 = vmatprep.subr.mxu0 0.0
    %3462 = vmatpush2.msra.mxu0 0.0
    %3463 = vmatprep.subr.mxu0 0.0
    %3464 = vmatpush2.msra.mxu0 0.0
    %3465 = vmatprep.subr.mxu0 0.0
    %3466 = vmatpush2.msra.mxu0 0.0
    %3467 = vmatprep.subr.mxu0 0.0
    %3468 = vmatpush2.msra.mxu0 0.0
    %3469 = vmatprep.subr.mxu0 0.0
    %3470 = vmatpush2.msra.mxu0 0.0
    %3471 = vmatprep.subr.mxu0 0.0
    %3472 = vmatpush2.msra.mxu0 0.0
    %3473 = vmatprep.subr.mxu0 0.0
    %3474 = vmatpush2.msra.mxu0 0.0
    %3475 = vmatprep.subr.mxu0 0.0
    %3476 = vmatpush2.msra.mxu0 0.0
    %3477 = vmatprep.subr.mxu0 0.0
    %3478 = vmatpush2.msra.mxu0 0.0
    %3479 = vmatprep.subr.mxu0 0.0
    %3480 = vmatpush2.msra.mxu0 0.0
    %3481 = vmatprep.mubr.f32.mxu0 0.0
    %3482 = vmatmul.mubr.f32.gmra.mxu0 %v3412
    %v3483 = vpop.f32.mrf.mxu0
    %v3484 = vadd.f32 %v3394, %v3483
    %v3485 = vpop.f32.mrf.mxu0
    %3486 = vmatprep.mubr.f32.mxu0 0.0
    %3487 = vmatmul.mubr.f32.gmra.mxu0 %v3415
    %v3488 = vpop.f32.mrf.mxu0
    %v3489 = vadd.f32 %v3394, %v3488
    %v3490 = vpop.f32.mrf.mxu0
    %3491 = vdwg.mxu0
    %v3492 = vadd.f32 %v1906, %v3484
    %v3493 = vadd.f32 %v1907, %v3489
    %v3494 = vsel %vm88, %v3492, 0.0
    %3495 = vadd.xlane.f32.xlu0 %v3494
    %v3496 = vpop.xlane.xlu0 %3495
    %v3497 = vsel %vm88, %v3493, 0.0
    %3498 = vadd.xlane.f32.xlu0 %v3497
    %v3499 = vpop.xlane.xlu0 %3498
    %v3500 = vmul.f32 %v3496, %v1630
    %v3501 = vmul.f32 %v3499, %v1630
    %v3502 = vsub.f32 %v3492, %v3500
    %v3503 = vsub.f32 %v3493, %v3501
    %v3504 = vmul.f32 %v3502, %v3502
    %v3505 = vmul.f32 %v3503, %v3503
    %v3506 = vsel %vm88, %v3504, 0.0
    %3507 = vadd.xlane.f32.xlu0 %v3506
    %v3508 = vpop.xlane.xlu0 %3507
    %v3509 = vsel %vm88, %v3505, 0.0
    %3510 = vadd.xlane.f32.xlu0 %v3509
    %v3511 = vpop.xlane.xlu0 %3510
    %v3512 = vmul.f32 %v3508, %v1630
    %v3513 = vmul.f32 %v3511, %v1630
    %v3514 = vadd.f32 %v3512, 1e-05
    %v3515 = vadd.f32 %v3513, 1e-05
    %v3516 = vrsqrt.pop %v3514
    %v3517 = vrsqrt.pop %v3515
    %v3518 = vmul.f32 %v3502, %v3516
    %v3519 = vmul.f32 %v3503, %v3517
    %v3520 = vlaneseq
    %v3521 = vshrl.u32 %v3520, 7
    %v3522 = vsub.s32 0, %v3521
    %v3523 = vrot.slane %v1954, %v3522
    %v3524 = vmul.f32 %v3518, %v3523
    %v3525 = vmul.f32 %v3519, %v3523
    %v3526 = vlaneseq
    %v3527 = vshrl.u32 %v3526, 7
    %v3528 = vsub.s32 0, %v3527
    %v3529 = vrot.slane %v1955, %v3528
    %v3530 = vadd.f32 %v3524, %v3529
    %v3531 = vadd.f32 %v3525, %v3529
    %v3532 = vlaneseq
    %v3533 = vshrl.u32 %v3532, 7
    %v3534 = vsub.s32 0, %v3533
    %v3535 = vrot.slane %v1952, %v3534
    %v3537 = vsel %vm88, %v3530, 0
    %v3540 = vsel %vm88, %v3531, 0
    %3542 = vmatprep.subr.mxu0 0.0
    %3543 = vmatpush1.msra.mxu0 0.0
    %3544 = vmatprep.subr.mxu0 0.0
    %3545 = vmatpush1.msra.mxu0 0.0
    %3546 = vmatprep.subr.mxu0 0.0
    %3547 = vmatpush1.msra.mxu0 0.0
    %3548 = vmatprep.subr.mxu0 0.0
    %3549 = vmatpush1.msra.mxu0 0.0
    %3550 = vmatprep.subr.mxu0 0.0
    %3551 = vmatpush1.msra.mxu0 0.0
    %3552 = vmatprep.subr.mxu0 0.0
    %3553 = vmatpush1.msra.mxu0 0.0
    %3554 = vmatprep.subr.mxu0 0.0
    %3555 = vmatpush1.msra.mxu0 0.0
    %3556 = vmatprep.subr.mxu0 0.0
    %3557 = vmatpush1.msra.mxu0 0.0
    %3558 = vmatprep.subr.mxu0 0.0
    %3559 = vmatpush1.msra.mxu0 0.0
    %3560 = vmatprep.subr.mxu0 0.0
    %3561 = vmatpush1.msra.mxu0 0.0
    %3562 = vmatprep.subr.mxu0 0.0
    %3563 = vmatpush1.msra.mxu0 0.0
    %3564 = vmatprep.subr.mxu0 0.0
    %3565 = vmatpush1.msra.mxu0 0.0
    %3566 = vmatprep.subr.mxu0 0.0
    %3567 = vmatpush1.msra.mxu0 %v1923
    %3568 = vmatprep.subr.mxu0 0.0
    %3569 = vmatpush1.msra.mxu0 %v1922
    %3570 = vmatprep.subr.mxu0 0.0
    %3571 = vmatpush1.msra.mxu0 %v1921
    %3572 = vmatprep.subr.mxu0 0.0
    %3573 = vmatpush1.msra.mxu0 %v1920
    %3574 = vmatprep.subr.mxu0 0.0
    %3575 = vmatpush2.msra.mxu0 0.0
    %3576 = vmatprep.subr.mxu0 0.0
    %3577 = vmatpush2.msra.mxu0 0.0
    %3578 = vmatprep.subr.mxu0 0.0
    %3579 = vmatpush2.msra.mxu0 0.0
    %3580 = vmatprep.subr.mxu0 0.0
    %3581 = vmatpush2.msra.mxu0 0.0
    %3582 = vmatprep.subr.mxu0 0.0
    %3583 = vmatpush2.msra.mxu0 0.0
    %3584 = vmatprep.subr.mxu0 0.0
    %3585 = vmatpush2.msra.mxu0 0.0
    %3586 = vmatprep.subr.mxu0 0.0
    %3587 = vmatpush2.msra.mxu0 0.0
    %3588 = vmatprep.subr.mxu0 0.0
    %3589 = vmatpush2.msra.mxu0 0.0
    %3590 = vmatprep.subr.mxu0 0.0
    %3591 = vmatpush2.msra.mxu0 0.0
    %3592 = vmatprep.subr.mxu0 0.0
    %3593 = vmatpush2.msra.mxu0 0.0
    %3594 = vmatprep.subr.mxu0 0.0
    %3595 = vmatpush2.msra.mxu0 0.0
    %3596 = vmatprep.subr.mxu0 0.0
    %3597 = vmatpush2.msra.mxu0 0.0
    %3598 = vmatprep.subr.mxu0 0.0
    %3599 = vmatpush2.msra.mxu0 0.0
    %3600 = vmatprep.subr.mxu0 0.0
    %3601 = vmatpush2.msra.mxu0 0.0
    %3602 = vmatprep.subr.mxu0 0.0
    %3603 = vmatpush2.msra.mxu0 0.0
    %3604 = vmatprep.subr.mxu0 0.0
    %3605 = vmatpush2.msra.mxu0 0.0
    %3606 = vmatprep.mubr.f32.mxu0 0.0
    %3607 = vmatmul.mubr.f32.gmra.mxu0 %v3537
    %v3608 = vpop.f32.mrf.mxu0
    %v3609 = vadd.f32 %v3535, %v3608
    %v3610 = vpop.f32.mrf.mxu0
    %3611 = vmatprep.mubr.f32.mxu0 0.0
    %3612 = vmatmul.mubr.f32.gmra.mxu0 %v3540
    %v3613 = vpop.f32.mrf.mxu0
    %v3614 = vadd.f32 %v3535, %v3613
    %v3615 = vpop.f32.mrf.mxu0
    %3616 = vdwg.mxu0
    %v3617 = vmax.f32 %v3609, 0.0
    %v3618 = vmax.f32 %v3614, 0.0
    %v3619 = vlaneseq
    %v3620 = vshrl.u32 %v3619, 7
    %v3621 = vsub.s32 0, %v3620
    %v3622 = vrot.slane %v1953, %v3621
    %3631 = vrot.lane.b32.xlu0 %v1942, 64
    %v3632 = vpop.permute.xlu0 %3631
    %3633 = vrot.lane.b32.xlu0 %v1943, 64
    %v3634 = vpop.permute.xlu0 %3633
    %3635 = vrot.lane.b32.xlu0 %v1944, 64
    %v3636 = vpop.permute.xlu0 %3635
    %3637 = vrot.lane.b32.xlu0 %v1945, 64
    %v3638 = vpop.permute.xlu0 %3637
    %3639 = vrot.lane.b32.xlu0 %v1946, 64
    %v3640 = vpop.permute.xlu0 %3639
    %3641 = vrot.lane.b32.xlu0 %v1947, 64
    %v3642 = vpop.permute.xlu0 %3641
    %3643 = vrot.lane.b32.xlu0 %v1948, 64
    %v3644 = vpop.permute.xlu0 %3643
    %3645 = vrot.lane.b32.xlu0 %v1949, 64
    %v3646 = vpop.permute.xlu0 %3645
    %v3656 = vsel %vm1786, %v3617, 0
    %v3659 = vsel %vm1786, %v3618, 0
    %3661 = vmatprep.subr.mxu0 0.0
    %3662 = vmatpush1.msra.mxu0 0.0
    %3663 = vmatprep.subr.mxu0 0.0
    %3664 = vmatpush1.msra.mxu0 0.0
    %3665 = vmatprep.subr.mxu0 0.0
    %3666 = vmatpush1.msra.mxu0 0.0
    %3667 = vmatprep.subr.mxu0 0.0
    %3668 = vmatpush1.msra.mxu0 0.0
    %3669 = vmatprep.subr.mxu0 0.0
    %3670 = vmatpush1.msra.mxu0 0.0
    %3671 = vmatprep.subr.mxu0 0.0
    %3672 = vmatpush1.msra.mxu0 0.0
    %3673 = vmatprep.subr.mxu0 0.0
    %3674 = vmatpush1.msra.mxu0 0.0
    %3675 = vmatprep.subr.mxu0 0.0
    %3676 = vmatpush1.msra.mxu0 0.0
    %3677 = vmatprep.subr.mxu0 0.0
    %3678 = vmatpush1.msra.mxu0 %v3646
    %3679 = vmatprep.subr.mxu0 0.0
    %3680 = vmatpush1.msra.mxu0 %v3644
    %3681 = vmatprep.subr.mxu0 0.0
    %3682 = vmatpush1.msra.mxu0 %v3642
    %3683 = vmatprep.subr.mxu0 0.0
    %3684 = vmatpush1.msra.mxu0 %v3640
    %3685 = vmatprep.subr.mxu0 0.0
    %3686 = vmatpush1.msra.mxu0 %v3638
    %3687 = vmatprep.subr.mxu0 0.0
    %3688 = vmatpush1.msra.mxu0 %v3636
    %3689 = vmatprep.subr.mxu0 0.0
    %3690 = vmatpush1.msra.mxu0 %v3634
    %3691 = vmatprep.subr.mxu0 0.0
    %3692 = vmatpush1.msra.mxu0 %v3632
    %3693 = vmatprep.subr.mxu0 0.0
    %3694 = vmatpush2.msra.mxu0 0.0
    %3695 = vmatprep.subr.mxu0 0.0
    %3696 = vmatpush2.msra.mxu0 0.0
    %3697 = vmatprep.subr.mxu0 0.0
    %3698 = vmatpush2.msra.mxu0 0.0
    %3699 = vmatprep.subr.mxu0 0.0
    %3700 = vmatpush2.msra.mxu0 0.0
    %3701 = vmatprep.subr.mxu0 0.0
    %3702 = vmatpush2.msra.mxu0 0.0
    %3703 = vmatprep.subr.mxu0 0.0
    %3704 = vmatpush2.msra.mxu0 0.0
    %3705 = vmatprep.subr.mxu0 0.0
    %3706 = vmatpush2.msra.mxu0 0.0
    %3707 = vmatprep.subr.mxu0 0.0
    %3708 = vmatpush2.msra.mxu0 0.0
    %3709 = vmatprep.subr.mxu0 0.0
    %3710 = vmatpush2.msra.mxu0 0.0
    %3711 = vmatprep.subr.mxu0 0.0
    %3712 = vmatpush2.msra.mxu0 0.0
    %3713 = vmatprep.subr.mxu0 0.0
    %3714 = vmatpush2.msra.mxu0 0.0
    %3715 = vmatprep.subr.mxu0 0.0
    %3716 = vmatpush2.msra.mxu0 0.0
    %3717 = vmatprep.subr.mxu0 0.0
    %3718 = vmatpush2.msra.mxu0 0.0
    %3719 = vmatprep.subr.mxu0 0.0
    %3720 = vmatpush2.msra.mxu0 0.0
    %3721 = vmatprep.subr.mxu0 0.0
    %3722 = vmatpush2.msra.mxu0 0.0
    %3723 = vmatprep.subr.mxu0 0.0
    %3724 = vmatpush2.msra.mxu0 0.0
    %3725 = vmatprep.mubr.f32.mxu0 0.0
    %3726 = vmatmul.mubr.f32.gmra.mxu0 %v3656
    %v3727 = vpop.f32.mrf.mxu0
    %v3728 = vadd.f32 %v3622, %v3727
    %v3729 = vpop.f32.mrf.mxu0
    %3730 = vmatprep.mubr.f32.mxu0 0.0
    %3731 = vmatmul.mubr.f32.gmra.mxu0 %v3659
    %v3732 = vpop.f32.mrf.mxu0
    %v3733 = vadd.f32 %v3622, %v3732
    %v3734 = vpop.f32.mrf.mxu0
    %3735 = vdwg.mxu0
    %v3736 = vadd.f32 %v3530, %v3728
    %v3737 = vadd.f32 %v3531, %v3733
    %v3738 = vsel %vm88, %v3736, 0.0
    %3739 = vadd.xlane.f32.xlu0 %v3738
    %v3740 = vpop.xlane.xlu0 %3739
    %v3741 = vsel %vm88, %v3737, 0.0
    %3742 = vadd.xlane.f32.xlu0 %v3741
    %v3743 = vpop.xlane.xlu0 %3742
    %v3744 = vmul.f32 %v3740, %v1630
    %v3745 = vmul.f32 %v3743, %v1630
    %v3746 = vsub.f32 %v3736, %v3744
    %v3747 = vsub.f32 %v3737, %v3745
    %v3748 = vmul.f32 %v3746, %v3746
    %v3749 = vmul.f32 %v3747, %v3747
    %v3750 = vsel %vm88, %v3748, 0.0
    %3751 = vadd.xlane.f32.xlu0 %v3750
    %v3752 = vpop.xlane.xlu0 %3751
    %v3753 = vsel %vm88, %v3749, 0.0
    %3754 = vadd.xlane.f32.xlu0 %v3753
    %v3755 = vpop.xlane.xlu0 %3754
    %v3756 = vmul.f32 %v3752, %v1630
    %v3757 = vmul.f32 %v3755, %v1630
    %v3758 = vadd.f32 %v3756, 1e-05
    %v3759 = vadd.f32 %v3757, 1e-05
    %v3760 = vrsqrt.pop %v3758
    %v3761 = vrsqrt.pop %v3759
    %v3762 = vmul.f32 %v3746, %v3760
    %v3763 = vmul.f32 %v3747, %v3761
    %v3764 = vlaneseq
    %v3765 = vshrl.u32 %v3764, 7
    %v3766 = vsub.s32 0, %v3765
    %v3767 = vrot.slane %v1956, %v3766
    %v3768 = vmul.f32 %v3762, %v3767
    %v3769 = vmul.f32 %v3763, %v3767
    %v3770 = vlaneseq
    %v3771 = vshrl.u32 %v3770, 7
    %v3772 = vsub.s32 0, %v3771
    %v3773 = vrot.slane %v1957, %v3772
    %v3774 = vadd.f32 %v3768, %v3773
    %v3775 = vadd.f32 %v3769, %v3773
    %v3776 = vadd.f32 %v3774, %v3775
    %v3777 = vmul.f32 %v3776, 0.5
    %v3778 = vld [vmem:[#allocation2 + $0x40] sm:$0xf]
    %v3779 = vld [vmem:[#allocation2 + $0x44] sm:$0xf]
    %v3780 = vld [vmem:[#allocation2 + $0x48] sm:$0xf]
    %v3781 = vld [vmem:[#allocation2 + $0x4c] sm:$0xf]
    %v3782 = vunpack.c.l.bf16 %v3778
    %v3783 = vunpack.c.l.bf16 %v3779
    %v3784 = vunpack.c.l.bf16 %v3780
    %v3785 = vunpack.c.l.bf16 %v3781
    %v3786 = vld [vmem:[%s2 + $0x18] sm:$0x1]
    %v3787 = vlaneseq
    %v3788 = vshrl.u32 %v3787, 7
    %v3789 = vsub.s32 0, %v3788
    %v3790 = vrot.slane %v3786, %v3789
    %v3792 = vsel %vm88, %v3777, 0
    %3794 = vmatprep.subr.mxu0 0.0
    %3795 = vmatpush1.msra.mxu0 0.0
    %3796 = vmatprep.subr.mxu0 0.0
    %3797 = vmatpush1.msra.mxu0 0.0
    %3798 = vmatprep.subr.mxu0 0.0
    %3799 = vmatpush1.msra.mxu0 0.0
    %3800 = vmatprep.subr.mxu0 0.0
    %3801 = vmatpush1.msra.mxu0 0.0
    %3802 = vmatprep.subr.mxu0 0.0
    %3803 = vmatpush1.msra.mxu0 0.0
    %3804 = vmatprep.subr.mxu0 0.0
    %3805 = vmatpush1.msra.mxu0 0.0
    %3806 = vmatprep.subr.mxu0 0.0
    %3807 = vmatpush1.msra.mxu0 0.0
    %3808 = vmatprep.subr.mxu0 0.0
    %3809 = vmatpush1.msra.mxu0 0.0
    %3810 = vmatprep.subr.mxu0 0.0
    %3811 = vmatpush1.msra.mxu0 0.0
    %3812 = vmatprep.subr.mxu0 0.0
    %3813 = vmatpush1.msra.mxu0 0.0
    %3814 = vmatprep.subr.mxu0 0.0
    %3815 = vmatpush1.msra.mxu0 0.0
    %3816 = vmatprep.subr.mxu0 0.0
    %3817 = vmatpush1.msra.mxu0 0.0
    %3818 = vmatprep.subr.mxu0 0.0
    %3819 = vmatpush1.msra.mxu0 %v3785
    %3820 = vmatprep.subr.mxu0 0.0
    %3821 = vmatpush1.msra.mxu0 %v3784
    %3822 = vmatprep.subr.mxu0 0.0
    %3823 = vmatpush1.msra.mxu0 %v3783
    %3824 = vmatprep.subr.mxu0 0.0
    %3825 = vmatpush1.msra.mxu0 %v3782
    %3826 = vmatprep.subr.mxu0 0.0
    %3827 = vmatpush2.msra.mxu0 0.0
    %3828 = vmatprep.subr.mxu0 0.0
    %3829 = vmatpush2.msra.mxu0 0.0
    %3830 = vmatprep.subr.mxu0 0.0
    %3831 = vmatpush2.msra.mxu0 0.0
    %3832 = vmatprep.subr.mxu0 0.0
    %3833 = vmatpush2.msra.mxu0 0.0
    %3834 = vmatprep.subr.mxu0 0.0
    %3835 = vmatpush2.msra.mxu0 0.0
    %3836 = vmatprep.subr.mxu0 0.0
    %3837 = vmatpush2.msra.mxu0 0.0
    %3838 = vmatprep.subr.mxu0 0.0
    %3839 = vmatpush2.msra.mxu0 0.0
    %3840 = vmatprep.subr.mxu0 0.0
    %3841 = vmatpush2.msra.mxu0 0.0
    %3842 = vmatprep.subr.mxu0 0.0
    %3843 = vmatpush2.msra.mxu0 0.0
    %3844 = vmatprep.subr.mxu0 0.0
    %3845 = vmatpush2.msra.mxu0 0.0
    %3846 = vmatprep.subr.mxu0 0.0
    %3847 = vmatpush2.msra.mxu0 0.0
    %3848 = vmatprep.subr.mxu0 0.0
    %3849 = vmatpush2.msra.mxu0 0.0
    %3850 = vmatprep.subr.mxu0 0.0
    %3851 = vmatpush2.msra.mxu0 0.0
    %3852 = vmatprep.subr.mxu0 0.0
    %3853 = vmatpush2.msra.mxu0 0.0
    %3854 = vmatprep.subr.mxu0 0.0
    %3855 = vmatpush2.msra.mxu0 0.0
    %3856 = vmatprep.subr.mxu0 0.0
    %3857 = vmatpush2.msra.mxu0 0.0
    %3858 = vmatprep.mubr.f32.mxu0 0.0
    %3859 = vmatmul.mubr.f32.gmra.mxu0 %v3792
    %v3860 = vpop.f32.mrf.mxu0
    %v3861 = vadd.f32 %v3790, %v3860
    %v3862 = vpop.f32.mrf.mxu0
    %3863 = vdwg.mxu0
    %3864 = vst [vmem:[#allocation5] sm:$0xff] %v3861
    // Predicated region
    $region18: #{transformer_classifier.1} parent=1 // pred_check
      _
    $region19: #{transformer_classifier.1} parent=1 // pred_check_branch
      %3866 = sbr.rel (0) target = $region21
    $region20: #{transformer_classifier.1} parent=1 // pred_region
      %s3868 = ssub.s32 128, 128
      %3869 = vsyncadd [#allocation4], %s3868
      %s3871 = sshll.u32 [#allocation5], 4
      %s3872 = int_to_ptr.vmem [resolvable:$true] %s3871
      %3874 = dma.vmem_to_hbm [thread:$0]  %s3872, 128, %s3, [#allocation4]
    $region21: #{transformer_classifier.1} parent=1 // pred_fallthru
      _
    // Predicated region
    $region22: #{transformer_classifier.1} parent=1 // pred_check
      _
    $region23: #{transformer_classifier.1} parent=1 // pred_check_branch
      %3876 = sbr.rel (0) target = $region25
    $region24: #{transformer_classifier.1} parent=1 // pred_region
      %3877 = dma.done [#allocation4], 128
    $region25: #{transformer_classifier.1} parent=1 // pred_fallthru
      _
    %3878 = vsyncpa [#allocation3], 1
    %3879 = vsyncpa [#allocation4], 1

</llo_original>
